<compile_context>
chip_gen: v7x
topology: tpu7x:2x2x1
jax: 0.10.0
libtpu: 0.0.40
codegen_flags: <defaults>
</compile_context>

<pallas_src>
import jax
import jax.numpy as jnp
from jax.experimental import pallas as pl
from jax.experimental.pallas import tpu as pltpu

# ----- scaled-down GPT hyper-parameters (same structure as the PyTorch spec,
# ----- sized small but lane-dense: C and padded vocab are multiples of 128) --
N_EMBD = 128
N_HEAD = 4
HEAD_SIZE = N_EMBD // N_HEAD      # 32
N_LAYER = 2
BLOCK_SIZE = 16                   # max context length T
VOCAB_SIZE = 65
VOCAB_PAD = 128                   # lm_head output padded to a full 128-lane store
LN_EPS = 1e-5


def _layernorm(x, gamma, beta):
    """PyTorch nn.LayerNorm semantics (biased variance, eps inside sqrt), f32."""
    mu = jnp.mean(x, axis=-1, keepdims=True)
    var = jnp.mean((x - mu) ** 2, axis=-1, keepdims=True)
    return (x - mu) * jax.lax.rsqrt(var + LN_EPS) * gamma + beta


# ---------------------------------------------------------------------------
# Single fused kernel: all transformer blocks + final LayerNorm + lm_head.
# Weights arrive stacked along a leading layer axis and stay in VMEM.
# ---------------------------------------------------------------------------
def gpt_kernel(x_ref,
               ln1g_ref, ln1b_ref, wqkv_ref, wo_ref, bo_ref,
               ln2g_ref, ln2b_ref, w1_ref, b1_ref, w2_ref, b2_ref,
               lnfg_ref, lnfb_ref, wh_ref, bh_ref,
               o_ref):
    B, T, C = x_ref.shape
    BT = B * T
    x = x_ref[...].reshape(BT, C)                     # (B*T, C) f32 activations

    # Causal additive mask: built once, reused by every layer and head.
    row = jax.lax.broadcasted_iota(jnp.int32, (1, T, T), 1)
    col = jax.lax.broadcasted_iota(jnp.int32, (1, T, T), 2)
    neg_mask = jnp.where(col <= row, 0.0, -jnp.inf).astype(jnp.float32)

    scale = HEAD_SIZE ** -0.5

    for l in range(N_LAYER):                          # static unroll (few layers)
        # ---- multi-head causal self-attention on ln1(x) ----
        xn = _layernorm(x, ln1g_ref[l], ln1b_ref[l]).astype(jnp.bfloat16)
        # fused QKV: one lane-dense (BT, C) x (C, 3C) matmul, f32 accumulate
        qkv = jnp.dot(xn, wqkv_ref[l],
                      preferred_element_type=jnp.float32).astype(jnp.bfloat16)
        wo_l = wo_ref[l]                              # (C, C) bf16
        sa = jnp.zeros((BT, C), jnp.float32)
        for h in range(N_HEAD):                       # static head loop
            lo = h * HEAD_SIZE
            qh = qkv[:, lo:lo + HEAD_SIZE].reshape(B, T, HEAD_SIZE)
            kh = qkv[:, C + lo:C + lo + HEAD_SIZE].reshape(B, T, HEAD_SIZE)
            vh = qkv[:, 2 * C + lo:2 * C + lo + HEAD_SIZE].reshape(B, T, HEAD_SIZE)
            # scores: contraction over head dim, no explicit transpose
            wei = jnp.einsum('bqd,bkd->bqk', qh, kh,
                             preferred_element_type=jnp.float32) * scale
            wei = jax.nn.softmax(wei + neg_mask, axis=-1)      # f32 softmax
            oh = jnp.einsum('bqk,bkd->bqd', wei.astype(jnp.bfloat16), vh,
                            preferred_element_type=jnp.float32)
            # fold the output projection into the head loop (no concatenate)
            sa = sa + jnp.dot(oh.reshape(BT, HEAD_SIZE).astype(jnp.bfloat16),
                              wo_l[lo:lo + HEAD_SIZE, :],
                              preferred_element_type=jnp.float32)
        x = x + sa + bo_ref[l]                        # residual 1 (dropout = id)

        # ---- feed-forward on ln2(x) ----
        xn2 = _layernorm(x, ln2g_ref[l], ln2b_ref[l]).astype(jnp.bfloat16)
        h1 = jnp.dot(xn2, w1_ref[l],
                     preferred_element_type=jnp.float32) + b1_ref[l]
        h1 = jnp.maximum(h1, 0.0).astype(jnp.bfloat16)          # ReLU
        ff = jnp.dot(h1, w2_ref[l],
                     preferred_element_type=jnp.float32) + b2_ref[l]
        x = x + ff                                    # residual 2 (dropout = id)

    # ---- final LayerNorm + lm_head (vocab padded to 128 lanes) ----
    xn = _layernorm(x, lnfg_ref[...], lnfb_ref[...]).astype(jnp.bfloat16)
    logits = jnp.dot(xn, wh_ref[...],
                     preferred_element_type=jnp.float32) + bh_ref[...]
    o_ref[...] = logits.reshape(B, T, VOCAB_PAD)      # lane-dense (128) store


# ---------------------------------------------------------------------------
# Wrapper: embeddings in plain JAX, single fused pallas_call, slice padded vocab.
# ---------------------------------------------------------------------------
@jax.jit
def gpt_forward(idx, params):
    """Forward pass of GPTLanguageModel (targets=None => logits only)."""
    B, T = idx.shape
    tok_emb = jnp.take(params["tok_emb"], idx, axis=0)          # (B, T, C)
    pos_emb = params["pos_emb"][:T]                             # (T, C)
    x = (tok_emb + pos_emb[None, :, :]).astype(jnp.float32)

    flat = [
        params["ln1_g"], params["ln1_b"], params["wqkv"], params["wo"], params["bo"],
        params["ln2_g"], params["ln2_b"], params["w1"], params["b1"],
        params["w2"], params["b2"],
        params["lnf_g"], params["lnf_b"], params["w_head"], params["b_head"],
    ]
    vmem = pl.BlockSpec(memory_space=pltpu.MemorySpace.VMEM)
    # TODO(synk): on v7x (2 TensorCores) a size>=2 "parallel" batch grid axis
    # could halve wall clock; kept grid-less here since the model is tiny.
    logits_padded = pl.pallas_call(
        gpt_kernel,
        out_shape=jax.ShapeDtypeStruct((B, T, VOCAB_PAD), jnp.float32),
        in_specs=[vmem] * (1 + len(flat)),
        out_specs=vmem,
    )(x, *flat)
    return logits_padded[..., :VOCAB_SIZE]


# ---------------------------------------------------------------------------
# Parameter init matching module._init_weights: Linear/Embedding ~ N(0, 0.02),
# zero biases, LayerNorm gamma=1 / beta=0.  Matmul weights stored in bf16.
# ---------------------------------------------------------------------------
def init_params(key):
    def normal(k, shape, dtype=jnp.float32):
        return (0.02 * jax.random.normal(k, shape, jnp.float32)).astype(dtype)

    C = N_EMBD
    keys = jax.random.split(key, 3 + 4 * N_LAYER)
    params = {
        "tok_emb": normal(keys[0], (VOCAB_SIZE, C)),
        "pos_emb": normal(keys[1], (BLOCK_SIZE, C)),
        "lnf_g": jnp.ones((1, C), jnp.float32),
        "lnf_b": jnp.zeros((1, C), jnp.float32),
        # lm_head weight zero-padded from VOCAB_SIZE to VOCAB_PAD output lanes
        "w_head": jnp.pad(normal(keys[2], (C, VOCAB_SIZE)),
                          ((0, 0), (0, VOCAB_PAD - VOCAB_SIZE))
                          ).astype(jnp.bfloat16),
        "b_head": jnp.zeros((1, VOCAB_PAD), jnp.float32),
    }

    ln1_g, ln1_b, wqkv, wo, bo = [], [], [], [], []
    ln2_g, ln2_b, w1, b1, w2, b2 = [], [], [], [], [], []
    for l in range(N_LAYER):
        k0, k1, k2, k3 = keys[3 + 4 * l: 3 + 4 * (l + 1)]
        ln1_g.append(jnp.ones((1, C), jnp.float32))
        ln1_b.append(jnp.zeros((1, C), jnp.float32))
        # fused (q | k | v) projection, heads concatenated inside each third
        wqkv.append(normal(k0, (C, 3 * C), jnp.bfloat16))
        wo.append(normal(k1, (C, C), jnp.bfloat16))
        bo.append(jnp.zeros((1, C), jnp.float32))
        ln2_g.append(jnp.ones((1, C), jnp.float32))
        ln2_b.append(jnp.zeros((1, C), jnp.float32))
        w1.append(normal(k2, (C, 4 * C), jnp.bfloat16))
        b1.append(jnp.zeros((1, 4 * C), jnp.float32))
        w2.append(normal(k3, (4 * C, C), jnp.bfloat16))
        b2.append(jnp.zeros((1, C), jnp.float32))

    params.update(
        ln1_g=jnp.stack(ln1_g), ln1_b=jnp.stack(ln1_b),
        wqkv=jnp.stack(wqkv), wo=jnp.stack(wo), bo=jnp.stack(bo),
        ln2_g=jnp.stack(ln2_g), ln2_b=jnp.stack(ln2_b),
        w1=jnp.stack(w1), b1=jnp.stack(b1),
        w2=jnp.stack(w2), b2=jnp.stack(b2),
    )
    return params


if __name__ == "__main__":
    key = jax.random.PRNGKey(0)
    pkey, dkey = jax.random.split(key)
    params = init_params(pkey)

    B, T = 2, BLOCK_SIZE
    idx = jax.random.randint(dkey, (B, T), 0, VOCAB_SIZE, dtype=jnp.int32)

    logits = gpt_forward(idx, params)
    jax.block_until_ready(logits)
    assert logits.shape == (B, T, VOCAB_SIZE)
    assert bool(jnp.all(jnp.isfinite(logits)))
    print("KERNEL_OK")
</pallas_src>

<mosaic_0001>
module attributes {stable_mosaic.version = 11 : i64} {
  func.func @gpt_kernel(%arg0: memref<2x16x128xf32, #tpu.memory_space<vmem>>, %arg1: memref<2x1x128xf32, #tpu.memory_space<vmem>>, %arg2: memref<2x1x128xf32, #tpu.memory_space<vmem>>, %arg3: memref<2x128x384xbf16, #tpu.memory_space<vmem>>, %arg4: memref<2x128x128xbf16, #tpu.memory_space<vmem>>, %arg5: memref<2x1x128xf32, #tpu.memory_space<vmem>>, %arg6: memref<2x1x128xf32, #tpu.memory_space<vmem>>, %arg7: memref<2x1x128xf32, #tpu.memory_space<vmem>>, %arg8: memref<2x128x512xbf16, #tpu.memory_space<vmem>>, %arg9: memref<2x1x512xf32, #tpu.memory_space<vmem>>, %arg10: memref<2x512x128xbf16, #tpu.memory_space<vmem>>, %arg11: memref<2x1x128xf32, #tpu.memory_space<vmem>>, %arg12: memref<1x128xf32, #tpu.memory_space<vmem>>, %arg13: memref<1x128xf32, #tpu.memory_space<vmem>>, %arg14: memref<128x128xbf16, #tpu.memory_space<vmem>>, %arg15: memref<1x128xf32, #tpu.memory_space<vmem>>, %arg16: memref<2x16x128xf32, #tpu.memory_space<vmem>>) attributes {dimension_semantics = [], scalar_prefetch = 0 : i64, scratch_operands = 0 : i64, tpu.core_type = #tpu.core_type<tc>} {
    %c0 = arith.constant 0 : index
    %c0_0 = arith.constant 0 : index
    %c0_1 = arith.constant 0 : index
    %0 = vector.load %arg0[%c0, %c0_0, %c0_1] : memref<2x16x128xf32, #tpu.memory_space<vmem>>, vector<2x16x128xf32>
    %1 = vector.shape_cast %0 : vector<2x16x128xf32> to vector<32x128xf32>
    %2 = tpu.iota {dimensions = array<i32: 1>} : vector<1x16x16xi32>
    %3 = tpu.iota {dimensions = array<i32: 2>} : vector<1x16x16xi32>
    %4 = arith.cmpi sle, %3, %2 : vector<1x16x16xi32>
    %cst = arith.constant 0.000000e+00 : f32
    %cst_2 = arith.constant 0xFF800000 : f32
    %5 = vector.broadcast %cst : f32 to vector<1x16x16xf32>
    %6 = vector.broadcast %cst_2 : f32 to vector<1x16x16xf32>
    %7 = arith.select %4, %5, %6 : vector<1x16x16xi1>, vector<1x16x16xf32>
    %c0_3 = arith.constant 0 : index
    %c0_4 = arith.constant 0 : index
    %c0_5 = arith.constant 0 : index
    %8 = vector.load %arg1[%c0_3, %c0_4, %c0_5] : memref<2x1x128xf32, #tpu.memory_space<vmem>>, vector<1x1x128xf32>
    %9 = vector.shape_cast %8 : vector<1x1x128xf32> to vector<1x128xf32>
    %c0_6 = arith.constant 0 : index
    %c0_7 = arith.constant 0 : index
    %c0_8 = arith.constant 0 : index
    %10 = vector.load %arg2[%c0_6, %c0_7, %c0_8] : memref<2x1x128xf32, #tpu.memory_space<vmem>>, vector<1x1x128xf32>
    %11 = vector.shape_cast %10 : vector<1x1x128xf32> to vector<1x128xf32>
    %cst_9 = arith.constant dense<0.000000e+00> : vector<32xf32>
    %12 = vector.multi_reduction <add>, %1, %cst_9 [1] : vector<32x128xf32> to vector<32xf32>
    %13 = vector.shape_cast %12 : vector<32xf32> to vector<32x1xf32>
    %cst_10 = arith.constant 1.280000e+02 : f32
    %14 = vector.broadcast %cst_10 : f32 to vector<32x1xf32>
    %15 = arith.divf %13, %14 : vector<32x1xf32>
    %16 = vector.broadcast %15 : vector<32x1xf32> to vector<32x128xf32>
    %17 = arith.subf %1, %16 : vector<32x128xf32>
    %18 = arith.mulf %17, %17 : vector<32x128xf32>
    %cst_11 = arith.constant dense<0.000000e+00> : vector<32xf32>
    %19 = vector.multi_reduction <add>, %18, %cst_11 [1] : vector<32x128xf32> to vector<32xf32>
    %20 = vector.shape_cast %19 : vector<32xf32> to vector<32x1xf32>
    %cst_12 = arith.constant 1.280000e+02 : f32
    %21 = vector.broadcast %cst_12 : f32 to vector<32x1xf32>
    %22 = arith.divf %20, %21 : vector<32x1xf32>
    %23 = vector.broadcast %15 : vector<32x1xf32> to vector<32x128xf32>
    %24 = arith.subf %1, %23 : vector<32x128xf32>
    %cst_13 = arith.constant 9.99999974E-6 : f32
    %25 = vector.broadcast %cst_13 : f32 to vector<32x1xf32>
    %26 = arith.addf %22, %25 : vector<32x1xf32>
    %27 = math.rsqrt %26 : vector<32x1xf32>
    %28 = vector.broadcast %27 : vector<32x1xf32> to vector<32x128xf32>
    %29 = arith.mulf %24, %28 : vector<32x128xf32>
    %30 = vector.broadcast %9 : vector<1x128xf32> to vector<32x128xf32>
    %31 = arith.mulf %29, %30 : vector<32x128xf32>
    %32 = vector.broadcast %11 : vector<1x128xf32> to vector<32x128xf32>
    %33 = arith.addf %31, %32 : vector<32x128xf32>
    %34 = arith.truncf %33 : vector<32x128xf32> to vector<32x128xbf16>
    %c0_14 = arith.constant 0 : index
    %c0_15 = arith.constant 0 : index
    %c0_16 = arith.constant 0 : index
    %35 = vector.load %arg3[%c0_14, %c0_15, %c0_16] : memref<2x128x384xbf16, #tpu.memory_space<vmem>>, vector<1x128x384xbf16>
    %36 = vector.shape_cast %35 : vector<1x128x384xbf16> to vector<128x384xbf16>
    %cst_17 = arith.constant dense<0.000000e+00> : vector<32x384xf32>
    %37 = tpu.matmul %34, %36, %cst_17 {dimension_numbers = #tpu.dot_dimension_numbers<[1], [0], [0], [1], [0, 0, 1, 1], [], []>} : vector<32x128xbf16>, vector<128x384xbf16>, vector<32x384xf32> -> vector<32x384xf32>
    %38 = arith.truncf %37 : vector<32x384xf32> to vector<32x384xbf16>
    %c0_18 = arith.constant 0 : index
    %c0_19 = arith.constant 0 : index
    %c0_20 = arith.constant 0 : index
    %39 = vector.load %arg4[%c0_18, %c0_19, %c0_20] : memref<2x128x128xbf16, #tpu.memory_space<vmem>>, vector<1x128x128xbf16>
    %40 = vector.shape_cast %39 : vector<1x128x128xbf16> to vector<128x128xbf16>
    %cst_21 = arith.constant 0.000000e+00 : f32
    %41 = vector.broadcast %cst_21 : f32 to vector<32x128xf32>
    %42 = vector.extract_strided_slice %38 {offsets = [0, 0], sizes = [32, 32], strides = [1, 1]} : vector<32x384xbf16> to vector<32x32xbf16>
    %43 = vector.shape_cast %42 : vector<32x32xbf16> to vector<2x16x32xbf16>
    %44 = vector.extract_strided_slice %38 {offsets = [0, 128], sizes = [32, 32], strides = [1, 1]} : vector<32x384xbf16> to vector<32x32xbf16>
    %45 = vector.shape_cast %44 : vector<32x32xbf16> to vector<2x16x32xbf16>
    %46 = vector.extract_strided_slice %38 {offsets = [0, 256], sizes = [32, 32], strides = [1, 1]} : vector<32x384xbf16> to vector<32x32xbf16>
    %47 = vector.shape_cast %46 : vector<32x32xbf16> to vector<2x16x32xbf16>
    "tpu.trace_start"() <{level = 10 : i32, message = "bqd,bkd->bqk"}> : () -> ()
    %cst_22 = arith.constant dense<0.000000e+00> : vector<2x16x16xf32>
    %48 = tpu.matmul %43, %45, %cst_22 {dimension_numbers = #tpu.dot_dimension_numbers<[2], [2], [1], [1], [0, 0, 0, 1, 1, 1], [0], [0]>} : vector<2x16x32xbf16>, vector<2x16x32xbf16>, vector<2x16x16xf32> -> vector<2x16x16xf32>
    "tpu.trace_stop"() : () -> ()
    %cst_23 = arith.constant 0.176776692 : f32
    %49 = vector.broadcast %cst_23 : f32 to vector<2x16x16xf32>
    %50 = arith.mulf %48, %49 : vector<2x16x16xf32>
    %51 = vector.broadcast %7 : vector<1x16x16xf32> to vector<2x16x16xf32>
    %52 = arith.addf %50, %51 : vector<2x16x16xf32>
    %cst_24 = arith.constant dense<0xFF800000> : vector<2x16xf32>
    %53 = vector.multi_reduction <maximumf>, %52, %cst_24 [2] : vector<2x16x16xf32> to vector<2x16xf32>
    %cst_25 = arith.constant 0xFF800000 : f32
    %54 = vector.broadcast %cst_25 : f32 to vector<2x16xf32>
    %55 = arith.maximumf %54, %53 : vector<2x16xf32>
    %56 = vector.shape_cast %55 : vector<2x16xf32> to vector<2x16x1xf32>
    %57 = vector.broadcast %56 : vector<2x16x1xf32> to vector<2x16x16xf32>
    %58 = arith.subf %52, %57 : vector<2x16x16xf32>
    %59 = math.exp %58 : vector<2x16x16xf32>
    %cst_26 = arith.constant dense<0.000000e+00> : vector<2x16xf32>
    %60 = vector.multi_reduction <add>, %59, %cst_26 [2] : vector<2x16x16xf32> to vector<2x16xf32>
    %61 = vector.shape_cast %60 : vector<2x16xf32> to vector<2x16x1xf32>
    %62 = vector.broadcast %61 : vector<2x16x1xf32> to vector<2x16x16xf32>
    %63 = arith.divf %59, %62 : vector<2x16x16xf32>
    %64 = arith.truncf %63 : vector<2x16x16xf32> to vector<2x16x16xbf16>
    "tpu.trace_start"() <{level = 10 : i32, message = "bqk,bkd->bqd"}> : () -> ()
    %cst_27 = arith.constant dense<0.000000e+00> : vector<2x16x32xf32>
    %65 = tpu.matmul %64, %47, %cst_27 {dimension_numbers = #tpu.dot_dimension_numbers<[2], [1], [1], [2], [0, 0, 0, 1, 1, 2], [0], [0]>} : vector<2x16x16xbf16>, vector<2x16x32xbf16>, vector<2x16x32xf32> -> vector<2x16x32xf32>
    "tpu.trace_stop"() : () -> ()
    %66 = vector.shape_cast %65 : vector<2x16x32xf32> to vector<32x32xf32>
    %67 = arith.truncf %66 : vector<32x32xf32> to vector<32x32xbf16>
    %68 = vector.extract_strided_slice %40 {offsets = [0, 0], sizes = [32, 128], strides = [1, 1]} : vector<128x128xbf16> to vector<32x128xbf16>
    %cst_28 = arith.constant dense<0.000000e+00> : vector<32x128xf32>
    %69 = tpu.matmul %67, %68, %cst_28 {dimension_numbers = #tpu.dot_dimension_numbers<[1], [0], [0], [1], [0, 0, 1, 1], [], []>} : vector<32x32xbf16>, vector<32x128xbf16>, vector<32x128xf32> -> vector<32x128xf32>
    %70 = arith.addf %41, %69 : vector<32x128xf32>
    %71 = vector.extract_strided_slice %38 {offsets = [0, 32], sizes = [32, 32], strides = [1, 1]} : vector<32x384xbf16> to vector<32x32xbf16>
    %72 = vector.shape_cast %71 : vector<32x32xbf16> to vector<2x16x32xbf16>
    %73 = vector.extract_strided_slice %38 {offsets = [0, 160], sizes = [32, 32], strides = [1, 1]} : vector<32x384xbf16> to vector<32x32xbf16>
    %74 = vector.shape_cast %73 : vector<32x32xbf16> to vector<2x16x32xbf16>
    %75 = vector.extract_strided_slice %38 {offsets = [0, 288], sizes = [32, 32], strides = [1, 1]} : vector<32x384xbf16> to vector<32x32xbf16>
    %76 = vector.shape_cast %75 : vector<32x32xbf16> to vector<2x16x32xbf16>
    "tpu.trace_start"() <{level = 10 : i32, message = "bqd,bkd->bqk"}> : () -> ()
    %cst_29 = arith.constant dense<0.000000e+00> : vector<2x16x16xf32>
    %77 = tpu.matmul %72, %74, %cst_29 {dimension_numbers = #tpu.dot_dimension_numbers<[2], [2], [1], [1], [0, 0, 0, 1, 1, 1], [0], [0]>} : vector<2x16x32xbf16>, vector<2x16x32xbf16>, vector<2x16x16xf32> -> vector<2x16x16xf32>
    "tpu.trace_stop"() : () -> ()
    %cst_30 = arith.constant 0.176776692 : f32
    %78 = vector.broadcast %cst_30 : f32 to vector<2x16x16xf32>
    %79 = arith.mulf %77, %78 : vector<2x16x16xf32>
    %80 = vector.broadcast %7 : vector<1x16x16xf32> to vector<2x16x16xf32>
    %81 = arith.addf %79, %80 : vector<2x16x16xf32>
    %cst_31 = arith.constant dense<0xFF800000> : vector<2x16xf32>
    %82 = vector.multi_reduction <maximumf>, %81, %cst_31 [2] : vector<2x16x16xf32> to vector<2x16xf32>
    %cst_32 = arith.constant 0xFF800000 : f32
    %83 = vector.broadcast %cst_32 : f32 to vector<2x16xf32>
    %84 = arith.maximumf %83, %82 : vector<2x16xf32>
    %85 = vector.shape_cast %84 : vector<2x16xf32> to vector<2x16x1xf32>
    %86 = vector.broadcast %85 : vector<2x16x1xf32> to vector<2x16x16xf32>
    %87 = arith.subf %81, %86 : vector<2x16x16xf32>
    %88 = math.exp %87 : vector<2x16x16xf32>
    %cst_33 = arith.constant dense<0.000000e+00> : vector<2x16xf32>
    %89 = vector.multi_reduction <add>, %88, %cst_33 [2] : vector<2x16x16xf32> to vector<2x16xf32>
    %90 = vector.shape_cast %89 : vector<2x16xf32> to vector<2x16x1xf32>
    %91 = vector.broadcast %90 : vector<2x16x1xf32> to vector<2x16x16xf32>
    %92 = arith.divf %88, %91 : vector<2x16x16xf32>
    %93 = arith.truncf %92 : vector<2x16x16xf32> to vector<2x16x16xbf16>
    "tpu.trace_start"() <{level = 10 : i32, message = "bqk,bkd->bqd"}> : () -> ()
    %cst_34 = arith.constant dense<0.000000e+00> : vector<2x16x32xf32>
    %94 = tpu.matmul %93, %76, %cst_34 {dimension_numbers = #tpu.dot_dimension_numbers<[2], [1], [1], [2], [0, 0, 0, 1, 1, 2], [0], [0]>} : vector<2x16x16xbf16>, vector<2x16x32xbf16>, vector<2x16x32xf32> -> vector<2x16x32xf32>
    "tpu.trace_stop"() : () -> ()
    %95 = vector.shape_cast %94 : vector<2x16x32xf32> to vector<32x32xf32>
    %96 = arith.truncf %95 : vector<32x32xf32> to vector<32x32xbf16>
    %97 = vector.extract_strided_slice %40 {offsets = [32, 0], sizes = [32, 128], strides = [1, 1]} : vector<128x128xbf16> to vector<32x128xbf16>
    %cst_35 = arith.constant dense<0.000000e+00> : vector<32x128xf32>
    %98 = tpu.matmul %96, %97, %cst_35 {dimension_numbers = #tpu.dot_dimension_numbers<[1], [0], [0], [1], [0, 0, 1, 1], [], []>} : vector<32x32xbf16>, vector<32x128xbf16>, vector<32x128xf32> -> vector<32x128xf32>
    %99 = arith.addf %70, %98 : vector<32x128xf32>
    %100 = vector.extract_strided_slice %38 {offsets = [0, 64], sizes = [32, 32], strides = [1, 1]} : vector<32x384xbf16> to vector<32x32xbf16>
    %101 = vector.shape_cast %100 : vector<32x32xbf16> to vector<2x16x32xbf16>
    %102 = vector.extract_strided_slice %38 {offsets = [0, 192], sizes = [32, 32], strides = [1, 1]} : vector<32x384xbf16> to vector<32x32xbf16>
    %103 = vector.shape_cast %102 : vector<32x32xbf16> to vector<2x16x32xbf16>
    %104 = vector.extract_strided_slice %38 {offsets = [0, 320], sizes = [32, 32], strides = [1, 1]} : vector<32x384xbf16> to vector<32x32xbf16>
    %105 = vector.shape_cast %104 : vector<32x32xbf16> to vector<2x16x32xbf16>
    "tpu.trace_start"() <{level = 10 : i32, message = "bqd,bkd->bqk"}> : () -> ()
    %cst_36 = arith.constant dense<0.000000e+00> : vector<2x16x16xf32>
    %106 = tpu.matmul %101, %103, %cst_36 {dimension_numbers = #tpu.dot_dimension_numbers<[2], [2], [1], [1], [0, 0, 0, 1, 1, 1], [0], [0]>} : vector<2x16x32xbf16>, vector<2x16x32xbf16>, vector<2x16x16xf32> -> vector<2x16x16xf32>
    "tpu.trace_stop"() : () -> ()
    %cst_37 = arith.constant 0.176776692 : f32
    %107 = vector.broadcast %cst_37 : f32 to vector<2x16x16xf32>
    %108 = arith.mulf %106, %107 : vector<2x16x16xf32>
    %109 = vector.broadcast %7 : vector<1x16x16xf32> to vector<2x16x16xf32>
    %110 = arith.addf %108, %109 : vector<2x16x16xf32>
    %cst_38 = arith.constant dense<0xFF800000> : vector<2x16xf32>
    %111 = vector.multi_reduction <maximumf>, %110, %cst_38 [2] : vector<2x16x16xf32> to vector<2x16xf32>
    %cst_39 = arith.constant 0xFF800000 : f32
    %112 = vector.broadcast %cst_39 : f32 to vector<2x16xf32>
    %113 = arith.maximumf %112, %111 : vector<2x16xf32>
    %114 = vector.shape_cast %113 : vector<2x16xf32> to vector<2x16x1xf32>
    %115 = vector.broadcast %114 : vector<2x16x1xf32> to vector<2x16x16xf32>
    %116 = arith.subf %110, %115 : vector<2x16x16xf32>
    %117 = math.exp %116 : vector<2x16x16xf32>
    %cst_40 = arith.constant dense<0.000000e+00> : vector<2x16xf32>
    %118 = vector.multi_reduction <add>, %117, %cst_40 [2] : vector<2x16x16xf32> to vector<2x16xf32>
    %119 = vector.shape_cast %118 : vector<2x16xf32> to vector<2x16x1xf32>
    %120 = vector.broadcast %119 : vector<2x16x1xf32> to vector<2x16x16xf32>
    %121 = arith.divf %117, %120 : vector<2x16x16xf32>
    %122 = arith.truncf %121 : vector<2x16x16xf32> to vector<2x16x16xbf16>
    "tpu.trace_start"() <{level = 10 : i32, message = "bqk,bkd->bqd"}> : () -> ()
    %cst_41 = arith.constant dense<0.000000e+00> : vector<2x16x32xf32>
    %123 = tpu.matmul %122, %105, %cst_41 {dimension_numbers = #tpu.dot_dimension_numbers<[2], [1], [1], [2], [0, 0, 0, 1, 1, 2], [0], [0]>} : vector<2x16x16xbf16>, vector<2x16x32xbf16>, vector<2x16x32xf32> -> vector<2x16x32xf32>
    "tpu.trace_stop"() : () -> ()
    %124 = vector.shape_cast %123 : vector<2x16x32xf32> to vector<32x32xf32>
    %125 = arith.truncf %124 : vector<32x32xf32> to vector<32x32xbf16>
    %126 = vector.extract_strided_slice %40 {offsets = [64, 0], sizes = [32, 128], strides = [1, 1]} : vector<128x128xbf16> to vector<32x128xbf16>
    %cst_42 = arith.constant dense<0.000000e+00> : vector<32x128xf32>
    %127 = tpu.matmul %125, %126, %cst_42 {dimension_numbers = #tpu.dot_dimension_numbers<[1], [0], [0], [1], [0, 0, 1, 1], [], []>} : vector<32x32xbf16>, vector<32x128xbf16>, vector<32x128xf32> -> vector<32x128xf32>
    %128 = arith.addf %99, %127 : vector<32x128xf32>
    %129 = vector.extract_strided_slice %38 {offsets = [0, 96], sizes = [32, 32], strides = [1, 1]} : vector<32x384xbf16> to vector<32x32xbf16>
    %130 = vector.shape_cast %129 : vector<32x32xbf16> to vector<2x16x32xbf16>
    %131 = vector.extract_strided_slice %38 {offsets = [0, 224], sizes = [32, 32], strides = [1, 1]} : vector<32x384xbf16> to vector<32x32xbf16>
    %132 = vector.shape_cast %131 : vector<32x32xbf16> to vector<2x16x32xbf16>
    %133 = vector.extract_strided_slice %38 {offsets = [0, 352], sizes = [32, 32], strides = [1, 1]} : vector<32x384xbf16> to vector<32x32xbf16>
    %134 = vector.shape_cast %133 : vector<32x32xbf16> to vector<2x16x32xbf16>
    "tpu.trace_start"() <{level = 10 : i32, message = "bqd,bkd->bqk"}> : () -> ()
    %cst_43 = arith.constant dense<0.000000e+00> : vector<2x16x16xf32>
    %135 = tpu.matmul %130, %132, %cst_43 {dimension_numbers = #tpu.dot_dimension_numbers<[2], [2], [1], [1], [0, 0, 0, 1, 1, 1], [0], [0]>} : vector<2x16x32xbf16>, vector<2x16x32xbf16>, vector<2x16x16xf32> -> vector<2x16x16xf32>
    "tpu.trace_stop"() : () -> ()
    %cst_44 = arith.constant 0.176776692 : f32
    %136 = vector.broadcast %cst_44 : f32 to vector<2x16x16xf32>
    %137 = arith.mulf %135, %136 : vector<2x16x16xf32>
    %138 = vector.broadcast %7 : vector<1x16x16xf32> to vector<2x16x16xf32>
    %139 = arith.addf %137, %138 : vector<2x16x16xf32>
    %cst_45 = arith.constant dense<0xFF800000> : vector<2x16xf32>
    %140 = vector.multi_reduction <maximumf>, %139, %cst_45 [2] : vector<2x16x16xf32> to vector<2x16xf32>
    %cst_46 = arith.constant 0xFF800000 : f32
    %141 = vector.broadcast %cst_46 : f32 to vector<2x16xf32>
    %142 = arith.maximumf %141, %140 : vector<2x16xf32>
    %143 = vector.shape_cast %142 : vector<2x16xf32> to vector<2x16x1xf32>
    %144 = vector.broadcast %143 : vector<2x16x1xf32> to vector<2x16x16xf32>
    %145 = arith.subf %139, %144 : vector<2x16x16xf32>
    %146 = math.exp %145 : vector<2x16x16xf32>
    %cst_47 = arith.constant dense<0.000000e+00> : vector<2x16xf32>
    %147 = vector.multi_reduction <add>, %146, %cst_47 [2] : vector<2x16x16xf32> to vector<2x16xf32>
    %148 = vector.shape_cast %147 : vector<2x16xf32> to vector<2x16x1xf32>
    %149 = vector.broadcast %148 : vector<2x16x1xf32> to vector<2x16x16xf32>
    %150 = arith.divf %146, %149 : vector<2x16x16xf32>
    %151 = arith.truncf %150 : vector<2x16x16xf32> to vector<2x16x16xbf16>
    "tpu.trace_start"() <{level = 10 : i32, message = "bqk,bkd->bqd"}> : () -> ()
    %cst_48 = arith.constant dense<0.000000e+00> : vector<2x16x32xf32>
    %152 = tpu.matmul %151, %134, %cst_48 {dimension_numbers = #tpu.dot_dimension_numbers<[2], [1], [1], [2], [0, 0, 0, 1, 1, 2], [0], [0]>} : vector<2x16x16xbf16>, vector<2x16x32xbf16>, vector<2x16x32xf32> -> vector<2x16x32xf32>
    "tpu.trace_stop"() : () -> ()
    %153 = vector.shape_cast %152 : vector<2x16x32xf32> to vector<32x32xf32>
    %154 = arith.truncf %153 : vector<32x32xf32> to vector<32x32xbf16>
    %155 = vector.extract_strided_slice %40 {offsets = [96, 0], sizes = [32, 128], strides = [1, 1]} : vector<128x128xbf16> to vector<32x128xbf16>
    %cst_49 = arith.constant dense<0.000000e+00> : vector<32x128xf32>
    %156 = tpu.matmul %154, %155, %cst_49 {dimension_numbers = #tpu.dot_dimension_numbers<[1], [0], [0], [1], [0, 0, 1, 1], [], []>} : vector<32x32xbf16>, vector<32x128xbf16>, vector<32x128xf32> -> vector<32x128xf32>
    %157 = arith.addf %128, %156 : vector<32x128xf32>
    %158 = arith.addf %1, %157 : vector<32x128xf32>
    %c0_50 = arith.constant 0 : index
    %c0_51 = arith.constant 0 : index
    %c0_52 = arith.constant 0 : index
    %159 = vector.load %arg5[%c0_50, %c0_51, %c0_52] : memref<2x1x128xf32, #tpu.memory_space<vmem>>, vector<1x1x128xf32>
    %160 = vector.shape_cast %159 : vector<1x1x128xf32> to vector<1x128xf32>
    %161 = vector.broadcast %160 : vector<1x128xf32> to vector<32x128xf32>
    %162 = arith.addf %158, %161 : vector<32x128xf32>
    %c0_53 = arith.constant 0 : index
    %c0_54 = arith.constant 0 : index
    %c0_55 = arith.constant 0 : index
    %163 = vector.load %arg6[%c0_53, %c0_54, %c0_55] : memref<2x1x128xf32, #tpu.memory_space<vmem>>, vector<1x1x128xf32>
    %164 = vector.shape_cast %163 : vector<1x1x128xf32> to vector<1x128xf32>
    %c0_56 = arith.constant 0 : index
    %c0_57 = arith.constant 0 : index
    %c0_58 = arith.constant 0 : index
    %165 = vector.load %arg7[%c0_56, %c0_57, %c0_58] : memref<2x1x128xf32, #tpu.memory_space<vmem>>, vector<1x1x128xf32>
    %166 = vector.shape_cast %165 : vector<1x1x128xf32> to vector<1x128xf32>
    %cst_59 = arith.constant dense<0.000000e+00> : vector<32xf32>
    %167 = vector.multi_reduction <add>, %162, %cst_59 [1] : vector<32x128xf32> to vector<32xf32>
    %168 = vector.shape_cast %167 : vector<32xf32> to vector<32x1xf32>
    %cst_60 = arith.constant 1.280000e+02 : f32
    %169 = vector.broadcast %cst_60 : f32 to vector<32x1xf32>
    %170 = arith.divf %168, %169 : vector<32x1xf32>
    %171 = vector.broadcast %170 : vector<32x1xf32> to vector<32x128xf32>
    %172 = arith.subf %162, %171 : vector<32x128xf32>
    %173 = arith.mulf %172, %172 : vector<32x128xf32>
    %cst_61 = arith.constant dense<0.000000e+00> : vector<32xf32>
    %174 = vector.multi_reduction <add>, %173, %cst_61 [1] : vector<32x128xf32> to vector<32xf32>
    %175 = vector.shape_cast %174 : vector<32xf32> to vector<32x1xf32>
    %cst_62 = arith.constant 1.280000e+02 : f32
    %176 = vector.broadcast %cst_62 : f32 to vector<32x1xf32>
    %177 = arith.divf %175, %176 : vector<32x1xf32>
    %178 = vector.broadcast %170 : vector<32x1xf32> to vector<32x128xf32>
    %179 = arith.subf %162, %178 : vector<32x128xf32>
    %cst_63 = arith.constant 9.99999974E-6 : f32
    %180 = vector.broadcast %cst_63 : f32 to vector<32x1xf32>
    %181 = arith.addf %177, %180 : vector<32x1xf32>
    %182 = math.rsqrt %181 : vector<32x1xf32>
    %183 = vector.broadcast %182 : vector<32x1xf32> to vector<32x128xf32>
    %184 = arith.mulf %179, %183 : vector<32x128xf32>
    %185 = vector.broadcast %164 : vector<1x128xf32> to vector<32x128xf32>
    %186 = arith.mulf %184, %185 : vector<32x128xf32>
    %187 = vector.broadcast %166 : vector<1x128xf32> to vector<32x128xf32>
    %188 = arith.addf %186, %187 : vector<32x128xf32>
    %189 = arith.truncf %188 : vector<32x128xf32> to vector<32x128xbf16>
    %c0_64 = arith.constant 0 : index
    %c0_65 = arith.constant 0 : index
    %c0_66 = arith.constant 0 : index
    %190 = vector.load %arg8[%c0_64, %c0_65, %c0_66] : memref<2x128x512xbf16, #tpu.memory_space<vmem>>, vector<1x128x512xbf16>
    %191 = vector.shape_cast %190 : vector<1x128x512xbf16> to vector<128x512xbf16>
    %cst_67 = arith.constant dense<0.000000e+00> : vector<32x512xf32>
    %192 = tpu.matmul %189, %191, %cst_67 {dimension_numbers = #tpu.dot_dimension_numbers<[1], [0], [0], [1], [0, 0, 1, 1], [], []>} : vector<32x128xbf16>, vector<128x512xbf16>, vector<32x512xf32> -> vector<32x512xf32>
    %c0_68 = arith.constant 0 : index
    %c0_69 = arith.constant 0 : index
    %c0_70 = arith.constant 0 : index
    %193 = vector.load %arg9[%c0_68, %c0_69, %c0_70] : memref<2x1x512xf32, #tpu.memory_space<vmem>>, vector<1x1x512xf32>
    %194 = vector.shape_cast %193 : vector<1x1x512xf32> to vector<1x512xf32>
    %195 = vector.broadcast %194 : vector<1x512xf32> to vector<32x512xf32>
    %196 = arith.addf %192, %195 : vector<32x512xf32>
    %cst_71 = arith.constant 0.000000e+00 : f32
    %197 = vector.broadcast %cst_71 : f32 to vector<32x512xf32>
    %198 = arith.maximumf %196, %197 : vector<32x512xf32>
    %199 = arith.truncf %198 : vector<32x512xf32> to vector<32x512xbf16>
    %c0_72 = arith.constant 0 : index
    %c0_73 = arith.constant 0 : index
    %c0_74 = arith.constant 0 : index
    %200 = vector.load %arg10[%c0_72, %c0_73, %c0_74] : memref<2x512x128xbf16, #tpu.memory_space<vmem>>, vector<1x512x128xbf16>
    %201 = vector.shape_cast %200 : vector<1x512x128xbf16> to vector<512x128xbf16>
    %cst_75 = arith.constant dense<0.000000e+00> : vector<32x128xf32>
    %202 = tpu.matmul %199, %201, %cst_75 {dimension_numbers = #tpu.dot_dimension_numbers<[1], [0], [0], [1], [0, 0, 1, 1], [], []>} : vector<32x512xbf16>, vector<512x128xbf16>, vector<32x128xf32> -> vector<32x128xf32>
    %c0_76 = arith.constant 0 : index
    %c0_77 = arith.constant 0 : index
    %c0_78 = arith.constant 0 : index
    %203 = vector.load %arg11[%c0_76, %c0_77, %c0_78] : memref<2x1x128xf32, #tpu.memory_space<vmem>>, vector<1x1x128xf32>
    %204 = vector.shape_cast %203 : vector<1x1x128xf32> to vector<1x128xf32>
    %205 = vector.broadcast %204 : vector<1x128xf32> to vector<32x128xf32>
    %206 = arith.addf %202, %205 : vector<32x128xf32>
    %207 = arith.addf %162, %206 : vector<32x128xf32>
    %c1 = arith.constant 1 : index
    %c0_79 = arith.constant 0 : index
    %c0_80 = arith.constant 0 : index
    %208 = vector.load %arg1[%c1, %c0_79, %c0_80] : memref<2x1x128xf32, #tpu.memory_space<vmem>>, vector<1x1x128xf32>
    %209 = vector.shape_cast %208 : vector<1x1x128xf32> to vector<1x128xf32>
    %c1_81 = arith.constant 1 : index
    %c0_82 = arith.constant 0 : index
    %c0_83 = arith.constant 0 : index
    %210 = vector.load %arg2[%c1_81, %c0_82, %c0_83] : memref<2x1x128xf32, #tpu.memory_space<vmem>>, vector<1x1x128xf32>
    %211 = vector.shape_cast %210 : vector<1x1x128xf32> to vector<1x128xf32>
    %cst_84 = arith.constant dense<0.000000e+00> : vector<32xf32>
    %212 = vector.multi_reduction <add>, %207, %cst_84 [1] : vector<32x128xf32> to vector<32xf32>
    %213 = vector.shape_cast %212 : vector<32xf32> to vector<32x1xf32>
    %cst_85 = arith.constant 1.280000e+02 : f32
    %214 = vector.broadcast %cst_85 : f32 to vector<32x1xf32>
    %215 = arith.divf %213, %214 : vector<32x1xf32>
    %216 = vector.broadcast %215 : vector<32x1xf32> to vector<32x128xf32>
    %217 = arith.subf %207, %216 : vector<32x128xf32>
    %218 = arith.mulf %217, %217 : vector<32x128xf32>
    %cst_86 = arith.constant dense<0.000000e+00> : vector<32xf32>
    %219 = vector.multi_reduction <add>, %218, %cst_86 [1] : vector<32x128xf32> to vector<32xf32>
    %220 = vector.shape_cast %219 : vector<32xf32> to vector<32x1xf32>
    %cst_87 = arith.constant 1.280000e+02 : f32
    %221 = vector.broadcast %cst_87 : f32 to vector<32x1xf32>
    %222 = arith.divf %220, %221 : vector<32x1xf32>
    %223 = vector.broadcast %215 : vector<32x1xf32> to vector<32x128xf32>
    %224 = arith.subf %207, %223 : vector<32x128xf32>
    %cst_88 = arith.constant 9.99999974E-6 : f32
    %225 = vector.broadcast %cst_88 : f32 to vector<32x1xf32>
    %226 = arith.addf %222, %225 : vector<32x1xf32>
    %227 = math.rsqrt %226 : vector<32x1xf32>
    %228 = vector.broadcast %227 : vector<32x1xf32> to vector<32x128xf32>
    %229 = arith.mulf %224, %228 : vector<32x128xf32>
    %230 = vector.broadcast %209 : vector<1x128xf32> to vector<32x128xf32>
    %231 = arith.mulf %229, %230 : vector<32x128xf32>
    %232 = vector.broadcast %211 : vector<1x128xf32> to vector<32x128xf32>
    %233 = arith.addf %231, %232 : vector<32x128xf32>
    %234 = arith.truncf %233 : vector<32x128xf32> to vector<32x128xbf16>
    %c1_89 = arith.constant 1 : index
    %c0_90 = arith.constant 0 : index
    %c0_91 = arith.constant 0 : index
    %235 = vector.load %arg3[%c1_89, %c0_90, %c0_91] : memref<2x128x384xbf16, #tpu.memory_space<vmem>>, vector<1x128x384xbf16>
    %236 = vector.shape_cast %235 : vector<1x128x384xbf16> to vector<128x384xbf16>
    %cst_92 = arith.constant dense<0.000000e+00> : vector<32x384xf32>
    %237 = tpu.matmul %234, %236, %cst_92 {dimension_numbers = #tpu.dot_dimension_numbers<[1], [0], [0], [1], [0, 0, 1, 1], [], []>} : vector<32x128xbf16>, vector<128x384xbf16>, vector<32x384xf32> -> vector<32x384xf32>
    %238 = arith.truncf %237 : vector<32x384xf32> to vector<32x384xbf16>
    %c1_93 = arith.constant 1 : index
    %c0_94 = arith.constant 0 : index
    %c0_95 = arith.constant 0 : index
    %239 = vector.load %arg4[%c1_93, %c0_94, %c0_95] : memref<2x128x128xbf16, #tpu.memory_space<vmem>>, vector<1x128x128xbf16>
    %240 = vector.shape_cast %239 : vector<1x128x128xbf16> to vector<128x128xbf16>
    %cst_96 = arith.constant 0.000000e+00 : f32
    %241 = vector.broadcast %cst_96 : f32 to vector<32x128xf32>
    %242 = vector.extract_strided_slice %238 {offsets = [0, 0], sizes = [32, 32], strides = [1, 1]} : vector<32x384xbf16> to vector<32x32xbf16>
    %243 = vector.shape_cast %242 : vector<32x32xbf16> to vector<2x16x32xbf16>
    %244 = vector.extract_strided_slice %238 {offsets = [0, 128], sizes = [32, 32], strides = [1, 1]} : vector<32x384xbf16> to vector<32x32xbf16>
    %245 = vector.shape_cast %244 : vector<32x32xbf16> to vector<2x16x32xbf16>
    %246 = vector.extract_strided_slice %238 {offsets = [0, 256], sizes = [32, 32], strides = [1, 1]} : vector<32x384xbf16> to vector<32x32xbf16>
    %247 = vector.shape_cast %246 : vector<32x32xbf16> to vector<2x16x32xbf16>
    "tpu.trace_start"() <{level = 10 : i32, message = "bqd,bkd->bqk"}> : () -> ()
    %cst_97 = arith.constant dense<0.000000e+00> : vector<2x16x16xf32>
    %248 = tpu.matmul %243, %245, %cst_97 {dimension_numbers = #tpu.dot_dimension_numbers<[2], [2], [1], [1], [0, 0, 0, 1, 1, 1], [0], [0]>} : vector<2x16x32xbf16>, vector<2x16x32xbf16>, vector<2x16x16xf32> -> vector<2x16x16xf32>
    "tpu.trace_stop"() : () -> ()
    %cst_98 = arith.constant 0.176776692 : f32
    %249 = vector.broadcast %cst_98 : f32 to vector<2x16x16xf32>
    %250 = arith.mulf %248, %249 : vector<2x16x16xf32>
    %251 = vector.broadcast %7 : vector<1x16x16xf32> to vector<2x16x16xf32>
    %252 = arith.addf %250, %251 : vector<2x16x16xf32>
    %cst_99 = arith.constant dense<0xFF800000> : vector<2x16xf32>
    %253 = vector.multi_reduction <maximumf>, %252, %cst_99 [2] : vector<2x16x16xf32> to vector<2x16xf32>
    %cst_100 = arith.constant 0xFF800000 : f32
    %254 = vector.broadcast %cst_100 : f32 to vector<2x16xf32>
    %255 = arith.maximumf %254, %253 : vector<2x16xf32>
    %256 = vector.shape_cast %255 : vector<2x16xf32> to vector<2x16x1xf32>
    %257 = vector.broadcast %256 : vector<2x16x1xf32> to vector<2x16x16xf32>
    %258 = arith.subf %252, %257 : vector<2x16x16xf32>
    %259 = math.exp %258 : vector<2x16x16xf32>
    %cst_101 = arith.constant dense<0.000000e+00> : vector<2x16xf32>
    %260 = vector.multi_reduction <add>, %259, %cst_101 [2] : vector<2x16x16xf32> to vector<2x16xf32>
    %261 = vector.shape_cast %260 : vector<2x16xf32> to vector<2x16x1xf32>
    %262 = vector.broadcast %261 : vector<2x16x1xf32> to vector<2x16x16xf32>
    %263 = arith.divf %259, %262 : vector<2x16x16xf32>
    %264 = arith.truncf %263 : vector<2x16x16xf32> to vector<2x16x16xbf16>
    "tpu.trace_start"() <{level = 10 : i32, message = "bqk,bkd->bqd"}> : () -> ()
    %cst_102 = arith.constant dense<0.000000e+00> : vector<2x16x32xf32>
    %265 = tpu.matmul %264, %247, %cst_102 {dimension_numbers = #tpu.dot_dimension_numbers<[2], [1], [1], [2], [0, 0, 0, 1, 1, 2], [0], [0]>} : vector<2x16x16xbf16>, vector<2x16x32xbf16>, vector<2x16x32xf32> -> vector<2x16x32xf32>
    "tpu.trace_stop"() : () -> ()
    %266 = vector.shape_cast %265 : vector<2x16x32xf32> to vector<32x32xf32>
    %267 = arith.truncf %266 : vector<32x32xf32> to vector<32x32xbf16>
    %268 = vector.extract_strided_slice %240 {offsets = [0, 0], sizes = [32, 128], strides = [1, 1]} : vector<128x128xbf16> to vector<32x128xbf16>
    %cst_103 = arith.constant dense<0.000000e+00> : vector<32x128xf32>
    %269 = tpu.matmul %267, %268, %cst_103 {dimension_numbers = #tpu.dot_dimension_numbers<[1], [0], [0], [1], [0, 0, 1, 1], [], []>} : vector<32x32xbf16>, vector<32x128xbf16>, vector<32x128xf32> -> vector<32x128xf32>
    %270 = arith.addf %241, %269 : vector<32x128xf32>
    %271 = vector.extract_strided_slice %238 {offsets = [0, 32], sizes = [32, 32], strides = [1, 1]} : vector<32x384xbf16> to vector<32x32xbf16>
    %272 = vector.shape_cast %271 : vector<32x32xbf16> to vector<2x16x32xbf16>
    %273 = vector.extract_strided_slice %238 {offsets = [0, 160], sizes = [32, 32], strides = [1, 1]} : vector<32x384xbf16> to vector<32x32xbf16>
    %274 = vector.shape_cast %273 : vector<32x32xbf16> to vector<2x16x32xbf16>
    %275 = vector.extract_strided_slice %238 {offsets = [0, 288], sizes = [32, 32], strides = [1, 1]} : vector<32x384xbf16> to vector<32x32xbf16>
    %276 = vector.shape_cast %275 : vector<32x32xbf16> to vector<2x16x32xbf16>
    "tpu.trace_start"() <{level = 10 : i32, message = "bqd,bkd->bqk"}> : () -> ()
    %cst_104 = arith.constant dense<0.000000e+00> : vector<2x16x16xf32>
    %277 = tpu.matmul %272, %274, %cst_104 {dimension_numbers = #tpu.dot_dimension_numbers<[2], [2], [1], [1], [0, 0, 0, 1, 1, 1], [0], [0]>} : vector<2x16x32xbf16>, vector<2x16x32xbf16>, vector<2x16x16xf32> -> vector<2x16x16xf32>
    "tpu.trace_stop"() : () -> ()
    %cst_105 = arith.constant 0.176776692 : f32
    %278 = vector.broadcast %cst_105 : f32 to vector<2x16x16xf32>
    %279 = arith.mulf %277, %278 : vector<2x16x16xf32>
    %280 = vector.broadcast %7 : vector<1x16x16xf32> to vector<2x16x16xf32>
    %281 = arith.addf %279, %280 : vector<2x16x16xf32>
    %cst_106 = arith.constant dense<0xFF800000> : vector<2x16xf32>
    %282 = vector.multi_reduction <maximumf>, %281, %cst_106 [2] : vector<2x16x16xf32> to vector<2x16xf32>
    %cst_107 = arith.constant 0xFF800000 : f32
    %283 = vector.broadcast %cst_107 : f32 to vector<2x16xf32>
    %284 = arith.maximumf %283, %282 : vector<2x16xf32>
    %285 = vector.shape_cast %284 : vector<2x16xf32> to vector<2x16x1xf32>
    %286 = vector.broadcast %285 : vector<2x16x1xf32> to vector<2x16x16xf32>
    %287 = arith.subf %281, %286 : vector<2x16x16xf32>
    %288 = math.exp %287 : vector<2x16x16xf32>
    %cst_108 = arith.constant dense<0.000000e+00> : vector<2x16xf32>
    %289 = vector.multi_reduction <add>, %288, %cst_108 [2] : vector<2x16x16xf32> to vector<2x16xf32>
    %290 = vector.shape_cast %289 : vector<2x16xf32> to vector<2x16x1xf32>
    %291 = vector.broadcast %290 : vector<2x16x1xf32> to vector<2x16x16xf32>
    %292 = arith.divf %288, %291 : vector<2x16x16xf32>
    %293 = arith.truncf %292 : vector<2x16x16xf32> to vector<2x16x16xbf16>
    "tpu.trace_start"() <{level = 10 : i32, message = "bqk,bkd->bqd"}> : () -> ()
    %cst_109 = arith.constant dense<0.000000e+00> : vector<2x16x32xf32>
    %294 = tpu.matmul %293, %276, %cst_109 {dimension_numbers = #tpu.dot_dimension_numbers<[2], [1], [1], [2], [0, 0, 0, 1, 1, 2], [0], [0]>} : vector<2x16x16xbf16>, vector<2x16x32xbf16>, vector<2x16x32xf32> -> vector<2x16x32xf32>
    "tpu.trace_stop"() : () -> ()
    %295 = vector.shape_cast %294 : vector<2x16x32xf32> to vector<32x32xf32>
    %296 = arith.truncf %295 : vector<32x32xf32> to vector<32x32xbf16>
    %297 = vector.extract_strided_slice %240 {offsets = [32, 0], sizes = [32, 128], strides = [1, 1]} : vector<128x128xbf16> to vector<32x128xbf16>
    %cst_110 = arith.constant dense<0.000000e+00> : vector<32x128xf32>
    %298 = tpu.matmul %296, %297, %cst_110 {dimension_numbers = #tpu.dot_dimension_numbers<[1], [0], [0], [1], [0, 0, 1, 1], [], []>} : vector<32x32xbf16>, vector<32x128xbf16>, vector<32x128xf32> -> vector<32x128xf32>
    %299 = arith.addf %270, %298 : vector<32x128xf32>
    %300 = vector.extract_strided_slice %238 {offsets = [0, 64], sizes = [32, 32], strides = [1, 1]} : vector<32x384xbf16> to vector<32x32xbf16>
    %301 = vector.shape_cast %300 : vector<32x32xbf16> to vector<2x16x32xbf16>
    %302 = vector.extract_strided_slice %238 {offsets = [0, 192], sizes = [32, 32], strides = [1, 1]} : vector<32x384xbf16> to vector<32x32xbf16>
    %303 = vector.shape_cast %302 : vector<32x32xbf16> to vector<2x16x32xbf16>
    %304 = vector.extract_strided_slice %238 {offsets = [0, 320], sizes = [32, 32], strides = [1, 1]} : vector<32x384xbf16> to vector<32x32xbf16>
    %305 = vector.shape_cast %304 : vector<32x32xbf16> to vector<2x16x32xbf16>
    "tpu.trace_start"() <{level = 10 : i32, message = "bqd,bkd->bqk"}> : () -> ()
    %cst_111 = arith.constant dense<0.000000e+00> : vector<2x16x16xf32>
    %306 = tpu.matmul %301, %303, %cst_111 {dimension_numbers = #tpu.dot_dimension_numbers<[2], [2], [1], [1], [0, 0, 0, 1, 1, 1], [0], [0]>} : vector<2x16x32xbf16>, vector<2x16x32xbf16>, vector<2x16x16xf32> -> vector<2x16x16xf32>
    "tpu.trace_stop"() : () -> ()
    %cst_112 = arith.constant 0.176776692 : f32
    %307 = vector.broadcast %cst_112 : f32 to vector<2x16x16xf32>
    %308 = arith.mulf %306, %307 : vector<2x16x16xf32>
    %309 = vector.broadcast %7 : vector<1x16x16xf32> to vector<2x16x16xf32>
    %310 = arith.addf %308, %309 : vector<2x16x16xf32>
    %cst_113 = arith.constant dense<0xFF800000> : vector<2x16xf32>
    %311 = vector.multi_reduction <maximumf>, %310, %cst_113 [2] : vector<2x16x16xf32> to vector<2x16xf32>
    %cst_114 = arith.constant 0xFF800000 : f32
    %312 = vector.broadcast %cst_114 : f32 to vector<2x16xf32>
    %313 = arith.maximumf %312, %311 : vector<2x16xf32>
    %314 = vector.shape_cast %313 : vector<2x16xf32> to vector<2x16x1xf32>
    %315 = vector.broadcast %314 : vector<2x16x1xf32> to vector<2x16x16xf32>
    %316 = arith.subf %310, %315 : vector<2x16x16xf32>
    %317 = math.exp %316 : vector<2x16x16xf32>
    %cst_115 = arith.constant dense<0.000000e+00> : vector<2x16xf32>
    %318 = vector.multi_reduction <add>, %317, %cst_115 [2] : vector<2x16x16xf32> to vector<2x16xf32>
    %319 = vector.shape_cast %318 : vector<2x16xf32> to vector<2x16x1xf32>
    %320 = vector.broadcast %319 : vector<2x16x1xf32> to vector<2x16x16xf32>
    %321 = arith.divf %317, %320 : vector<2x16x16xf32>
    %322 = arith.truncf %321 : vector<2x16x16xf32> to vector<2x16x16xbf16>
    "tpu.trace_start"() <{level = 10 : i32, message = "bqk,bkd->bqd"}> : () -> ()
    %cst_116 = arith.constant dense<0.000000e+00> : vector<2x16x32xf32>
    %323 = tpu.matmul %322, %305, %cst_116 {dimension_numbers = #tpu.dot_dimension_numbers<[2], [1], [1], [2], [0, 0, 0, 1, 1, 2], [0], [0]>} : vector<2x16x16xbf16>, vector<2x16x32xbf16>, vector<2x16x32xf32> -> vector<2x16x32xf32>
    "tpu.trace_stop"() : () -> ()
    %324 = vector.shape_cast %323 : vector<2x16x32xf32> to vector<32x32xf32>
    %325 = arith.truncf %324 : vector<32x32xf32> to vector<32x32xbf16>
    %326 = vector.extract_strided_slice %240 {offsets = [64, 0], sizes = [32, 128], strides = [1, 1]} : vector<128x128xbf16> to vector<32x128xbf16>
    %cst_117 = arith.constant dense<0.000000e+00> : vector<32x128xf32>
    %327 = tpu.matmul %325, %326, %cst_117 {dimension_numbers = #tpu.dot_dimension_numbers<[1], [0], [0], [1], [0, 0, 1, 1], [], []>} : vector<32x32xbf16>, vector<32x128xbf16>, vector<32x128xf32> -> vector<32x128xf32>
    %328 = arith.addf %299, %327 : vector<32x128xf32>
    %329 = vector.extract_strided_slice %238 {offsets = [0, 96], sizes = [32, 32], strides = [1, 1]} : vector<32x384xbf16> to vector<32x32xbf16>
    %330 = vector.shape_cast %329 : vector<32x32xbf16> to vector<2x16x32xbf16>
    %331 = vector.extract_strided_slice %238 {offsets = [0, 224], sizes = [32, 32], strides = [1, 1]} : vector<32x384xbf16> to vector<32x32xbf16>
    %332 = vector.shape_cast %331 : vector<32x32xbf16> to vector<2x16x32xbf16>
    %333 = vector.extract_strided_slice %238 {offsets = [0, 352], sizes = [32, 32], strides = [1, 1]} : vector<32x384xbf16> to vector<32x32xbf16>
    %334 = vector.shape_cast %333 : vector<32x32xbf16> to vector<2x16x32xbf16>
    "tpu.trace_start"() <{level = 10 : i32, message = "bqd,bkd->bqk"}> : () -> ()
    %cst_118 = arith.constant dense<0.000000e+00> : vector<2x16x16xf32>
    %335 = tpu.matmul %330, %332, %cst_118 {dimension_numbers = #tpu.dot_dimension_numbers<[2], [2], [1], [1], [0, 0, 0, 1, 1, 1], [0], [0]>} : vector<2x16x32xbf16>, vector<2x16x32xbf16>, vector<2x16x16xf32> -> vector<2x16x16xf32>
    "tpu.trace_stop"() : () -> ()
    %cst_119 = arith.constant 0.176776692 : f32
    %336 = vector.broadcast %cst_119 : f32 to vector<2x16x16xf32>
    %337 = arith.mulf %335, %336 : vector<2x16x16xf32>
    %338 = vector.broadcast %7 : vector<1x16x16xf32> to vector<2x16x16xf32>
    %339 = arith.addf %337, %338 : vector<2x16x16xf32>
    %cst_120 = arith.constant dense<0xFF800000> : vector<2x16xf32>
    %340 = vector.multi_reduction <maximumf>, %339, %cst_120 [2] : vector<2x16x16xf32> to vector<2x16xf32>
    %cst_121 = arith.constant 0xFF800000 : f32
    %341 = vector.broadcast %cst_121 : f32 to vector<2x16xf32>
    %342 = arith.maximumf %341, %340 : vector<2x16xf32>
    %343 = vector.shape_cast %342 : vector<2x16xf32> to vector<2x16x1xf32>
    %344 = vector.broadcast %343 : vector<2x16x1xf32> to vector<2x16x16xf32>
    %345 = arith.subf %339, %344 : vector<2x16x16xf32>
    %346 = math.exp %345 : vector<2x16x16xf32>
    %cst_122 = arith.constant dense<0.000000e+00> : vector<2x16xf32>
    %347 = vector.multi_reduction <add>, %346, %cst_122 [2] : vector<2x16x16xf32> to vector<2x16xf32>
    %348 = vector.shape_cast %347 : vector<2x16xf32> to vector<2x16x1xf32>
    %349 = vector.broadcast %348 : vector<2x16x1xf32> to vector<2x16x16xf32>
    %350 = arith.divf %346, %349 : vector<2x16x16xf32>
    %351 = arith.truncf %350 : vector<2x16x16xf32> to vector<2x16x16xbf16>
    "tpu.trace_start"() <{level = 10 : i32, message = "bqk,bkd->bqd"}> : () -> ()
    %cst_123 = arith.constant dense<0.000000e+00> : vector<2x16x32xf32>
    %352 = tpu.matmul %351, %334, %cst_123 {dimension_numbers = #tpu.dot_dimension_numbers<[2], [1], [1], [2], [0, 0, 0, 1, 1, 2], [0], [0]>} : vector<2x16x16xbf16>, vector<2x16x32xbf16>, vector<2x16x32xf32> -> vector<2x16x32xf32>
    "tpu.trace_stop"() : () -> ()
    %353 = vector.shape_cast %352 : vector<2x16x32xf32> to vector<32x32xf32>
    %354 = arith.truncf %353 : vector<32x32xf32> to vector<32x32xbf16>
    %355 = vector.extract_strided_slice %240 {offsets = [96, 0], sizes = [32, 128], strides = [1, 1]} : vector<128x128xbf16> to vector<32x128xbf16>
    %cst_124 = arith.constant dense<0.000000e+00> : vector<32x128xf32>
    %356 = tpu.matmul %354, %355, %cst_124 {dimension_numbers = #tpu.dot_dimension_numbers<[1], [0], [0], [1], [0, 0, 1, 1], [], []>} : vector<32x32xbf16>, vector<32x128xbf16>, vector<32x128xf32> -> vector<32x128xf32>
    %357 = arith.addf %328, %356 : vector<32x128xf32>
    %358 = arith.addf %207, %357 : vector<32x128xf32>
    %c1_125 = arith.constant 1 : index
    %c0_126 = arith.constant 0 : index
    %c0_127 = arith.constant 0 : index
    %359 = vector.load %arg5[%c1_125, %c0_126, %c0_127] : memref<2x1x128xf32, #tpu.memory_space<vmem>>, vector<1x1x128xf32>
    %360 = vector.shape_cast %359 : vector<1x1x128xf32> to vector<1x128xf32>
    %361 = vector.broadcast %360 : vector<1x128xf32> to vector<32x128xf32>
    %362 = arith.addf %358, %361 : vector<32x128xf32>
    %c1_128 = arith.constant 1 : index
    %c0_129 = arith.constant 0 : index
    %c0_130 = arith.constant 0 : index
    %363 = vector.load %arg6[%c1_128, %c0_129, %c0_130] : memref<2x1x128xf32, #tpu.memory_space<vmem>>, vector<1x1x128xf32>
    %364 = vector.shape_cast %363 : vector<1x1x128xf32> to vector<1x128xf32>
    %c1_131 = arith.constant 1 : index
    %c0_132 = arith.constant 0 : index
    %c0_133 = arith.constant 0 : index
    %365 = vector.load %arg7[%c1_131, %c0_132, %c0_133] : memref<2x1x128xf32, #tpu.memory_space<vmem>>, vector<1x1x128xf32>
    %366 = vector.shape_cast %365 : vector<1x1x128xf32> to vector<1x128xf32>
    %cst_134 = arith.constant dense<0.000000e+00> : vector<32xf32>
    %367 = vector.multi_reduction <add>, %362, %cst_134 [1] : vector<32x128xf32> to vector<32xf32>
    %368 = vector.shape_cast %367 : vector<32xf32> to vector<32x1xf32>
    %cst_135 = arith.constant 1.280000e+02 : f32
    %369 = vector.broadcast %cst_135 : f32 to vector<32x1xf32>
    %370 = arith.divf %368, %369 : vector<32x1xf32>
    %371 = vector.broadcast %370 : vector<32x1xf32> to vector<32x128xf32>
    %372 = arith.subf %362, %371 : vector<32x128xf32>
    %373 = arith.mulf %372, %372 : vector<32x128xf32>
    %cst_136 = arith.constant dense<0.000000e+00> : vector<32xf32>
    %374 = vector.multi_reduction <add>, %373, %cst_136 [1] : vector<32x128xf32> to vector<32xf32>
    %375 = vector.shape_cast %374 : vector<32xf32> to vector<32x1xf32>
    %cst_137 = arith.constant 1.280000e+02 : f32
    %376 = vector.broadcast %cst_137 : f32 to vector<32x1xf32>
    %377 = arith.divf %375, %376 : vector<32x1xf32>
    %378 = vector.broadcast %370 : vector<32x1xf32> to vector<32x128xf32>
    %379 = arith.subf %362, %378 : vector<32x128xf32>
    %cst_138 = arith.constant 9.99999974E-6 : f32
    %380 = vector.broadcast %cst_138 : f32 to vector<32x1xf32>
    %381 = arith.addf %377, %380 : vector<32x1xf32>
    %382 = math.rsqrt %381 : vector<32x1xf32>
    %383 = vector.broadcast %382 : vector<32x1xf32> to vector<32x128xf32>
    %384 = arith.mulf %379, %383 : vector<32x128xf32>
    %385 = vector.broadcast %364 : vector<1x128xf32> to vector<32x128xf32>
    %386 = arith.mulf %384, %385 : vector<32x128xf32>
    %387 = vector.broadcast %366 : vector<1x128xf32> to vector<32x128xf32>
    %388 = arith.addf %386, %387 : vector<32x128xf32>
    %389 = arith.truncf %388 : vector<32x128xf32> to vector<32x128xbf16>
    %c1_139 = arith.constant 1 : index
    %c0_140 = arith.constant 0 : index
    %c0_141 = arith.constant 0 : index
    %390 = vector.load %arg8[%c1_139, %c0_140, %c0_141] : memref<2x128x512xbf16, #tpu.memory_space<vmem>>, vector<1x128x512xbf16>
    %391 = vector.shape_cast %390 : vector<1x128x512xbf16> to vector<128x512xbf16>
    %cst_142 = arith.constant dense<0.000000e+00> : vector<32x512xf32>
    %392 = tpu.matmul %389, %391, %cst_142 {dimension_numbers = #tpu.dot_dimension_numbers<[1], [0], [0], [1], [0, 0, 1, 1], [], []>} : vector<32x128xbf16>, vector<128x512xbf16>, vector<32x512xf32> -> vector<32x512xf32>
    %c1_143 = arith.constant 1 : index
    %c0_144 = arith.constant 0 : index
    %c0_145 = arith.constant 0 : index
    %393 = vector.load %arg9[%c1_143, %c0_144, %c0_145] : memref<2x1x512xf32, #tpu.memory_space<vmem>>, vector<1x1x512xf32>
    %394 = vector.shape_cast %393 : vector<1x1x512xf32> to vector<1x512xf32>
    %395 = vector.broadcast %394 : vector<1x512xf32> to vector<32x512xf32>
    %396 = arith.addf %392, %395 : vector<32x512xf32>
    %cst_146 = arith.constant 0.000000e+00 : f32
    %397 = vector.broadcast %cst_146 : f32 to vector<32x512xf32>
    %398 = arith.maximumf %396, %397 : vector<32x512xf32>
    %399 = arith.truncf %398 : vector<32x512xf32> to vector<32x512xbf16>
    %c1_147 = arith.constant 1 : index
    %c0_148 = arith.constant 0 : index
    %c0_149 = arith.constant 0 : index
    %400 = vector.load %arg10[%c1_147, %c0_148, %c0_149] : memref<2x512x128xbf16, #tpu.memory_space<vmem>>, vector<1x512x128xbf16>
    %401 = vector.shape_cast %400 : vector<1x512x128xbf16> to vector<512x128xbf16>
    %cst_150 = arith.constant dense<0.000000e+00> : vector<32x128xf32>
    %402 = tpu.matmul %399, %401, %cst_150 {dimension_numbers = #tpu.dot_dimension_numbers<[1], [0], [0], [1], [0, 0, 1, 1], [], []>} : vector<32x512xbf16>, vector<512x128xbf16>, vector<32x128xf32> -> vector<32x128xf32>
    %c1_151 = arith.constant 1 : index
    %c0_152 = arith.constant 0 : index
    %c0_153 = arith.constant 0 : index
    %403 = vector.load %arg11[%c1_151, %c0_152, %c0_153] : memref<2x1x128xf32, #tpu.memory_space<vmem>>, vector<1x1x128xf32>
    %404 = vector.shape_cast %403 : vector<1x1x128xf32> to vector<1x128xf32>
    %405 = vector.broadcast %404 : vector<1x128xf32> to vector<32x128xf32>
    %406 = arith.addf %402, %405 : vector<32x128xf32>
    %407 = arith.addf %362, %406 : vector<32x128xf32>
    %c0_154 = arith.constant 0 : index
    %c0_155 = arith.constant 0 : index
    %408 = vector.load %arg12[%c0_154, %c0_155] : memref<1x128xf32, #tpu.memory_space<vmem>>, vector<1x128xf32>
    %c0_156 = arith.constant 0 : index
    %c0_157 = arith.constant 0 : index
    %409 = vector.load %arg13[%c0_156, %c0_157] : memref<1x128xf32, #tpu.memory_space<vmem>>, vector<1x128xf32>
    %cst_158 = arith.constant dense<0.000000e+00> : vector<32xf32>
    %410 = vector.multi_reduction <add>, %407, %cst_158 [1] : vector<32x128xf32> to vector<32xf32>
    %411 = vector.shape_cast %410 : vector<32xf32> to vector<32x1xf32>
    %cst_159 = arith.constant 1.280000e+02 : f32
    %412 = vector.broadcast %cst_159 : f32 to vector<32x1xf32>
    %413 = arith.divf %411, %412 : vector<32x1xf32>
    %414 = vector.broadcast %413 : vector<32x1xf32> to vector<32x128xf32>
    %415 = arith.subf %407, %414 : vector<32x128xf32>
    %416 = arith.mulf %415, %415 : vector<32x128xf32>
    %cst_160 = arith.constant dense<0.000000e+00> : vector<32xf32>
    %417 = vector.multi_reduction <add>, %416, %cst_160 [1] : vector<32x128xf32> to vector<32xf32>
    %418 = vector.shape_cast %417 : vector<32xf32> to vector<32x1xf32>
    %cst_161 = arith.constant 1.280000e+02 : f32
    %419 = vector.broadcast %cst_161 : f32 to vector<32x1xf32>
    %420 = arith.divf %418, %419 : vector<32x1xf32>
    %421 = vector.broadcast %413 : vector<32x1xf32> to vector<32x128xf32>
    %422 = arith.subf %407, %421 : vector<32x128xf32>
    %cst_162 = arith.constant 9.99999974E-6 : f32
    %423 = vector.broadcast %cst_162 : f32 to vector<32x1xf32>
    %424 = arith.addf %420, %423 : vector<32x1xf32>
    %425 = math.rsqrt %424 : vector<32x1xf32>
    %426 = vector.broadcast %425 : vector<32x1xf32> to vector<32x128xf32>
    %427 = arith.mulf %422, %426 : vector<32x128xf32>
    %428 = vector.broadcast %408 : vector<1x128xf32> to vector<32x128xf32>
    %429 = arith.mulf %427, %428 : vector<32x128xf32>
    %430 = vector.broadcast %409 : vector<1x128xf32> to vector<32x128xf32>
    %431 = arith.addf %429, %430 : vector<32x128xf32>
    %432 = arith.truncf %431 : vector<32x128xf32> to vector<32x128xbf16>
    %c0_163 = arith.constant 0 : index
    %c0_164 = arith.constant 0 : index
    %433 = vector.load %arg14[%c0_163, %c0_164] : memref<128x128xbf16, #tpu.memory_space<vmem>>, vector<128x128xbf16>
    %cst_165 = arith.constant dense<0.000000e+00> : vector<32x128xf32>
    %434 = tpu.matmul %432, %433, %cst_165 {dimension_numbers = #tpu.dot_dimension_numbers<[1], [0], [0], [1], [0, 0, 1, 1], [], []>} : vector<32x128xbf16>, vector<128x128xbf16>, vector<32x128xf32> -> vector<32x128xf32>
    %c0_166 = arith.constant 0 : index
    %c0_167 = arith.constant 0 : index
    %435 = vector.load %arg15[%c0_166, %c0_167] : memref<1x128xf32, #tpu.memory_space<vmem>>, vector<1x128xf32>
    %436 = vector.broadcast %435 : vector<1x128xf32> to vector<32x128xf32>
    %437 = arith.addf %434, %436 : vector<32x128xf32>
    %438 = vector.shape_cast %437 : vector<32x128xf32> to vector<2x16x128xf32>
    %c0_168 = arith.constant 0 : index
    %c0_169 = arith.constant 0 : index
    %c0_170 = arith.constant 0 : index
    %439 = vector.load %arg16[%c0_168, %c0_169, %c0_170] : memref<2x16x128xf32, #tpu.memory_space<vmem>>, vector<2x16x128xf32>
    tpu.vector_store %arg16[%c0_168, %c0_169, %c0_170], %438 {strides = array<i32>} : memref<2x16x128xf32, #tpu.memory_space<vmem>>, vector<2x16x128xf32>,
    return
  }
}

</mosaic_0001>

<llo_original>
// kernel: gpt_forward.1
$region0: #{gpt_forward.1}
  #allocation0 [shape = 'u32[]', space=smem, size = 0x4, offset = 0x4, fixed_abs, tag = 'smem constant byte address 0x4 - core index']
  #allocation1 [shape = 'u32[144,128]{1,0:T(1,128)}', space=vmem, size = 0x12000, scoped, tag = 'internal scratch']
  %s0 = inlined_call_operand.vmem [shape: f32[2,16,128], index: 0, kind: input, shape index: {}]
  %s1 = inlined_call_operand.vmem [shape: f32[2,1,128], index: 1, kind: input, shape index: {}]
  %s2 = inlined_call_operand.vmem [shape: f32[2,1,128], index: 2, kind: input, shape index: {}]
  %s3 = inlined_call_operand.vmem [shape: bf16[2,128,384], index: 3, kind: input, shape index: {}]
  %s4 = inlined_call_operand.hbm [shape: bf16[2,128,128], index: 4, kind: input, shape index: {}]
  %s5 = inlined_call_operand.vmem [shape: f32[2,1,128], index: 5, kind: input, shape index: {}]
  %s6 = inlined_call_operand.hbm [shape: f32[2,1,128], index: 6, kind: input, shape index: {}]
  %s7 = inlined_call_operand.hbm [shape: f32[2,1,128], index: 7, kind: input, shape index: {}]
  %s8 = inlined_call_operand.hbm [shape: bf16[2,128,512], index: 8, kind: input, shape index: {}]
  %s9 = inlined_call_operand.hbm [shape: f32[2,1,512], index: 9, kind: input, shape index: {}]
  %s10 = inlined_call_operand.hbm [shape: bf16[2,512,128], index: 10, kind: input, shape index: {}]
  %s11 = inlined_call_operand.hbm [shape: f32[2,1,128], index: 11, kind: input, shape index: {}]
  %s12 = inlined_call_operand.vmem [shape: f32[1,128], index: 12, kind: input, shape index: {}]
  %s13 = inlined_call_operand.hbm [shape: f32[1,128], index: 13, kind: input, shape index: {}]
  %s14 = inlined_call_operand.vmem [shape: bf16[128,128], index: 14, kind: input, shape index: {}]
  %s15 = inlined_call_operand.hbm [shape: f32[1,128], index: 15, kind: input, shape index: {}]
  %s16 = inlined_call_operand.hbm [shape: f32[2,16,128], index: 16, kind: output, shape index: {}]
  %s17 = sld [smem:[#allocation0]]
  $region110: #{gpt_forward.1} parent=0
    _
  %s19 = ssub.s32 1, %s17
  %s20 = scalar_select 0, %s19, %s17
  $region1: #{gpt_forward.1} parent=0
    #allocation2 [shape = 'u8[65536]{0}', space=vmem, size = 0x10000, scoped, tag = 'input window, operand 4, single buffered']
    #allocation3 [shape = 's32[1]{0}', space=sflag, size = 0x4, scoped, tag = 'scoped memory for gpt_forward.1']
    #allocation4 [shape = 's32[1]{0}', space=sflag, size = 0x4, scoped, tag = 'scoped memory for gpt_forward.1']
    #allocation5 [shape = 'u8[1024]{0}', space=vmem, size = 0x400, scoped, tag = 'input window, operand 6, single buffered']
    #allocation6 [shape = 's32[1]{0}', space=sflag, size = 0x4, scoped, tag = 'scoped memory for gpt_forward.1']
    #allocation7 [shape = 'u8[1024]{0}', space=vmem, size = 0x400, scoped, tag = 'input window, operand 7, single buffered']
    #allocation8 [shape = 'u8[262144]{0}', space=vmem, size = 0x40000, scoped, tag = 'input window, operand 8, single buffered']
    #allocation9 [shape = 's32[1]{0}', space=sflag, size = 0x4, scoped, tag = 'scoped memory for gpt_forward.1']
    #allocation10 [shape = 'u8[4096]{0}', space=vmem, size = 0x1000, scoped, tag = 'input window, operand 9, single buffered']
    #allocation11 [shape = 'u8[262144]{0}', space=vmem, size = 0x40000, scoped, tag = 'input window, operand 10, single buffered']
    #allocation12 [shape = 's32[1]{0}', space=sflag, size = 0x4, scoped, tag = 'scoped memory for gpt_forward.1']
    #allocation13 [shape = 'u8[1024]{0}', space=vmem, size = 0x400, scoped, tag = 'input window, operand 11, single buffered']
    #allocation14 [shape = 'u8[512]{0}', space=vmem, size = 0x400, scoped, tag = 'input window, operand 13, single buffered']
    #allocation15 [shape = 's32[1]{0}', space=sflag, size = 0x4, scoped, tag = 'scoped memory for gpt_forward.1']
    #allocation16 [shape = 'u8[512]{0}', space=vmem, size = 0x400, scoped, tag = 'input window, operand 15, single buffered']
    #allocation17 [shape = 'u8[16384]{0}', space=vmem, size = 0x4000, scoped, tag = 'output window, operand 0, single buffered']
    %21 = vsyncpa [#allocation3], 0
    %22 = vsyncpa [#allocation6], 0
    %23 = vsyncpa [#allocation9], 0
    %24 = vsyncpa [#allocation12], 0
    %25 = vsyncpa [#allocation15], 0
    %26 = vsyncpa [#allocation4], 0
    // Predicated region
    $region2: #{gpt_forward.1} parent=1 // pred_check
      _
    $region3: #{gpt_forward.1} parent=1 // pred_check_branch
      %28 = sbr.rel (0) target = $region5
    $region4: #{gpt_forward.1} parent=1 // pred_region
      _
    $region5: #{gpt_forward.1} parent=1 // pred_fallthru
      _
    // Predicated region
    $region6: #{gpt_forward.1} parent=1 // pred_check
      _
    $region7: #{gpt_forward.1} parent=1 // pred_check_branch
      %30 = sbr.rel (0) target = $region9
    $region8: #{gpt_forward.1} parent=1 // pred_region
      _
    $region9: #{gpt_forward.1} parent=1 // pred_fallthru
      _
    // Predicated region
    $region10: #{gpt_forward.1} parent=1 // pred_check
      _
    $region11: #{gpt_forward.1} parent=1 // pred_check_branch
      %32 = sbr.rel (0) target = $region13
    $region12: #{gpt_forward.1} parent=1 // pred_region
      _
    $region13: #{gpt_forward.1} parent=1 // pred_fallthru
      _
    // Predicated region
    $region14: #{gpt_forward.1} parent=1 // pred_check
      _
    $region15: #{gpt_forward.1} parent=1 // pred_check_branch
      %34 = sbr.rel (0) target = $region17
    $region16: #{gpt_forward.1} parent=1 // pred_region
      _
    $region17: #{gpt_forward.1} parent=1 // pred_fallthru
      _
    // Predicated region
    $region18: #{gpt_forward.1} parent=1 // pred_check
      _
    $region19: #{gpt_forward.1} parent=1 // pred_check_branch
      %36 = sbr.rel (0) target = $region21
    $region20: #{gpt_forward.1} parent=1 // pred_region
      %s38 = ssub.s32 2048, 2048
      %39 = vsyncadd [#allocation3], %s38
      %s40 = sshll.u32 [#allocation2], 4
      %s41 = int_to_ptr.vmem [resolvable:$true] %s40
      %46 = dma.hbm_to_vmem [thread:$0]  %s4, 2048, %s41, [#allocation3], 64, 64, 4
    $region21: #{gpt_forward.1} parent=1 // pred_fallthru
      _
    // Predicated region
    $region22: #{gpt_forward.1} parent=1 // pred_check
      _
    $region23: #{gpt_forward.1} parent=1 // pred_check_branch
      %48 = sbr.rel (0) target = $region25
    $region24: #{gpt_forward.1} parent=1 // pred_region
      _
    $region25: #{gpt_forward.1} parent=1 // pred_fallthru
      _
    // Predicated region
    $region26: #{gpt_forward.1} parent=1 // pred_check
      _
    $region27: #{gpt_forward.1} parent=1 // pred_check_branch
      %50 = sbr.rel (0) target = $region29
    $region28: #{gpt_forward.1} parent=1 // pred_region
      %s52 = ssub.s32 32, 32
      %53 = vsyncadd [#allocation6], %s52
      %s54 = sshll.u32 [#allocation5], 4
      %s55 = int_to_ptr.vmem [resolvable:$true] %s54
      %60 = dma.hbm_to_vmem [thread:$0]  %s6, 32, %s55, [#allocation6], 16, 16, 1
    $region29: #{gpt_forward.1} parent=1 // pred_fallthru
      _
    // Predicated region
    $region30: #{gpt_forward.1} parent=1 // pred_check
      _
    $region31: #{gpt_forward.1} parent=1 // pred_check_branch
      %62 = sbr.rel (0) target = $region33
    $region32: #{gpt_forward.1} parent=1 // pred_region
      %s64 = ssub.s32 32, 32
      %65 = vsyncadd [#allocation6], %s64
      %s66 = sshll.u32 [#allocation7], 4
      %s67 = int_to_ptr.vmem [resolvable:$true] %s66
      %72 = dma.hbm_to_vmem [thread:$0]  %s7, 32, %s67, [#allocation6], 16, 16, 1
    $region33: #{gpt_forward.1} parent=1 // pred_fallthru
      _
    // Predicated region
    $region34: #{gpt_forward.1} parent=1 // pred_check
      _
    $region35: #{gpt_forward.1} parent=1 // pred_check_branch
      %74 = sbr.rel (0) target = $region37
    $region36: #{gpt_forward.1} parent=1 // pred_region
      %s76 = ssub.s32 8192, 8192
      %77 = vsyncadd [#allocation9], %s76
      %s78 = sshll.u32 [#allocation8], 4
      %s79 = int_to_ptr.vmem [resolvable:$true] %s78
      %84 = dma.hbm_to_vmem [thread:$0]  %s8, 8192, %s79, [#allocation9], 256, 256, 16
    $region37: #{gpt_forward.1} parent=1 // pred_fallthru
      _
    // Predicated region
    $region38: #{gpt_forward.1} parent=1 // pred_check
      _
    $region39: #{gpt_forward.1} parent=1 // pred_check_branch
      %86 = sbr.rel (0) target = $region41
    $region40: #{gpt_forward.1} parent=1 // pred_region
      %s88 = ssub.s32 128, 128
      %89 = vsyncadd [#allocation9], %s88
      %s90 = sshll.u32 [#allocation10], 4
      %s91 = int_to_ptr.vmem [resolvable:$true] %s90
      %96 = dma.hbm_to_vmem [thread:$0]  %s9, 128, %s91, [#allocation9], 64, 64, 4
    $region41: #{gpt_forward.1} parent=1 // pred_fallthru
      _
    // Predicated region
    $region42: #{gpt_forward.1} parent=1 // pred_check
      _
    $region43: #{gpt_forward.1} parent=1 // pred_check_branch
      %98 = sbr.rel (0) target = $region45
    $region44: #{gpt_forward.1} parent=1 // pred_region
      %s100 = ssub.s32 8192, 8192
      %101 = vsyncadd [#allocation12], %s100
      %s102 = sshll.u32 [#allocation11], 4
      %s103 = int_to_ptr.vmem [resolvable:$true] %s102
      %108 = dma.hbm_to_vmem [thread:$0]  %s10, 8192, %s103, [#allocation12], 64, 64, 4
    $region45: #{gpt_forward.1} parent=1 // pred_fallthru
      _
    // Predicated region
    $region46: #{gpt_forward.1} parent=1 // pred_check
      _
    $region47: #{gpt_forward.1} parent=1 // pred_check_branch
      %110 = sbr.rel (0) target = $region49
    $region48: #{gpt_forward.1} parent=1 // pred_region
      %s112 = ssub.s32 32, 32
      %113 = vsyncadd [#allocation12], %s112
      %s114 = sshll.u32 [#allocation13], 4
      %s115 = int_to_ptr.vmem [resolvable:$true] %s114
      %120 = dma.hbm_to_vmem [thread:$0]  %s11, 32, %s115, [#allocation12], 16, 16, 1
    $region49: #{gpt_forward.1} parent=1 // pred_fallthru
      _
    // Predicated region
    $region50: #{gpt_forward.1} parent=1 // pred_check
      _
    $region51: #{gpt_forward.1} parent=1 // pred_check_branch
      %122 = sbr.rel (0) target = $region53
    $region52: #{gpt_forward.1} parent=1 // pred_region
      _
    $region53: #{gpt_forward.1} parent=1 // pred_fallthru
      _
    // Predicated region
    $region54: #{gpt_forward.1} parent=1 // pred_check
      _
    $region55: #{gpt_forward.1} parent=1 // pred_check_branch
      %124 = sbr.rel (0) target = $region57
    $region56: #{gpt_forward.1} parent=1 // pred_region
      %s126 = ssub.s32 16, 16
      %127 = vsyncadd [#allocation15], %s126
      %s129 = sshll.u32 [#allocation14], 4
      %s130 = int_to_ptr.vmem [resolvable:$true] %s129
      %132 = dma.hbm_to_vmem [thread:$0]  %s13, 16, %s130, [#allocation15]
    $region57: #{gpt_forward.1} parent=1 // pred_fallthru
      _
    // Predicated region
    $region58: #{gpt_forward.1} parent=1 // pred_check
      _
    $region59: #{gpt_forward.1} parent=1 // pred_check_branch
      %134 = sbr.rel (0) target = $region61
    $region60: #{gpt_forward.1} parent=1 // pred_region
      _
    $region61: #{gpt_forward.1} parent=1 // pred_fallthru
      _
    // Predicated region
    $region62: #{gpt_forward.1} parent=1 // pred_check
      _
    $region63: #{gpt_forward.1} parent=1 // pred_check_branch
      %136 = sbr.rel (0) target = $region65
    $region64: #{gpt_forward.1} parent=1 // pred_region
      %s138 = ssub.s32 16, 16
      %139 = vsyncadd [#allocation15], %s138
      %s141 = sshll.u32 [#allocation16], 4
      %s142 = int_to_ptr.vmem [resolvable:$true] %s141
      %144 = dma.hbm_to_vmem [thread:$0]  %s15, 16, %s142, [#allocation15]
    $region65: #{gpt_forward.1} parent=1 // pred_fallthru
      _
    // Predicated region
    $region66: #{gpt_forward.1} parent=1 // pred_check
      _
    $region67: #{gpt_forward.1} parent=1 // pred_check_branch
      %146 = sbr.rel (0) target = $region69
    $region68: #{gpt_forward.1} parent=1 // pred_region
      %147 = dma.done [#allocation3], 2048
    $region69: #{gpt_forward.1} parent=1 // pred_fallthru
      _
    // Predicated region
    $region70: #{gpt_forward.1} parent=1 // pred_check
      _
    $region71: #{gpt_forward.1} parent=1 // pred_check_branch
      %149 = sbr.rel (0) target = $region73
    $region72: #{gpt_forward.1} parent=1 // pred_region
      %150 = dma.done [#allocation6], 32
    $region73: #{gpt_forward.1} parent=1 // pred_fallthru
      _
    // Predicated region
    $region74: #{gpt_forward.1} parent=1 // pred_check
      _
    $region75: #{gpt_forward.1} parent=1 // pred_check_branch
      %152 = sbr.rel (0) target = $region77
    $region76: #{gpt_forward.1} parent=1 // pred_region
      %153 = dma.done [#allocation6], 32
    $region77: #{gpt_forward.1} parent=1 // pred_fallthru
      _
    // Predicated region
    $region78: #{gpt_forward.1} parent=1 // pred_check
      _
    $region79: #{gpt_forward.1} parent=1 // pred_check_branch
      %155 = sbr.rel (0) target = $region81
    $region80: #{gpt_forward.1} parent=1 // pred_region
      %156 = dma.done [#allocation9], 8192
    $region81: #{gpt_forward.1} parent=1 // pred_fallthru
      _
    // Predicated region
    $region82: #{gpt_forward.1} parent=1 // pred_check
      _
    $region83: #{gpt_forward.1} parent=1 // pred_check_branch
      %158 = sbr.rel (0) target = $region85
    $region84: #{gpt_forward.1} parent=1 // pred_region
      %159 = dma.done [#allocation9], 128
    $region85: #{gpt_forward.1} parent=1 // pred_fallthru
      _
    // Predicated region
    $region86: #{gpt_forward.1} parent=1 // pred_check
      _
    $region87: #{gpt_forward.1} parent=1 // pred_check_branch
      %161 = sbr.rel (0) target = $region89
    $region88: #{gpt_forward.1} parent=1 // pred_region
      %162 = dma.done [#allocation12], 8192
    $region89: #{gpt_forward.1} parent=1 // pred_fallthru
      _
    // Predicated region
    $region90: #{gpt_forward.1} parent=1 // pred_check
      _
    $region91: #{gpt_forward.1} parent=1 // pred_check_branch
      %164 = sbr.rel (0) target = $region93
    $region92: #{gpt_forward.1} parent=1 // pred_region
      %165 = dma.done [#allocation12], 32
    $region93: #{gpt_forward.1} parent=1 // pred_fallthru
      _
    // Predicated region
    $region94: #{gpt_forward.1} parent=1 // pred_check
      _
    $region95: #{gpt_forward.1} parent=1 // pred_check_branch
      %167 = sbr.rel (0) target = $region97
    $region96: #{gpt_forward.1} parent=1 // pred_region
      %168 = dma.done [#allocation15], 16
    $region97: #{gpt_forward.1} parent=1 // pred_fallthru
      _
    // Predicated region
    $region98: #{gpt_forward.1} parent=1 // pred_check
      _
    $region99: #{gpt_forward.1} parent=1 // pred_check_branch
      %170 = sbr.rel (0) target = $region101
    $region100: #{gpt_forward.1} parent=1 // pred_region
      %171 = dma.done [#allocation15], 16
    $region101: #{gpt_forward.1} parent=1 // pred_fallthru
      _
    %v173 = vld [vmem:[%s0] sm:$0xff]
    %v174 = vld [vmem:[%s0 + $0x8] sm:$0xff]
    %v175 = vld [vmem:[%s0 + $0x10] sm:$0xff]
    %v176 = vld [vmem:[%s0 + $0x18] sm:$0xff]
    %v177 = vlaneseq
    %v178 = vshrl.u32 %v177, 7
    %v179 = vadd.s32 %v178, 8
    %v180 = vlaneseq
    %v181 = vand.u32 %v180, 127
    %vm182 = vcmp.le.s32.totalorder %v181, %v178
    %vm183 = vcmp.le.s32.totalorder %v181, %v179
    %v184 = vsel %vm182, 0.0, -inf
    %v185 = vsel %vm183, 0.0, -inf
    %v186 = vld [vmem:[%s1] sm:$0x1]
    %v187 = vld [vmem:[%s2] sm:$0x1]
    %188 = vadd.xlane.f32.xlu0 %v173
    %v189 = vpop.xlane.xlu0 %188
    %190 = vadd.xlane.f32.xlu0 %v174
    %v191 = vpop.xlane.xlu0 %190
    %192 = vadd.xlane.f32.xlu0 %v175
    %v193 = vpop.xlane.xlu0 %192
    %194 = vadd.xlane.f32.xlu0 %v176
    %v195 = vpop.xlane.xlu0 %194
    %v196 = vrcp.pop 128.0
    %v197 = vmul.f32 %v189, %v196
    %v198 = vmul.f32 %v191, %v196
    %v199 = vmul.f32 %v193, %v196
    %v200 = vmul.f32 %v195, %v196
    %v201 = vsub.f32 %v173, %v197
    %v202 = vsub.f32 %v174, %v198
    %v203 = vsub.f32 %v175, %v199
    %v204 = vsub.f32 %v176, %v200
    %v205 = vmul.f32 %v201, %v201
    %v206 = vmul.f32 %v202, %v202
    %v207 = vmul.f32 %v203, %v203
    %v208 = vmul.f32 %v204, %v204
    %209 = vadd.xlane.f32.xlu0 %v205
    %v210 = vpop.xlane.xlu0 %209
    %211 = vadd.xlane.f32.xlu0 %v206
    %v212 = vpop.xlane.xlu0 %211
    %213 = vadd.xlane.f32.xlu0 %v207
    %v214 = vpop.xlane.xlu0 %213
    %215 = vadd.xlane.f32.xlu0 %v208
    %v216 = vpop.xlane.xlu0 %215
    %v217 = vmul.f32 %v210, %v196
    %v218 = vmul.f32 %v212, %v196
    %v219 = vmul.f32 %v214, %v196
    %v220 = vmul.f32 %v216, %v196
    %v221 = vadd.f32 %v217, 1e-05
    %v222 = vadd.f32 %v218, 1e-05
    %v223 = vadd.f32 %v219, 1e-05
    %v224 = vadd.f32 %v220, 1e-05
    %v225 = vrsqrt.pop %v221
    %v226 = vrsqrt.pop %v222
    %v227 = vrsqrt.pop %v223
    %v228 = vrsqrt.pop %v224
    %v229 = vmul.f32 %v201, %v225
    %v230 = vmul.f32 %v202, %v226
    %v231 = vmul.f32 %v203, %v227
    %v232 = vmul.f32 %v204, %v228
    %v234 = vlaneseq
    %v235 = vshrl.u32 %v234, 7
    %v236 = vsub.s32 0, %v235
    %v237 = vrot.slane %v186, %v236
    %v239 = vmul.f32 %v229, %v237
    %v240 = vmul.f32 %v230, %v237
    %v241 = vmul.f32 %v231, %v237
    %v242 = vmul.f32 %v232, %v237
    %v244 = vlaneseq
    %v245 = vshrl.u32 %v244, 7
    %v246 = vsub.s32 0, %v245
    %v247 = vrot.slane %v187, %v246
    %v249 = vadd.f32 %v239, %v247
    %v250 = vadd.f32 %v240, %v247
    %v251 = vadd.f32 %v241, %v247
    %v252 = vadd.f32 %v242, %v247
    %v253 = vpack.c.bf16 %v250, %v249
    %v254 = vpack.c.bf16 %v252, %v251
    %v255 = vld [vmem:[%s3] sm:$0xff]
    %v256 = vld [vmem:[%s3 + $0x8] sm:$0xf]
    %v257 = vld [vmem:[%s3 + $0xc] sm:$0xff]
    %v258 = vld [vmem:[%s3 + $0x14] sm:$0xf]
    %v259 = vld [vmem:[%s3 + $0x18] sm:$0xff]
    %v260 = vld [vmem:[%s3 + $0x20] sm:$0xf]
    %v261 = vld [vmem:[%s3 + $0x24] sm:$0xff]
    %v262 = vld [vmem:[%s3 + $0x2c] sm:$0xf]
    %v263 = vld [vmem:[%s3 + $0x30] sm:$0xff]
    %v264 = vld [vmem:[%s3 + $0x38] sm:$0xf]
    %v265 = vld [vmem:[%s3 + $0x3c] sm:$0xff]
    %v266 = vld [vmem:[%s3 + $0x44] sm:$0xf]
    %v267 = vld [vmem:[%s3 + $0x48] sm:$0xff]
    %v268 = vld [vmem:[%s3 + $0x50] sm:$0xf]
    %v269 = vld [vmem:[%s3 + $0x54] sm:$0xff]
    %v270 = vld [vmem:[%s3 + $0x5c] sm:$0xf]
    %v271 = vld [vmem:[%s3 + $0x60] sm:$0xff]
    %v272 = vld [vmem:[%s3 + $0x68] sm:$0xf]
    %v273 = vld [vmem:[%s3 + $0x6c] sm:$0xff]
    %v274 = vld [vmem:[%s3 + $0x74] sm:$0xf]
    %v275 = vld [vmem:[%s3 + $0x78] sm:$0xff]
    %v276 = vld [vmem:[%s3 + $0x80] sm:$0xf]
    %v277 = vld [vmem:[%s3 + $0x84] sm:$0xff]
    %v278 = vld [vmem:[%s3 + $0x8c] sm:$0xf]
    %v279 = vld [vmem:[%s3 + $0x90] sm:$0xff]
    %v280 = vld [vmem:[%s3 + $0x98] sm:$0xf]
    %v281 = vld [vmem:[%s3 + $0x9c] sm:$0xff]
    %v282 = vld [vmem:[%s3 + $0xa4] sm:$0xf]
    %v283 = vld [vmem:[%s3 + $0xa8] sm:$0xff]
    %v284 = vld [vmem:[%s3 + $0xb0] sm:$0xf]
    %v285 = vld [vmem:[%s3 + $0xb4] sm:$0xff]
    %v286 = vld [vmem:[%s3 + $0xbc] sm:$0xf]
    %v319 = vunpack.c.l.b16 %v255
    %v320 = vunpack.c.h.b16 %v255
    %v321 = vunpack.c.l.b16 %v256
    %v322 = vunpack.c.l.b16 %v257
    %v323 = vunpack.c.h.b16 %v257
    %v324 = vunpack.c.l.b16 %v258
    %v325 = vunpack.c.l.b16 %v259
    %v326 = vunpack.c.h.b16 %v259
    %v327 = vunpack.c.l.b16 %v260
    %v328 = vunpack.c.l.b16 %v261
    %v329 = vunpack.c.h.b16 %v261
    %v330 = vunpack.c.l.b16 %v262
    %v331 = vunpack.c.l.b16 %v263
    %v332 = vunpack.c.h.b16 %v263
    %v333 = vunpack.c.l.b16 %v264
    %v334 = vunpack.c.l.b16 %v265
    %v335 = vunpack.c.h.b16 %v265
    %v336 = vunpack.c.l.b16 %v266
    %v337 = vunpack.c.l.b16 %v267
    %v338 = vunpack.c.h.b16 %v267
    %v339 = vunpack.c.l.b16 %v268
    %v340 = vunpack.c.l.b16 %v269
    %v341 = vunpack.c.h.b16 %v269
    %v342 = vunpack.c.l.b16 %v270
    %v343 = vunpack.c.l.b16 %v271
    %v344 = vunpack.c.h.b16 %v271
    %v345 = vunpack.c.l.b16 %v272
    %v346 = vunpack.c.l.b16 %v273
    %v347 = vunpack.c.h.b16 %v273
    %v348 = vunpack.c.l.b16 %v274
    %v349 = vunpack.c.l.b16 %v275
    %v350 = vunpack.c.h.b16 %v275
    %v351 = vunpack.c.l.b16 %v276
    %v352 = vunpack.c.l.b16 %v277
    %v353 = vunpack.c.h.b16 %v277
    %v354 = vunpack.c.l.b16 %v278
    %v355 = vunpack.c.l.b16 %v279
    %v356 = vunpack.c.h.b16 %v279
    %v357 = vunpack.c.l.b16 %v280
    %v358 = vunpack.c.l.b16 %v281
    %v359 = vunpack.c.h.b16 %v281
    %v360 = vunpack.c.l.b16 %v282
    %v361 = vunpack.c.l.b16 %v283
    %v362 = vunpack.c.h.b16 %v283
    %v363 = vunpack.c.l.b16 %v284
    %v364 = vunpack.c.l.b16 %v285
    %v365 = vunpack.c.h.b16 %v285
    %v366 = vunpack.c.l.b16 %v286
    %v367 = vpack.c.b16 %v322, %v319
    %v368 = vpack.c.b16 %v323, %v320
    %v369 = vpack.c.b16 %v324, %v321
    %v370 = vpack.c.b16 %v328, %v325
    %v371 = vpack.c.b16 %v329, %v326
    %v372 = vpack.c.b16 %v330, %v327
    %v373 = vpack.c.b16 %v334, %v331
    %v374 = vpack.c.b16 %v335, %v332
    %v375 = vpack.c.b16 %v336, %v333
    %v376 = vpack.c.b16 %v340, %v337
    %v377 = vpack.c.b16 %v341, %v338
    %v378 = vpack.c.b16 %v342, %v339
    %v379 = vpack.c.b16 %v346, %v343
    %v380 = vpack.c.b16 %v347, %v344
    %v381 = vpack.c.b16 %v348, %v345
    %v382 = vpack.c.b16 %v352, %v349
    %v383 = vpack.c.b16 %v353, %v350
    %v384 = vpack.c.b16 %v354, %v351
    %v385 = vpack.c.b16 %v358, %v355
    %v386 = vpack.c.b16 %v359, %v356
    %v387 = vpack.c.b16 %v360, %v357
    %v388 = vpack.c.b16 %v364, %v361
    %v389 = vpack.c.b16 %v365, %v362
    %v390 = vpack.c.b16 %v366, %v363
    %415 = vmatprep.subr.bf16.mxu0 %v368
    %416 = vmatpush1.bf16.msra.mxu0 %v367
    %417 = vmatprep.subr.bf16.mxu0 %v371
    %418 = vmatpush1.bf16.msra.mxu0 %v370
    %419 = vmatprep.subr.bf16.mxu0 %v374
    %420 = vmatpush1.bf16.msra.mxu0 %v373
    %421 = vmatprep.subr.bf16.mxu0 %v377
    %422 = vmatpush1.bf16.msra.mxu0 %v376
    %423 = vmatprep.subr.bf16.mxu0 %v380
    %424 = vmatpush1.bf16.msra.mxu0 %v379
    %425 = vmatprep.subr.bf16.mxu0 %v383
    %426 = vmatpush1.bf16.msra.mxu0 %v382
    %427 = vmatprep.subr.bf16.mxu0 %v386
    %428 = vmatpush1.bf16.msra.mxu0 %v385
    %429 = vmatprep.subr.bf16.mxu0 %v389
    %430 = vmatpush1.bf16.msra.mxu0 %v388
    %431 = vmatprep.subr.bf16.mxu0 0
    %432 = vmatpush1.bf16.msra.mxu0 0
    %433 = vmatprep.subr.bf16.mxu0 0
    %434 = vmatpush1.bf16.msra.mxu0 0
    %435 = vmatprep.subr.bf16.mxu0 0
    %436 = vmatpush1.bf16.msra.mxu0 0
    %437 = vmatprep.subr.bf16.mxu0 0
    %438 = vmatpush1.bf16.msra.mxu0 0
    %439 = vmatprep.subr.bf16.mxu0 0
    %440 = vmatpush1.bf16.msra.mxu0 0
    %441 = vmatprep.subr.bf16.mxu0 0
    %442 = vmatpush1.bf16.msra.mxu0 0
    %443 = vmatprep.subr.bf16.mxu0 0
    %444 = vmatpush1.bf16.msra.mxu0 0
    %445 = vmatprep.subr.bf16.mxu0 0
    %446 = vmatpush1.bf16.msra.mxu0 0
    %447 = vmatprep.mubr.bf16.mxu0 0
    %448 = vmatmul.mubr.bf16.gmra.mrb[0].mxu0 %v253
    %v449 = vpop.f32.mrb[0].mxu0
    %v450 = vadd.f32 0.0, %v449
    %v451 = vpop.f32.mrb[0].mxu0
    %v452 = vadd.f32 0.0, %v451
    %v453 = vpop.f32.mrb[0].mxu0
    %v454 = vadd.f32 0.0, %v453
    %v455 = vpop.f32.mrb[0].mxu0
    %v456 = vadd.f32 0.0, %v455
    %457 = vmatprep.mubr.bf16.mxu0 0
    %458 = vmatmul.mubr.bf16.gmra.mrb[0].mxu0 %v254
    %v459 = vpop.f32.mrb[0].mxu0
    %v460 = vadd.f32 0.0, %v459
    %v461 = vpop.f32.mrb[0].mxu0
    %v462 = vadd.f32 0.0, %v461
    %v463 = vpop.f32.mrb[0].mxu0
    %v464 = vadd.f32 0.0, %v463
    %v465 = vpop.f32.mrb[0].mxu0
    %v466 = vadd.f32 0.0, %v465
    %467 = vdwg.mxu0
    %468 = vmatprep.subr.bf16.mxu0 0
    %469 = vmatpush1.bf16.msra.mxu0 %v369
    %470 = vmatprep.subr.bf16.mxu0 0
    %471 = vmatpush1.bf16.msra.mxu0 %v372
    %472 = vmatprep.subr.bf16.mxu0 0
    %473 = vmatpush1.bf16.msra.mxu0 %v375
    %474 = vmatprep.subr.bf16.mxu0 0
    %475 = vmatpush1.bf16.msra.mxu0 %v378
    %476 = vmatprep.subr.bf16.mxu0 0
    %477 = vmatpush1.bf16.msra.mxu0 %v381
    %478 = vmatprep.subr.bf16.mxu0 0
    %479 = vmatpush1.bf16.msra.mxu0 %v384
    %480 = vmatprep.subr.bf16.mxu0 0
    %481 = vmatpush1.bf16.msra.mxu0 %v387
    %482 = vmatprep.subr.bf16.mxu0 0
    %483 = vmatpush1.bf16.msra.mxu0 %v390
    %484 = vmatprep.subr.bf16.mxu0 0
    %485 = vmatpush1.bf16.msra.mxu0 0
    %486 = vmatprep.subr.bf16.mxu0 0
    %487 = vmatpush1.bf16.msra.mxu0 0
    %488 = vmatprep.subr.bf16.mxu0 0
    %489 = vmatpush1.bf16.msra.mxu0 0
    %490 = vmatprep.subr.bf16.mxu0 0
    %491 = vmatpush1.bf16.msra.mxu0 0
    %492 = vmatprep.subr.bf16.mxu0 0
    %493 = vmatpush1.bf16.msra.mxu0 0
    %494 = vmatprep.subr.bf16.mxu0 0
    %495 = vmatpush1.bf16.msra.mxu0 0
    %496 = vmatprep.subr.bf16.mxu0 0
    %497 = vmatpush1.bf16.msra.mxu0 0
    %498 = vmatprep.subr.bf16.mxu0 0
    %499 = vmatpush1.bf16.msra.mxu0 0
    %500 = vmatprep.mubr.bf16.mxu0 0
    %501 = vmatmul.mubr.bf16.gmra.mrb[0].mxu0 %v253
    %v502 = vpop.f32.mrb[0].mxu0
    %v503 = vadd.f32 0.0, %v502
    %v504 = vpop.f32.mrb[0].mxu0
    %v505 = vpop.f32.mrb[0].mxu0
    %v506 = vadd.f32 0.0, %v505
    %v507 = vpop.f32.mrb[0].mxu0
    %508 = vmatprep.mubr.bf16.mxu0 0
    %509 = vmatmul.mubr.bf16.gmra.mrb[0].mxu0 %v254
    %v510 = vpop.f32.mrb[0].mxu0
    %v511 = vadd.f32 0.0, %v510
    %v512 = vpop.f32.mrb[0].mxu0
    %v513 = vpop.f32.mrb[0].mxu0
    %v514 = vadd.f32 0.0, %v513
    %v515 = vpop.f32.mrb[0].mxu0
    %516 = vdwg.mxu0
    %v517 = vpack.c.bf16 %v454, %v450
    %v518 = vpack.c.bf16 %v456, %v452
    %v519 = vpack.c.bf16 %v506, %v503
    %v520 = vpack.c.bf16 %v464, %v460
    %v521 = vpack.c.bf16 %v466, %v462
    %v522 = vpack.c.bf16 %v514, %v511
    %v523 = vld [vmem:[#allocation2] sm:$0xf]
    %v524 = vld [vmem:[#allocation2 + $0x4] sm:$0xf]
    %v525 = vld [vmem:[#allocation2 + $0x8] sm:$0xf]
    %v526 = vld [vmem:[#allocation2 + $0xc] sm:$0xf]
    %v527 = vld [vmem:[#allocation2 + $0x10] sm:$0xf]
    %v528 = vld [vmem:[#allocation2 + $0x14] sm:$0xf]
    %v529 = vld [vmem:[#allocation2 + $0x18] sm:$0xf]
    %v530 = vld [vmem:[#allocation2 + $0x1c] sm:$0xf]
    %v531 = vld [vmem:[#allocation2 + $0x20] sm:$0xf]
    %v532 = vld [vmem:[#allocation2 + $0x24] sm:$0xf]
    %v533 = vld [vmem:[#allocation2 + $0x28] sm:$0xf]
    %v534 = vld [vmem:[#allocation2 + $0x2c] sm:$0xf]
    %v535 = vld [vmem:[#allocation2 + $0x30] sm:$0xf]
    %v536 = vld [vmem:[#allocation2 + $0x34] sm:$0xf]
    %v537 = vld [vmem:[#allocation2 + $0x38] sm:$0xf]
    %v538 = vld [vmem:[#allocation2 + $0x3c] sm:$0xf]
    %vm539 = vcmask 261120
    %v541 = vsel %vm539, %v517, 0
    %v544 = vsel %vm539, %v518, 0
    %546 = vmatprep.subr.bf16.mxu0 0
    %547 = vmatpush1.bf16.xpose.msra.mxu0 %v544
    %548 = vmatprep.subr.bf16.mxu0 0
    %549 = vmatpush1.bf16.xpose.msra.mxu0 0
    %550 = vmatprep.subr.bf16.mxu0 0
    %551 = vmatpush1.bf16.xpose.msra.mxu0 0
    %552 = vmatprep.subr.bf16.mxu0 0
    %553 = vmatpush1.bf16.xpose.msra.mxu0 0
    %554 = vmatprep.subr.bf16.mxu0 0
    %555 = vmatpush1.bf16.xpose.msra.mxu0 0
    %556 = vmatprep.subr.bf16.mxu0 0
    %557 = vmatpush1.bf16.xpose.msra.mxu0 0
    %558 = vmatprep.subr.bf16.mxu0 0
    %559 = vmatpush1.bf16.xpose.msra.mxu0 0
    %560 = vmatprep.subr.bf16.mxu0 0
    %561 = vmatpush1.bf16.xpose.msra.mxu0 0
    %562 = vmatprep.subr.bf16.mxu0 0
    %563 = vmatpush1.bf16.xpose.msra.mxu0 0
    %564 = vmatprep.subr.bf16.mxu0 0
    %565 = vmatpush1.bf16.xpose.msra.mxu0 0
    %566 = vmatprep.subr.bf16.mxu0 0
    %567 = vmatpush1.bf16.xpose.msra.mxu0 0
    %568 = vmatprep.subr.bf16.mxu0 0
    %569 = vmatpush1.bf16.xpose.msra.mxu0 0
    %570 = vmatprep.subr.bf16.mxu0 0
    %571 = vmatpush1.bf16.xpose.msra.mxu0 0
    %572 = vmatprep.subr.bf16.mxu0 0
    %573 = vmatpush1.bf16.xpose.msra.mxu0 0
    %574 = vmatprep.subr.bf16.mxu0 0
    %575 = vmatpush1.bf16.xpose.msra.mxu0 0
    %576 = vmatprep.subr.bf16.mxu0 0
    %577 = vmatpush1.bf16.xpose.msra.mxu0 0
    %578 = vmatprep.mubr.bf16.mxu0 0
    %579 = vmatmul.mubr.bf16.gmra.mrb[0].mxu0 %v541
    %v580 = vpop.f32.mrb[0].mxu0
    %v581 = vadd.f32 0.0, %v580
    %v582 = vpop.f32.mrb[0].mxu0
    %v583 = vpop.f32.mrb[0].mxu0
    %v584 = vadd.f32 0.0, %v583
    %v585 = vpop.f32.mrb[0].mxu0
    %586 = vdwg.mxu0
    %v588 = vsel %vm539, %v520, 0
    %v591 = vsel %vm539, %v521, 0
    %593 = vmatprep.subr.bf16.mxu0 0
    %594 = vmatpush1.bf16.xpose.msra.mxu0 %v591
    %595 = vmatprep.subr.bf16.mxu0 0
    %596 = vmatpush1.bf16.xpose.msra.mxu0 0
    %597 = vmatprep.subr.bf16.mxu0 0
    %598 = vmatpush1.bf16.xpose.msra.mxu0 0
    %599 = vmatprep.subr.bf16.mxu0 0
    %600 = vmatpush1.bf16.xpose.msra.mxu0 0
    %601 = vmatprep.subr.bf16.mxu0 0
    %602 = vmatpush1.bf16.xpose.msra.mxu0 0
    %603 = vmatprep.subr.bf16.mxu0 0
    %604 = vmatpush1.bf16.xpose.msra.mxu0 0
    %605 = vmatprep.subr.bf16.mxu0 0
    %606 = vmatpush1.bf16.xpose.msra.mxu0 0
    %607 = vmatprep.subr.bf16.mxu0 0
    %608 = vmatpush1.bf16.xpose.msra.mxu0 0
    %609 = vmatprep.subr.bf16.mxu0 0
    %610 = vmatpush1.bf16.xpose.msra.mxu0 0
    %611 = vmatprep.subr.bf16.mxu0 0
    %612 = vmatpush1.bf16.xpose.msra.mxu0 0
    %613 = vmatprep.subr.bf16.mxu0 0
    %614 = vmatpush1.bf16.xpose.msra.mxu0 0
    %615 = vmatprep.subr.bf16.mxu0 0
    %616 = vmatpush1.bf16.xpose.msra.mxu0 0
    %617 = vmatprep.subr.bf16.mxu0 0
    %618 = vmatpush1.bf16.xpose.msra.mxu0 0
    %619 = vmatprep.subr.bf16.mxu0 0
    %620 = vmatpush1.bf16.xpose.msra.mxu0 0
    %621 = vmatprep.subr.bf16.mxu0 0
    %622 = vmatpush1.bf16.xpose.msra.mxu0 0
    %623 = vmatprep.subr.bf16.mxu0 0
    %624 = vmatpush1.bf16.xpose.msra.mxu0 0
    %625 = vmatprep.mubr.bf16.mxu0 0
    %626 = vmatmul.mubr.bf16.gmra.mrb[0].mxu0 %v588
    %v627 = vpop.f32.mrb[0].mxu0
    %v628 = vadd.f32 0.0, %v627
    %v629 = vpop.f32.mrb[0].mxu0
    %v630 = vpop.f32.mrb[0].mxu0
    %v631 = vadd.f32 0.0, %v630
    %v632 = vpop.f32.mrb[0].mxu0
    %633 = vdwg.mxu0
    %v634 = vmul.f32 %v581, 0.17677669
    %v635 = vmul.f32 %v584, 0.17677669
    %v636 = vmul.f32 %v628, 0.17677669
    %v637 = vmul.f32 %v631, 0.17677669
    %v638 = vadd.f32 %v634, %v184
    %v639 = vadd.f32 %v635, %v185
    %v640 = vadd.f32 %v636, %v184
    %v641 = vadd.f32 %v637, %v185
    %vm642 = vcmask 130048
    %v643 = vsel %vm642, %v638, -inf
    %644 = vmax.xlane.f32.xlu0 %v643
    %v645 = vpop.xlane.xlu0 %644
    %v646 = vsel %vm642, %v639, -inf
    %647 = vmax.xlane.f32.xlu0 %v646
    %v648 = vpop.xlane.xlu0 %647
    %v649 = vsel %vm642, %v640, -inf
    %650 = vmax.xlane.f32.xlu0 %v649
    %v651 = vpop.xlane.xlu0 %650
    %v652 = vsel %vm642, %v641, -inf
    %653 = vmax.xlane.f32.xlu0 %v652
    %v654 = vpop.xlane.xlu0 %653
    %v655 = vsub.f32 %v638, %v645
    %v656 = vsub.f32 %v639, %v648
    %v657 = vsub.f32 %v640, %v651
    %v658 = vsub.f32 %v641, %v654
    %v659 = vmul.f32 %v655, 1.442695
    %v660 = vpow.pop %v659
    %v661 = vmul.f32 %v656, 1.442695
    %v662 = vpow.pop %v661
    %v663 = vmul.f32 %v657, 1.442695
    %v664 = vpow.pop %v663
    %v665 = vmul.f32 %v658, 1.442695
    %v666 = vpow.pop %v665
    %v667 = vsel %vm642, %v660, 0.0
    %668 = vadd.xlane.f32.xlu0 %v667
    %v669 = vpop.xlane.xlu0 %668
    %v670 = vsel %vm642, %v662, 0.0
    %671 = vadd.xlane.f32.xlu0 %v670
    %v672 = vpop.xlane.xlu0 %671
    %v673 = vsel %vm642, %v664, 0.0
    %674 = vadd.xlane.f32.xlu0 %v673
    %v675 = vpop.xlane.xlu0 %674
    %v676 = vsel %vm642, %v666, 0.0
    %677 = vadd.xlane.f32.xlu0 %v676
    %v678 = vpop.xlane.xlu0 %677
    %v679 = vrcp.pop %v669
    %v680 = vmul.f32 %v660, %v679
    %v681 = vrcp.pop %v672
    %v682 = vmul.f32 %v662, %v681
    %v683 = vrcp.pop %v675
    %v684 = vmul.f32 %v664, %v683
    %v685 = vrcp.pop %v678
    %v686 = vmul.f32 %v666, %v685
    %v687 = vpack.c.bf16 %v682, %v680
    %v688 = vpack.c.bf16 %v686, %v684
    %v690 = vsel %vm642, %v687, 0
    %692 = vmatprep.subr.bf16.mxu0 0
    %693 = vmatpush1.bf16.msra.mxu0 %v519
    %694 = vmatprep.subr.bf16.mxu0 0
    %695 = vmatpush1.bf16.msra.mxu0 0
    %696 = vmatprep.subr.bf16.mxu0 0
    %697 = vmatpush1.bf16.msra.mxu0 0
    %698 = vmatprep.subr.bf16.mxu0 0
    %699 = vmatpush1.bf16.msra.mxu0 0
    %700 = vmatprep.subr.bf16.mxu0 0
    %701 = vmatpush1.bf16.msra.mxu0 0
    %702 = vmatprep.subr.bf16.mxu0 0
    %703 = vmatpush1.bf16.msra.mxu0 0
    %704 = vmatprep.subr.bf16.mxu0 0
    %705 = vmatpush1.bf16.msra.mxu0 0
    %706 = vmatprep.subr.bf16.mxu0 0
    %707 = vmatpush1.bf16.msra.mxu0 0
    %708 = vmatprep.subr.bf16.mxu0 0
    %709 = vmatpush1.bf16.msra.mxu0 0
    %710 = vmatprep.subr.bf16.mxu0 0
    %711 = vmatpush1.bf16.msra.mxu0 0
    %712 = vmatprep.subr.bf16.mxu0 0
    %713 = vmatpush1.bf16.msra.mxu0 0
    %714 = vmatprep.subr.bf16.mxu0 0
    %715 = vmatpush1.bf16.msra.mxu0 0
    %716 = vmatprep.subr.bf16.mxu0 0
    %717 = vmatpush1.bf16.msra.mxu0 0
    %718 = vmatprep.subr.bf16.mxu0 0
    %719 = vmatpush1.bf16.msra.mxu0 0
    %720 = vmatprep.subr.bf16.mxu0 0
    %721 = vmatpush1.bf16.msra.mxu0 0
    %722 = vmatprep.subr.bf16.mxu0 0
    %723 = vmatpush1.bf16.msra.mxu0 0
    %724 = vmatprep.mubr.bf16.mxu0 0
    %725 = vmatmul.mubr.bf16.gmra.mrb[0].mxu0 %v690
    %v726 = vpop.f32.mrb[0].mxu0
    %v727 = vadd.f32 0.0, %v726
    %v728 = vpop.f32.mrb[0].mxu0
    %v729 = vpop.f32.mrb[0].mxu0
    %v730 = vadd.f32 0.0, %v729
    %v731 = vpop.f32.mrb[0].mxu0
    %732 = vdwg.mxu0
    %v734 = vsel %vm642, %v688, 0
    %736 = vmatprep.subr.bf16.mxu0 0
    %737 = vmatpush1.bf16.msra.mxu0 %v522
    %738 = vmatprep.subr.bf16.mxu0 0
    %739 = vmatpush1.bf16.msra.mxu0 0
    %740 = vmatprep.subr.bf16.mxu0 0
    %741 = vmatpush1.bf16.msra.mxu0 0
    %742 = vmatprep.subr.bf16.mxu0 0
    %743 = vmatpush1.bf16.msra.mxu0 0
    %744 = vmatprep.subr.bf16.mxu0 0
    %745 = vmatpush1.bf16.msra.mxu0 0
    %746 = vmatprep.subr.bf16.mxu0 0
    %747 = vmatpush1.bf16.msra.mxu0 0
    %748 = vmatprep.subr.bf16.mxu0 0
    %749 = vmatpush1.bf16.msra.mxu0 0
    %750 = vmatprep.subr.bf16.mxu0 0
    %751 = vmatpush1.bf16.msra.mxu0 0
    %752 = vmatprep.subr.bf16.mxu0 0
    %753 = vmatpush1.bf16.msra.mxu0 0
    %754 = vmatprep.subr.bf16.mxu0 0
    %755 = vmatpush1.bf16.msra.mxu0 0
    %756 = vmatprep.subr.bf16.mxu0 0
    %757 = vmatpush1.bf16.msra.mxu0 0
    %758 = vmatprep.subr.bf16.mxu0 0
    %759 = vmatpush1.bf16.msra.mxu0 0
    %760 = vmatprep.subr.bf16.mxu0 0
    %761 = vmatpush1.bf16.msra.mxu0 0
    %762 = vmatprep.subr.bf16.mxu0 0
    %763 = vmatpush1.bf16.msra.mxu0 0
    %764 = vmatprep.subr.bf16.mxu0 0
    %765 = vmatpush1.bf16.msra.mxu0 0
    %766 = vmatprep.subr.bf16.mxu0 0
    %767 = vmatpush1.bf16.msra.mxu0 0
    %768 = vmatprep.mubr.bf16.mxu0 0
    %769 = vmatmul.mubr.bf16.gmra.mrb[0].mxu0 %v734
    %v770 = vpop.f32.mrb[0].mxu0
    %v771 = vadd.f32 0.0, %v770
    %v772 = vpop.f32.mrb[0].mxu0
    %v773 = vpop.f32.mrb[0].mxu0
    %v774 = vadd.f32 0.0, %v773
    %v775 = vpop.f32.mrb[0].mxu0
    %776 = vdwg.mxu0
    %v777 = vpack.c.bf16 %v730, %v727
    %v778 = vpack.c.bf16 %v774, %v771
    %780 = vrot.lane.b32.xlu0 %v517, 96
    %v781 = vpop.permute.xlu0 %780
    %783 = vrot.lane.b32.xlu0 %v518, 96
    %v784 = vpop.permute.xlu0 %783
    %v786 = vsel %vm539, %v781, 0
    %v789 = vsel %vm539, %v784, 0
    %791 = vmatprep.subr.bf16.mxu0 0
    %792 = vmatpush1.bf16.xpose.msra.mxu0 %v789
    %793 = vmatprep.subr.bf16.mxu0 0
    %794 = vmatpush1.bf16.xpose.msra.mxu0 0
    %795 = vmatprep.subr.bf16.mxu0 0
    %796 = vmatpush1.bf16.xpose.msra.mxu0 0
    %797 = vmatprep.subr.bf16.mxu0 0
    %798 = vmatpush1.bf16.xpose.msra.mxu0 0
    %799 = vmatprep.subr.bf16.mxu0 0
    %800 = vmatpush1.bf16.xpose.msra.mxu0 0
    %801 = vmatprep.subr.bf16.mxu0 0
    %802 = vmatpush1.bf16.xpose.msra.mxu0 0
    %803 = vmatprep.subr.bf16.mxu0 0
    %804 = vmatpush1.bf16.xpose.msra.mxu0 0
    %805 = vmatprep.subr.bf16.mxu0 0
    %806 = vmatpush1.bf16.xpose.msra.mxu0 0
    %807 = vmatprep.subr.bf16.mxu0 0
    %808 = vmatpush1.bf16.xpose.msra.mxu0 0
    %809 = vmatprep.subr.bf16.mxu0 0
    %810 = vmatpush1.bf16.xpose.msra.mxu0 0
    %811 = vmatprep.subr.bf16.mxu0 0
    %812 = vmatpush1.bf16.xpose.msra.mxu0 0
    %813 = vmatprep.subr.bf16.mxu0 0
    %814 = vmatpush1.bf16.xpose.msra.mxu0 0
    %815 = vmatprep.subr.bf16.mxu0 0
    %816 = vmatpush1.bf16.xpose.msra.mxu0 0
    %817 = vmatprep.subr.bf16.mxu0 0
    %818 = vmatpush1.bf16.xpose.msra.mxu0 0
    %819 = vmatprep.subr.bf16.mxu0 0
    %820 = vmatpush1.bf16.xpose.msra.mxu0 0
    %821 = vmatprep.subr.bf16.mxu0 0
    %822 = vmatpush1.bf16.xpose.msra.mxu0 0
    %823 = vmatprep.mubr.bf16.mxu0 0
    %824 = vmatmul.mubr.bf16.gmra.mrb[0].mxu0 %v786
    %v825 = vpop.f32.mrb[0].mxu0
    %v826 = vadd.f32 0.0, %v825
    %v827 = vpop.f32.mrb[0].mxu0
    %v828 = vpop.f32.mrb[0].mxu0
    %v829 = vadd.f32 0.0, %v828
    %v830 = vpop.f32.mrb[0].mxu0
    %831 = vdwg.mxu0
    %833 = vrot.lane.b32.xlu0 %v520, 96
    %v834 = vpop.permute.xlu0 %833
    %836 = vrot.lane.b32.xlu0 %v521, 96
    %v837 = vpop.permute.xlu0 %836
    %v839 = vsel %vm539, %v834, 0
    %v842 = vsel %vm539, %v837, 0
    %844 = vmatprep.subr.bf16.mxu0 0
    %845 = vmatpush1.bf16.xpose.msra.mxu0 %v842
    %846 = vmatprep.subr.bf16.mxu0 0
    %847 = vmatpush1.bf16.xpose.msra.mxu0 0
    %848 = vmatprep.subr.bf16.mxu0 0
    %849 = vmatpush1.bf16.xpose.msra.mxu0 0
    %850 = vmatprep.subr.bf16.mxu0 0
    %851 = vmatpush1.bf16.xpose.msra.mxu0 0
    %852 = vmatprep.subr.bf16.mxu0 0
    %853 = vmatpush1.bf16.xpose.msra.mxu0 0
    %854 = vmatprep.subr.bf16.mxu0 0
    %855 = vmatpush1.bf16.xpose.msra.mxu0 0
    %856 = vmatprep.subr.bf16.mxu0 0
    %857 = vmatpush1.bf16.xpose.msra.mxu0 0
    %858 = vmatprep.subr.bf16.mxu0 0
    %859 = vmatpush1.bf16.xpose.msra.mxu0 0
    %860 = vmatprep.subr.bf16.mxu0 0
    %861 = vmatpush1.bf16.xpose.msra.mxu0 0
    %862 = vmatprep.subr.bf16.mxu0 0
    %863 = vmatpush1.bf16.xpose.msra.mxu0 0
    %864 = vmatprep.subr.bf16.mxu0 0
    %865 = vmatpush1.bf16.xpose.msra.mxu0 0
    %866 = vmatprep.subr.bf16.mxu0 0
    %867 = vmatpush1.bf16.xpose.msra.mxu0 0
    %868 = vmatprep.subr.bf16.mxu0 0
    %869 = vmatpush1.bf16.xpose.msra.mxu0 0
    %870 = vmatprep.subr.bf16.mxu0 0
    %871 = vmatpush1.bf16.xpose.msra.mxu0 0
    %872 = vmatprep.subr.bf16.mxu0 0
    %873 = vmatpush1.bf16.xpose.msra.mxu0 0
    %874 = vmatprep.subr.bf16.mxu0 0
    %875 = vmatpush1.bf16.xpose.msra.mxu0 0
    %876 = vmatprep.mubr.bf16.mxu0 0
    %877 = vmatmul.mubr.bf16.gmra.mrb[0].mxu0 %v839
    %v878 = vpop.f32.mrb[0].mxu0
    %v879 = vadd.f32 0.0, %v878
    %v880 = vpop.f32.mrb[0].mxu0
    %v881 = vpop.f32.mrb[0].mxu0
    %v882 = vadd.f32 0.0, %v881
    %v883 = vpop.f32.mrb[0].mxu0
    %884 = vdwg.mxu0
    %v885 = vmul.f32 %v826, 0.17677669
    %v886 = vmul.f32 %v829, 0.17677669
    %v887 = vmul.f32 %v879, 0.17677669
    %v888 = vmul.f32 %v882, 0.17677669
    %v889 = vadd.f32 %v885, %v184
    %v890 = vadd.f32 %v886, %v185
    %v891 = vadd.f32 %v887, %v184
    %v892 = vadd.f32 %v888, %v185
    %v893 = vsel %vm642, %v889, -inf
    %894 = vmax.xlane.f32.xlu0 %v893
    %v895 = vpop.xlane.xlu0 %894
    %v896 = vsel %vm642, %v890, -inf
    %897 = vmax.xlane.f32.xlu0 %v896
    %v898 = vpop.xlane.xlu0 %897
    %v899 = vsel %vm642, %v891, -inf
    %900 = vmax.xlane.f32.xlu0 %v899
    %v901 = vpop.xlane.xlu0 %900
    %v902 = vsel %vm642, %v892, -inf
    %903 = vmax.xlane.f32.xlu0 %v902
    %v904 = vpop.xlane.xlu0 %903
    %v905 = vsub.f32 %v889, %v895
    %v906 = vsub.f32 %v890, %v898
    %v907 = vsub.f32 %v891, %v901
    %v908 = vsub.f32 %v892, %v904
    %v909 = vmul.f32 %v905, 1.442695
    %v910 = vpow.pop %v909
    %v911 = vmul.f32 %v906, 1.442695
    %v912 = vpow.pop %v911
    %v913 = vmul.f32 %v907, 1.442695
    %v914 = vpow.pop %v913
    %v915 = vmul.f32 %v908, 1.442695
    %v916 = vpow.pop %v915
    %v917 = vsel %vm642, %v910, 0.0
    %918 = vadd.xlane.f32.xlu0 %v917
    %v919 = vpop.xlane.xlu0 %918
    %v920 = vsel %vm642, %v912, 0.0
    %921 = vadd.xlane.f32.xlu0 %v920
    %v922 = vpop.xlane.xlu0 %921
    %v923 = vsel %vm642, %v914, 0.0
    %924 = vadd.xlane.f32.xlu0 %v923
    %v925 = vpop.xlane.xlu0 %924
    %v926 = vsel %vm642, %v916, 0.0
    %927 = vadd.xlane.f32.xlu0 %v926
    %v928 = vpop.xlane.xlu0 %927
    %v929 = vrcp.pop %v919
    %v930 = vmul.f32 %v910, %v929
    %v931 = vrcp.pop %v922
    %v932 = vmul.f32 %v912, %v931
    %v933 = vrcp.pop %v925
    %v934 = vmul.f32 %v914, %v933
    %v935 = vrcp.pop %v928
    %v936 = vmul.f32 %v916, %v935
    %v937 = vpack.c.bf16 %v932, %v930
    %v938 = vpack.c.bf16 %v936, %v934
    %940 = vrot.lane.b32.xlu0 %v519, 96
    %v941 = vpop.permute.xlu0 %940
    %v944 = vsel %vm642, %v937, 0
    %946 = vmatprep.subr.bf16.mxu0 0
    %947 = vmatpush1.bf16.msra.mxu0 %v941
    %948 = vmatprep.subr.bf16.mxu0 0
    %949 = vmatpush1.bf16.msra.mxu0 0
    %950 = vmatprep.subr.bf16.mxu0 0
    %951 = vmatpush1.bf16.msra.mxu0 0
    %952 = vmatprep.subr.bf16.mxu0 0
    %953 = vmatpush1.bf16.msra.mxu0 0
    %954 = vmatprep.subr.bf16.mxu0 0
    %955 = vmatpush1.bf16.msra.mxu0 0
    %956 = vmatprep.subr.bf16.mxu0 0
    %957 = vmatpush1.bf16.msra.mxu0 0
    %958 = vmatprep.subr.bf16.mxu0 0
    %959 = vmatpush1.bf16.msra.mxu0 0
    %960 = vmatprep.subr.bf16.mxu0 0
    %961 = vmatpush1.bf16.msra.mxu0 0
    %962 = vmatprep.subr.bf16.mxu0 0
    %963 = vmatpush1.bf16.msra.mxu0 0
    %964 = vmatprep.subr.bf16.mxu0 0
    %965 = vmatpush1.bf16.msra.mxu0 0
    %966 = vmatprep.subr.bf16.mxu0 0
    %967 = vmatpush1.bf16.msra.mxu0 0
    %968 = vmatprep.subr.bf16.mxu0 0
    %969 = vmatpush1.bf16.msra.mxu0 0
    %970 = vmatprep.subr.bf16.mxu0 0
    %971 = vmatpush1.bf16.msra.mxu0 0
    %972 = vmatprep.subr.bf16.mxu0 0
    %973 = vmatpush1.bf16.msra.mxu0 0
    %974 = vmatprep.subr.bf16.mxu0 0
    %975 = vmatpush1.bf16.msra.mxu0 0
    %976 = vmatprep.subr.bf16.mxu0 0
    %977 = vmatpush1.bf16.msra.mxu0 0
    %978 = vmatprep.mubr.bf16.mxu0 0
    %979 = vmatmul.mubr.bf16.gmra.mrb[0].mxu0 %v944
    %v980 = vpop.f32.mrb[0].mxu0
    %v981 = vadd.f32 0.0, %v980
    %v982 = vpop.f32.mrb[0].mxu0
    %v983 = vpop.f32.mrb[0].mxu0
    %v984 = vadd.f32 0.0, %v983
    %v985 = vpop.f32.mrb[0].mxu0
    %986 = vdwg.mxu0
    %988 = vrot.lane.b32.xlu0 %v522, 96
    %v989 = vpop.permute.xlu0 %988
    %v992 = vsel %vm642, %v938, 0
    %994 = vmatprep.subr.bf16.mxu0 0
    %995 = vmatpush1.bf16.msra.mxu0 %v989
    %996 = vmatprep.subr.bf16.mxu0 0
    %997 = vmatpush1.bf16.msra.mxu0 0
    %998 = vmatprep.subr.bf16.mxu0 0
    %999 = vmatpush1.bf16.msra.mxu0 0
    %1000 = vmatprep.subr.bf16.mxu0 0
    %1001 = vmatpush1.bf16.msra.mxu0 0
    %1002 = vmatprep.subr.bf16.mxu0 0
    %1003 = vmatpush1.bf16.msra.mxu0 0
    %1004 = vmatprep.subr.bf16.mxu0 0
    %1005 = vmatpush1.bf16.msra.mxu0 0
    %1006 = vmatprep.subr.bf16.mxu0 0
    %1007 = vmatpush1.bf16.msra.mxu0 0
    %1008 = vmatprep.subr.bf16.mxu0 0
    %1009 = vmatpush1.bf16.msra.mxu0 0
    %1010 = vmatprep.subr.bf16.mxu0 0
    %1011 = vmatpush1.bf16.msra.mxu0 0
    %1012 = vmatprep.subr.bf16.mxu0 0
    %1013 = vmatpush1.bf16.msra.mxu0 0
    %1014 = vmatprep.subr.bf16.mxu0 0
    %1015 = vmatpush1.bf16.msra.mxu0 0
    %1016 = vmatprep.subr.bf16.mxu0 0
    %1017 = vmatpush1.bf16.msra.mxu0 0
    %1018 = vmatprep.subr.bf16.mxu0 0
    %1019 = vmatpush1.bf16.msra.mxu0 0
    %1020 = vmatprep.subr.bf16.mxu0 0
    %1021 = vmatpush1.bf16.msra.mxu0 0
    %1022 = vmatprep.subr.bf16.mxu0 0
    %1023 = vmatpush1.bf16.msra.mxu0 0
    %1024 = vmatprep.subr.bf16.mxu0 0
    %1025 = vmatpush1.bf16.msra.mxu0 0
    %1026 = vmatprep.mubr.bf16.mxu0 0
    %1027 = vmatmul.mubr.bf16.gmra.mrb[0].mxu0 %v992
    %v1028 = vpop.f32.mrb[0].mxu0
    %v1029 = vadd.f32 0.0, %v1028
    %v1030 = vpop.f32.mrb[0].mxu0
    %v1031 = vpop.f32.mrb[0].mxu0
    %v1032 = vadd.f32 0.0, %v1031
    %v1033 = vpop.f32.mrb[0].mxu0
    %1034 = vdwg.mxu0
    %v1035 = vpack.c.bf16 %v984, %v981
    %v1036 = vpack.c.bf16 %v1032, %v1029
    %v1041 = vunpack.c.l.b16 %v527
    %v1042 = vunpack.c.l.b16 %v528
    %v1043 = vunpack.c.l.b16 %v529
    %v1044 = vunpack.c.l.b16 %v530
    %v1045 = vpack.c.b16 %v1042, %v1041
    %v1046 = vpack.c.b16 %v1044, %v1043
    %v1050 = vsel %vm539, %v1035, 0
    %v1053 = vsel %vm539, %v1036, 0
    %1055 = vmatprep.subr.bf16.mxu0 0
    %1056 = vmatpush1.bf16.msra.mxu0 %v1045
    %1057 = vmatprep.subr.bf16.mxu0 0
    %1058 = vmatpush1.bf16.msra.mxu0 %v1046
    %1059 = vmatprep.subr.bf16.mxu0 0
    %1060 = vmatpush1.bf16.msra.mxu0 0
    %1061 = vmatprep.subr.bf16.mxu0 0
    %1062 = vmatpush1.bf16.msra.mxu0 0
    %1063 = vmatprep.subr.bf16.mxu0 0
    %1064 = vmatpush1.bf16.msra.mxu0 0
    %1065 = vmatprep.subr.bf16.mxu0 0
    %1066 = vmatpush1.bf16.msra.mxu0 0
    %1067 = vmatprep.subr.bf16.mxu0 0
    %1068 = vmatpush1.bf16.msra.mxu0 0
    %1069 = vmatprep.subr.bf16.mxu0 0
    %1070 = vmatpush1.bf16.msra.mxu0 0
    %1071 = vmatprep.subr.bf16.mxu0 0
    %1072 = vmatpush1.bf16.msra.mxu0 0
    %1073 = vmatprep.subr.bf16.mxu0 0
    %1074 = vmatpush1.bf16.msra.mxu0 0
    %1075 = vmatprep.subr.bf16.mxu0 0
    %1076 = vmatpush1.bf16.msra.mxu0 0
    %1077 = vmatprep.subr.bf16.mxu0 0
    %1078 = vmatpush1.bf16.msra.mxu0 0
    %1079 = vmatprep.subr.bf16.mxu0 0
    %1080 = vmatpush1.bf16.msra.mxu0 0
    %1081 = vmatprep.subr.bf16.mxu0 0
    %1082 = vmatpush1.bf16.msra.mxu0 0
    %1083 = vmatprep.subr.bf16.mxu0 0
    %1084 = vmatpush1.bf16.msra.mxu0 0
    %1085 = vmatprep.subr.bf16.mxu0 0
    %1086 = vmatpush1.bf16.msra.mxu0 0
    %1087 = vmatprep.mubr.bf16.mxu0 0
    %1088 = vmatmul.mubr.bf16.gmra.mrb[0].mxu0 %v1050
    %v1089 = vpop.f32.mrb[0].mxu0
    %v1090 = vadd.f32 0.0, %v1089
    %v1091 = vpop.f32.mrb[0].mxu0
    %v1092 = vpop.f32.mrb[0].mxu0
    %v1093 = vadd.f32 0.0, %v1092
    %v1094 = vpop.f32.mrb[0].mxu0
    %1095 = vmatprep.mubr.bf16.mxu0 0
    %1096 = vmatmul.mubr.bf16.gmra.mrb[0].mxu0 %v1053
    %v1097 = vpop.f32.mrb[0].mxu0
    %v1098 = vadd.f32 0.0, %v1097
    %v1099 = vpop.f32.mrb[0].mxu0
    %v1100 = vpop.f32.mrb[0].mxu0
    %v1101 = vadd.f32 0.0, %v1100
    %v1102 = vpop.f32.mrb[0].mxu0
    %1103 = vdwg.mxu0
    %v1108 = vunpack.c.l.b16 %v523
    %v1109 = vunpack.c.l.b16 %v524
    %v1110 = vunpack.c.l.b16 %v525
    %v1111 = vunpack.c.l.b16 %v526
    %v1112 = vpack.c.b16 %v1109, %v1108
    %v1113 = vpack.c.b16 %v1111, %v1110
    %v1117 = vsel %vm539, %v777, 0
    %v1120 = vsel %vm539, %v778, 0
    %1122 = vmatprep.subr.bf16.mxu0 0
    %1123 = vmatpush1.bf16.msra.mxu0 %v1112
    %1124 = vmatprep.subr.bf16.mxu0 0
    %1125 = vmatpush1.bf16.msra.mxu0 %v1113
    %1126 = vmatprep.subr.bf16.mxu0 0
    %1127 = vmatpush1.bf16.msra.mxu0 0
    %1128 = vmatprep.subr.bf16.mxu0 0
    %1129 = vmatpush1.bf16.msra.mxu0 0
    %1130 = vmatprep.subr.bf16.mxu0 0
    %1131 = vmatpush1.bf16.msra.mxu0 0
    %1132 = vmatprep.subr.bf16.mxu0 0
    %1133 = vmatpush1.bf16.msra.mxu0 0
    %1134 = vmatprep.subr.bf16.mxu0 0
    %1135 = vmatpush1.bf16.msra.mxu0 0
    %1136 = vmatprep.subr.bf16.mxu0 0
    %1137 = vmatpush1.bf16.msra.mxu0 0
    %1138 = vmatprep.subr.bf16.mxu0 0
    %1139 = vmatpush1.bf16.msra.mxu0 0
    %1140 = vmatprep.subr.bf16.mxu0 0
    %1141 = vmatpush1.bf16.msra.mxu0 0
    %1142 = vmatprep.subr.bf16.mxu0 0
    %1143 = vmatpush1.bf16.msra.mxu0 0
    %1144 = vmatprep.subr.bf16.mxu0 0
    %1145 = vmatpush1.bf16.msra.mxu0 0
    %1146 = vmatprep.subr.bf16.mxu0 0
    %1147 = vmatpush1.bf16.msra.mxu0 0
    %1148 = vmatprep.subr.bf16.mxu0 0
    %1149 = vmatpush1.bf16.msra.mxu0 0
    %1150 = vmatprep.subr.bf16.mxu0 0
    %1151 = vmatpush1.bf16.msra.mxu0 0
    %1152 = vmatprep.subr.bf16.mxu0 0
    %1153 = vmatpush1.bf16.msra.mxu0 0
    %1154 = vmatprep.mubr.bf16.mxu0 0
    %1155 = vmatmul.mubr.bf16.gmra.mrb[0].mxu0 %v1117
    %v1156 = vpop.f32.mrb[0].mxu0
    %v1157 = vadd.f32 %v1090, %v1156
    %v1158 = vpop.f32.mrb[0].mxu0
    %v1159 = vpop.f32.mrb[0].mxu0
    %v1160 = vadd.f32 %v1093, %v1159
    %v1161 = vpop.f32.mrb[0].mxu0
    %1162 = vmatprep.mubr.bf16.mxu0 0
    %1163 = vmatmul.mubr.bf16.gmra.mrb[0].mxu0 %v1120
    %v1164 = vpop.f32.mrb[0].mxu0
    %v1165 = vadd.f32 %v1098, %v1164
    %v1166 = vpop.f32.mrb[0].mxu0
    %v1167 = vpop.f32.mrb[0].mxu0
    %v1168 = vadd.f32 %v1101, %v1167
    %v1169 = vpop.f32.mrb[0].mxu0
    %1170 = vdwg.mxu0
    %1171 = vrot.lane.b32.xlu0 %v517, 64
    %v1172 = vpop.permute.xlu0 %1171
    %1173 = vrot.lane.b32.xlu0 %v518, 64
    %v1174 = vpop.permute.xlu0 %1173
    %v1176 = vsel %vm539, %v1172, 0
    %v1179 = vsel %vm539, %v1174, 0
    %1181 = vmatprep.subr.bf16.mxu0 0
    %1182 = vmatpush1.bf16.xpose.msra.mxu0 %v1179
    %1183 = vmatprep.subr.bf16.mxu0 0
    %1184 = vmatpush1.bf16.xpose.msra.mxu0 0
    %1185 = vmatprep.subr.bf16.mxu0 0
    %1186 = vmatpush1.bf16.xpose.msra.mxu0 0
    %1187 = vmatprep.subr.bf16.mxu0 0
    %1188 = vmatpush1.bf16.xpose.msra.mxu0 0
    %1189 = vmatprep.subr.bf16.mxu0 0
    %1190 = vmatpush1.bf16.xpose.msra.mxu0 0
    %1191 = vmatprep.subr.bf16.mxu0 0
    %1192 = vmatpush1.bf16.xpose.msra.mxu0 0
    %1193 = vmatprep.subr.bf16.mxu0 0
    %1194 = vmatpush1.bf16.xpose.msra.mxu0 0
    %1195 = vmatprep.subr.bf16.mxu0 0
    %1196 = vmatpush1.bf16.xpose.msra.mxu0 0
    %1197 = vmatprep.subr.bf16.mxu0 0
    %1198 = vmatpush1.bf16.xpose.msra.mxu0 0
    %1199 = vmatprep.subr.bf16.mxu0 0
    %1200 = vmatpush1.bf16.xpose.msra.mxu0 0
    %1201 = vmatprep.subr.bf16.mxu0 0
    %1202 = vmatpush1.bf16.xpose.msra.mxu0 0
    %1203 = vmatprep.subr.bf16.mxu0 0
    %1204 = vmatpush1.bf16.xpose.msra.mxu0 0
    %1205 = vmatprep.subr.bf16.mxu0 0
    %1206 = vmatpush1.bf16.xpose.msra.mxu0 0
    %1207 = vmatprep.subr.bf16.mxu0 0
    %1208 = vmatpush1.bf16.xpose.msra.mxu0 0
    %1209 = vmatprep.subr.bf16.mxu0 0
    %1210 = vmatpush1.bf16.xpose.msra.mxu0 0
    %1211 = vmatprep.subr.bf16.mxu0 0
    %1212 = vmatpush1.bf16.xpose.msra.mxu0 0
    %1213 = vmatprep.mubr.bf16.mxu0 0
    %1214 = vmatmul.mubr.bf16.gmra.mrb[0].mxu0 %v1176
    %v1215 = vpop.f32.mrb[0].mxu0
    %v1216 = vadd.f32 0.0, %v1215
    %v1217 = vpop.f32.mrb[0].mxu0
    %v1218 = vpop.f32.mrb[0].mxu0
    %v1219 = vadd.f32 0.0, %v1218
    %v1220 = vpop.f32.mrb[0].mxu0
    %1221 = vdwg.mxu0
    %1222 = vrot.lane.b32.xlu0 %v520, 64
    %v1223 = vpop.permute.xlu0 %1222
    %1224 = vrot.lane.b32.xlu0 %v521, 64
    %v1225 = vpop.permute.xlu0 %1224
    %v1227 = vsel %vm539, %v1223, 0
    %v1230 = vsel %vm539, %v1225, 0
    %1232 = vmatprep.subr.bf16.mxu0 0
    %1233 = vmatpush1.bf16.xpose.msra.mxu0 %v1230
    %1234 = vmatprep.subr.bf16.mxu0 0
    %1235 = vmatpush1.bf16.xpose.msra.mxu0 0
    %1236 = vmatprep.subr.bf16.mxu0 0
    %1237 = vmatpush1.bf16.xpose.msra.mxu0 0
    %1238 = vmatprep.subr.bf16.mxu0 0
    %1239 = vmatpush1.bf16.xpose.msra.mxu0 0
    %1240 = vmatprep.subr.bf16.mxu0 0
    %1241 = vmatpush1.bf16.xpose.msra.mxu0 0
    %1242 = vmatprep.subr.bf16.mxu0 0
    %1243 = vmatpush1.bf16.xpose.msra.mxu0 0
    %1244 = vmatprep.subr.bf16.mxu0 0
    %1245 = vmatpush1.bf16.xpose.msra.mxu0 0
    %1246 = vmatprep.subr.bf16.mxu0 0
    %1247 = vmatpush1.bf16.xpose.msra.mxu0 0
    %1248 = vmatprep.subr.bf16.mxu0 0
    %1249 = vmatpush1.bf16.xpose.msra.mxu0 0
    %1250 = vmatprep.subr.bf16.mxu0 0
    %1251 = vmatpush1.bf16.xpose.msra.mxu0 0
    %1252 = vmatprep.subr.bf16.mxu0 0
    %1253 = vmatpush1.bf16.xpose.msra.mxu0 0
    %1254 = vmatprep.subr.bf16.mxu0 0
    %1255 = vmatpush1.bf16.xpose.msra.mxu0 0
    %1256 = vmatprep.subr.bf16.mxu0 0
    %1257 = vmatpush1.bf16.xpose.msra.mxu0 0
    %1258 = vmatprep.subr.bf16.mxu0 0
    %1259 = vmatpush1.bf16.xpose.msra.mxu0 0
    %1260 = vmatprep.subr.bf16.mxu0 0
    %1261 = vmatpush1.bf16.xpose.msra.mxu0 0
    %1262 = vmatprep.subr.bf16.mxu0 0
    %1263 = vmatpush1.bf16.xpose.msra.mxu0 0
    %1264 = vmatprep.mubr.bf16.mxu0 0
    %1265 = vmatmul.mubr.bf16.gmra.mrb[0].mxu0 %v1227
    %v1266 = vpop.f32.mrb[0].mxu0
    %v1267 = vadd.f32 0.0, %v1266
    %v1268 = vpop.f32.mrb[0].mxu0
    %v1269 = vpop.f32.mrb[0].mxu0
    %v1270 = vadd.f32 0.0, %v1269
    %v1271 = vpop.f32.mrb[0].mxu0
    %1272 = vdwg.mxu0
    %v1273 = vmul.f32 %v1216, 0.17677669
    %v1274 = vmul.f32 %v1219, 0.17677669
    %v1275 = vmul.f32 %v1267, 0.17677669
    %v1276 = vmul.f32 %v1270, 0.17677669
    %v1277 = vadd.f32 %v1273, %v184
    %v1278 = vadd.f32 %v1274, %v185
    %v1279 = vadd.f32 %v1275, %v184
    %v1280 = vadd.f32 %v1276, %v185
    %v1281 = vsel %vm642, %v1277, -inf
    %1282 = vmax.xlane.f32.xlu0 %v1281
    %v1283 = vpop.xlane.xlu0 %1282
    %v1284 = vsel %vm642, %v1278, -inf
    %1285 = vmax.xlane.f32.xlu0 %v1284
    %v1286 = vpop.xlane.xlu0 %1285
    %v1287 = vsel %vm642, %v1279, -inf
    %1288 = vmax.xlane.f32.xlu0 %v1287
    %v1289 = vpop.xlane.xlu0 %1288
    %v1290 = vsel %vm642, %v1280, -inf
    %1291 = vmax.xlane.f32.xlu0 %v1290
    %v1292 = vpop.xlane.xlu0 %1291
    %v1293 = vsub.f32 %v1277, %v1283
    %v1294 = vsub.f32 %v1278, %v1286
    %v1295 = vsub.f32 %v1279, %v1289
    %v1296 = vsub.f32 %v1280, %v1292
    %v1297 = vmul.f32 %v1293, 1.442695
    %v1298 = vpow.pop %v1297
    %v1299 = vmul.f32 %v1294, 1.442695
    %v1300 = vpow.pop %v1299
    %v1301 = vmul.f32 %v1295, 1.442695
    %v1302 = vpow.pop %v1301
    %v1303 = vmul.f32 %v1296, 1.442695
    %v1304 = vpow.pop %v1303
    %v1305 = vsel %vm642, %v1298, 0.0
    %1306 = vadd.xlane.f32.xlu0 %v1305
    %v1307 = vpop.xlane.xlu0 %1306
    %v1308 = vsel %vm642, %v1300, 0.0
    %1309 = vadd.xlane.f32.xlu0 %v1308
    %v1310 = vpop.xlane.xlu0 %1309
    %v1311 = vsel %vm642, %v1302, 0.0
    %1312 = vadd.xlane.f32.xlu0 %v1311
    %v1313 = vpop.xlane.xlu0 %1312
    %v1314 = vsel %vm642, %v1304, 0.0
    %1315 = vadd.xlane.f32.xlu0 %v1314
    %v1316 = vpop.xlane.xlu0 %1315
    %v1317 = vrcp.pop %v1307
    %v1318 = vmul.f32 %v1298, %v1317
    %v1319 = vrcp.pop %v1310
    %v1320 = vmul.f32 %v1300, %v1319
    %v1321 = vrcp.pop %v1313
    %v1322 = vmul.f32 %v1302, %v1321
    %v1323 = vrcp.pop %v1316
    %v1324 = vmul.f32 %v1304, %v1323
    %v1325 = vpack.c.bf16 %v1320, %v1318
    %v1326 = vpack.c.bf16 %v1324, %v1322
    %1327 = vrot.lane.b32.xlu0 %v519, 64
    %v1328 = vpop.permute.xlu0 %1327
    %v1331 = vsel %vm642, %v1325, 0
    %1333 = vmatprep.subr.bf16.mxu0 0
    %1334 = vmatpush1.bf16.msra.mxu0 %v1328
    %1335 = vmatprep.subr.bf16.mxu0 0
    %1336 = vmatpush1.bf16.msra.mxu0 0
    %1337 = vmatprep.subr.bf16.mxu0 0
    %1338 = vmatpush1.bf16.msra.mxu0 0
    %1339 = vmatprep.subr.bf16.mxu0 0
    %1340 = vmatpush1.bf16.msra.mxu0 0
    %1341 = vmatprep.subr.bf16.mxu0 0
    %1342 = vmatpush1.bf16.msra.mxu0 0
    %1343 = vmatprep.subr.bf16.mxu0 0
    %1344 = vmatpush1.bf16.msra.mxu0 0
    %1345 = vmatprep.subr.bf16.mxu0 0
    %1346 = vmatpush1.bf16.msra.mxu0 0
    %1347 = vmatprep.subr.bf16.mxu0 0
    %1348 = vmatpush1.bf16.msra.mxu0 0
    %1349 = vmatprep.subr.bf16.mxu0 0
    %1350 = vmatpush1.bf16.msra.mxu0 0
    %1351 = vmatprep.subr.bf16.mxu0 0
    %1352 = vmatpush1.bf16.msra.mxu0 0
    %1353 = vmatprep.subr.bf16.mxu0 0
    %1354 = vmatpush1.bf16.msra.mxu0 0
    %1355 = vmatprep.subr.bf16.mxu0 0
    %1356 = vmatpush1.bf16.msra.mxu0 0
    %1357 = vmatprep.subr.bf16.mxu0 0
    %1358 = vmatpush1.bf16.msra.mxu0 0
    %1359 = vmatprep.subr.bf16.mxu0 0
    %1360 = vmatpush1.bf16.msra.mxu0 0
    %1361 = vmatprep.subr.bf16.mxu0 0
    %1362 = vmatpush1.bf16.msra.mxu0 0
    %1363 = vmatprep.subr.bf16.mxu0 0
    %1364 = vmatpush1.bf16.msra.mxu0 0
    %1365 = vmatprep.mubr.bf16.mxu0 0
    %1366 = vmatmul.mubr.bf16.gmra.mrb[0].mxu0 %v1331
    %v1367 = vpop.f32.mrb[0].mxu0
    %v1368 = vadd.f32 0.0, %v1367
    %v1369 = vpop.f32.mrb[0].mxu0
    %v1370 = vpop.f32.mrb[0].mxu0
    %v1371 = vadd.f32 0.0, %v1370
    %v1372 = vpop.f32.mrb[0].mxu0
    %1373 = vdwg.mxu0
    %1374 = vrot.lane.b32.xlu0 %v522, 64
    %v1375 = vpop.permute.xlu0 %1374
    %v1378 = vsel %vm642, %v1326, 0
    %1380 = vmatprep.subr.bf16.mxu0 0
    %1381 = vmatpush1.bf16.msra.mxu0 %v1375
    %1382 = vmatprep.subr.bf16.mxu0 0
    %1383 = vmatpush1.bf16.msra.mxu0 0
    %1384 = vmatprep.subr.bf16.mxu0 0
    %1385 = vmatpush1.bf16.msra.mxu0 0
    %1386 = vmatprep.subr.bf16.mxu0 0
    %1387 = vmatpush1.bf16.msra.mxu0 0
    %1388 = vmatprep.subr.bf16.mxu0 0
    %1389 = vmatpush1.bf16.msra.mxu0 0
    %1390 = vmatprep.subr.bf16.mxu0 0
    %1391 = vmatpush1.bf16.msra.mxu0 0
    %1392 = vmatprep.subr.bf16.mxu0 0
    %1393 = vmatpush1.bf16.msra.mxu0 0
    %1394 = vmatprep.subr.bf16.mxu0 0
    %1395 = vmatpush1.bf16.msra.mxu0 0
    %1396 = vmatprep.subr.bf16.mxu0 0
    %1397 = vmatpush1.bf16.msra.mxu0 0
    %1398 = vmatprep.subr.bf16.mxu0 0
    %1399 = vmatpush1.bf16.msra.mxu0 0
    %1400 = vmatprep.subr.bf16.mxu0 0
    %1401 = vmatpush1.bf16.msra.mxu0 0
    %1402 = vmatprep.subr.bf16.mxu0 0
    %1403 = vmatpush1.bf16.msra.mxu0 0
    %1404 = vmatprep.subr.bf16.mxu0 0
    %1405 = vmatpush1.bf16.msra.mxu0 0
    %1406 = vmatprep.subr.bf16.mxu0 0
    %1407 = vmatpush1.bf16.msra.mxu0 0
    %1408 = vmatprep.subr.bf16.mxu0 0
    %1409 = vmatpush1.bf16.msra.mxu0 0
    %1410 = vmatprep.subr.bf16.mxu0 0
    %1411 = vmatpush1.bf16.msra.mxu0 0
    %1412 = vmatprep.mubr.bf16.mxu0 0
    %1413 = vmatmul.mubr.bf16.gmra.mrb[0].mxu0 %v1378
    %v1414 = vpop.f32.mrb[0].mxu0
    %v1415 = vadd.f32 0.0, %v1414
    %v1416 = vpop.f32.mrb[0].mxu0
    %v1417 = vpop.f32.mrb[0].mxu0
    %v1418 = vadd.f32 0.0, %v1417
    %v1419 = vpop.f32.mrb[0].mxu0
    %1420 = vdwg.mxu0
    %v1421 = vpack.c.bf16 %v1371, %v1368
    %v1422 = vpack.c.bf16 %v1418, %v1415
    %v1427 = vunpack.c.l.b16 %v531
    %v1428 = vunpack.c.l.b16 %v532
    %v1429 = vunpack.c.l.b16 %v533
    %v1430 = vunpack.c.l.b16 %v534
    %v1431 = vpack.c.b16 %v1428, %v1427
    %v1432 = vpack.c.b16 %v1430, %v1429
    %v1436 = vsel %vm539, %v1421, 0
    %v1439 = vsel %vm539, %v1422, 0
    %1441 = vmatprep.subr.bf16.mxu0 0
    %1442 = vmatpush1.bf16.msra.mxu0 %v1431
    %1443 = vmatprep.subr.bf16.mxu0 0
    %1444 = vmatpush1.bf16.msra.mxu0 %v1432
    %1445 = vmatprep.subr.bf16.mxu0 0
    %1446 = vmatpush1.bf16.msra.mxu0 0
    %1447 = vmatprep.subr.bf16.mxu0 0
    %1448 = vmatpush1.bf16.msra.mxu0 0
    %1449 = vmatprep.subr.bf16.mxu0 0
    %1450 = vmatpush1.bf16.msra.mxu0 0
    %1451 = vmatprep.subr.bf16.mxu0 0
    %1452 = vmatpush1.bf16.msra.mxu0 0
    %1453 = vmatprep.subr.bf16.mxu0 0
    %1454 = vmatpush1.bf16.msra.mxu0 0
    %1455 = vmatprep.subr.bf16.mxu0 0
    %1456 = vmatpush1.bf16.msra.mxu0 0
    %1457 = vmatprep.subr.bf16.mxu0 0
    %1458 = vmatpush1.bf16.msra.mxu0 0
    %1459 = vmatprep.subr.bf16.mxu0 0
    %1460 = vmatpush1.bf16.msra.mxu0 0
    %1461 = vmatprep.subr.bf16.mxu0 0
    %1462 = vmatpush1.bf16.msra.mxu0 0
    %1463 = vmatprep.subr.bf16.mxu0 0
    %1464 = vmatpush1.bf16.msra.mxu0 0
    %1465 = vmatprep.subr.bf16.mxu0 0
    %1466 = vmatpush1.bf16.msra.mxu0 0
    %1467 = vmatprep.subr.bf16.mxu0 0
    %1468 = vmatpush1.bf16.msra.mxu0 0
    %1469 = vmatprep.subr.bf16.mxu0 0
    %1470 = vmatpush1.bf16.msra.mxu0 0
    %1471 = vmatprep.subr.bf16.mxu0 0
    %1472 = vmatpush1.bf16.msra.mxu0 0
    %1473 = vmatprep.mubr.bf16.mxu0 0
    %1474 = vmatmul.mubr.bf16.gmra.mrb[0].mxu0 %v1436
    %v1475 = vpop.f32.mrb[0].mxu0
    %v1476 = vadd.f32 0.0, %v1475
    %v1477 = vpop.f32.mrb[0].mxu0
    %v1478 = vpop.f32.mrb[0].mxu0
    %v1479 = vadd.f32 0.0, %v1478
    %v1480 = vpop.f32.mrb[0].mxu0
    %1481 = vmatprep.mubr.bf16.mxu0 0
    %1482 = vmatmul.mubr.bf16.gmra.mrb[0].mxu0 %v1439
    %v1483 = vpop.f32.mrb[0].mxu0
    %v1484 = vadd.f32 0.0, %v1483
    %v1485 = vpop.f32.mrb[0].mxu0
    %v1486 = vpop.f32.mrb[0].mxu0
    %v1487 = vadd.f32 0.0, %v1486
    %v1488 = vpop.f32.mrb[0].mxu0
    %1489 = vdwg.mxu0
    %v1490 = vadd.f32 %v1157, %v1476
    %v1491 = vadd.f32 %v1160, %v1479
    %v1492 = vadd.f32 %v1165, %v1484
    %v1493 = vadd.f32 %v1168, %v1487
    %1494 = vrot.lane.b32.xlu0 %v517, 32
    %v1495 = vpop.permute.xlu0 %1494
    %1496 = vrot.lane.b32.xlu0 %v518, 32
    %v1497 = vpop.permute.xlu0 %1496
    %v1499 = vsel %vm539, %v1495, 0
    %v1502 = vsel %vm539, %v1497, 0
    %1504 = vmatprep.subr.bf16.mxu0 0
    %1505 = vmatpush1.bf16.xpose.msra.mxu0 %v1502
    %1506 = vmatprep.subr.bf16.mxu0 0
    %1507 = vmatpush1.bf16.xpose.msra.mxu0 0
    %1508 = vmatprep.subr.bf16.mxu0 0
    %1509 = vmatpush1.bf16.xpose.msra.mxu0 0
    %1510 = vmatprep.subr.bf16.mxu0 0
    %1511 = vmatpush1.bf16.xpose.msra.mxu0 0
    %1512 = vmatprep.subr.bf16.mxu0 0
    %1513 = vmatpush1.bf16.xpose.msra.mxu0 0
    %1514 = vmatprep.subr.bf16.mxu0 0
    %1515 = vmatpush1.bf16.xpose.msra.mxu0 0
    %1516 = vmatprep.subr.bf16.mxu0 0
    %1517 = vmatpush1.bf16.xpose.msra.mxu0 0
    %1518 = vmatprep.subr.bf16.mxu0 0
    %1519 = vmatpush1.bf16.xpose.msra.mxu0 0
    %1520 = vmatprep.subr.bf16.mxu0 0
    %1521 = vmatpush1.bf16.xpose.msra.mxu0 0
    %1522 = vmatprep.subr.bf16.mxu0 0
    %1523 = vmatpush1.bf16.xpose.msra.mxu0 0
    %1524 = vmatprep.subr.bf16.mxu0 0
    %1525 = vmatpush1.bf16.xpose.msra.mxu0 0
    %1526 = vmatprep.subr.bf16.mxu0 0
    %1527 = vmatpush1.bf16.xpose.msra.mxu0 0
    %1528 = vmatprep.subr.bf16.mxu0 0
    %1529 = vmatpush1.bf16.xpose.msra.mxu0 0
    %1530 = vmatprep.subr.bf16.mxu0 0
    %1531 = vmatpush1.bf16.xpose.msra.mxu0 0
    %1532 = vmatprep.subr.bf16.mxu0 0
    %1533 = vmatpush1.bf16.xpose.msra.mxu0 0
    %1534 = vmatprep.subr.bf16.mxu0 0
    %1535 = vmatpush1.bf16.xpose.msra.mxu0 0
    %1536 = vmatprep.mubr.bf16.mxu0 0
    %1537 = vmatmul.mubr.bf16.gmra.mrb[0].mxu0 %v1499
    %v1538 = vpop.f32.mrb[0].mxu0
    %v1539 = vadd.f32 0.0, %v1538
    %v1540 = vpop.f32.mrb[0].mxu0
    %v1541 = vpop.f32.mrb[0].mxu0
    %v1542 = vadd.f32 0.0, %v1541
    %v1543 = vpop.f32.mrb[0].mxu0
    %1544 = vdwg.mxu0
    %1545 = vrot.lane.b32.xlu0 %v520, 32
    %v1546 = vpop.permute.xlu0 %1545
    %1547 = vrot.lane.b32.xlu0 %v521, 32
    %v1548 = vpop.permute.xlu0 %1547
    %v1550 = vsel %vm539, %v1546, 0
    %v1553 = vsel %vm539, %v1548, 0
    %1555 = vmatprep.subr.bf16.mxu0 0
    %1556 = vmatpush1.bf16.xpose.msra.mxu0 %v1553
    %1557 = vmatprep.subr.bf16.mxu0 0
    %1558 = vmatpush1.bf16.xpose.msra.mxu0 0
    %1559 = vmatprep.subr.bf16.mxu0 0
    %1560 = vmatpush1.bf16.xpose.msra.mxu0 0
    %1561 = vmatprep.subr.bf16.mxu0 0
    %1562 = vmatpush1.bf16.xpose.msra.mxu0 0
    %1563 = vmatprep.subr.bf16.mxu0 0
    %1564 = vmatpush1.bf16.xpose.msra.mxu0 0
    %1565 = vmatprep.subr.bf16.mxu0 0
    %1566 = vmatpush1.bf16.xpose.msra.mxu0 0
    %1567 = vmatprep.subr.bf16.mxu0 0
    %1568 = vmatpush1.bf16.xpose.msra.mxu0 0
    %1569 = vmatprep.subr.bf16.mxu0 0
    %1570 = vmatpush1.bf16.xpose.msra.mxu0 0
    %1571 = vmatprep.subr.bf16.mxu0 0
    %1572 = vmatpush1.bf16.xpose.msra.mxu0 0
    %1573 = vmatprep.subr.bf16.mxu0 0
    %1574 = vmatpush1.bf16.xpose.msra.mxu0 0
    %1575 = vmatprep.subr.bf16.mxu0 0
    %1576 = vmatpush1.bf16.xpose.msra.mxu0 0
    %1577 = vmatprep.subr.bf16.mxu0 0
    %1578 = vmatpush1.bf16.xpose.msra.mxu0 0
    %1579 = vmatprep.subr.bf16.mxu0 0
    %1580 = vmatpush1.bf16.xpose.msra.mxu0 0
    %1581 = vmatprep.subr.bf16.mxu0 0
    %1582 = vmatpush1.bf16.xpose.msra.mxu0 0
    %1583 = vmatprep.subr.bf16.mxu0 0
    %1584 = vmatpush1.bf16.xpose.msra.mxu0 0
    %1585 = vmatprep.subr.bf16.mxu0 0
    %1586 = vmatpush1.bf16.xpose.msra.mxu0 0
    %1587 = vmatprep.mubr.bf16.mxu0 0
    %1588 = vmatmul.mubr.bf16.gmra.mrb[0].mxu0 %v1550
    %v1589 = vpop.f32.mrb[0].mxu0
    %v1590 = vadd.f32 0.0, %v1589
    %v1591 = vpop.f32.mrb[0].mxu0
    %v1592 = vpop.f32.mrb[0].mxu0
    %v1593 = vadd.f32 0.0, %v1592
    %v1594 = vpop.f32.mrb[0].mxu0
    %1595 = vdwg.mxu0
    %v1596 = vmul.f32 %v1539, 0.17677669
    %v1597 = vmul.f32 %v1542, 0.17677669
    %v1598 = vmul.f32 %v1590, 0.17677669
    %v1599 = vmul.f32 %v1593, 0.17677669
    %v1600 = vadd.f32 %v1596, %v184
    %v1601 = vadd.f32 %v1597, %v185
    %v1602 = vadd.f32 %v1598, %v184
    %v1603 = vadd.f32 %v1599, %v185
    %v1604 = vsel %vm642, %v1600, -inf
    %1605 = vmax.xlane.f32.xlu0 %v1604
    %v1606 = vpop.xlane.xlu0 %1605
    %v1607 = vsel %vm642, %v1601, -inf
    %1608 = vmax.xlane.f32.xlu0 %v1607
    %v1609 = vpop.xlane.xlu0 %1608
    %v1610 = vsel %vm642, %v1602, -inf
    %1611 = vmax.xlane.f32.xlu0 %v1610
    %v1612 = vpop.xlane.xlu0 %1611
    %v1613 = vsel %vm642, %v1603, -inf
    %1614 = vmax.xlane.f32.xlu0 %v1613
    %v1615 = vpop.xlane.xlu0 %1614
    %v1616 = vsub.f32 %v1600, %v1606
    %v1617 = vsub.f32 %v1601, %v1609
    %v1618 = vsub.f32 %v1602, %v1612
    %v1619 = vsub.f32 %v1603, %v1615
    %v1620 = vmul.f32 %v1616, 1.442695
    %v1621 = vpow.pop %v1620
    %v1622 = vmul.f32 %v1617, 1.442695
    %v1623 = vpow.pop %v1622
    %v1624 = vmul.f32 %v1618, 1.442695
    %v1625 = vpow.pop %v1624
    %v1626 = vmul.f32 %v1619, 1.442695
    %v1627 = vpow.pop %v1626
    %v1628 = vsel %vm642, %v1621, 0.0
    %1629 = vadd.xlane.f32.xlu0 %v1628
    %v1630 = vpop.xlane.xlu0 %1629
    %v1631 = vsel %vm642, %v1623, 0.0
    %1632 = vadd.xlane.f32.xlu0 %v1631
    %v1633 = vpop.xlane.xlu0 %1632
    %v1634 = vsel %vm642, %v1625, 0.0
    %1635 = vadd.xlane.f32.xlu0 %v1634
    %v1636 = vpop.xlane.xlu0 %1635
    %v1637 = vsel %vm642, %v1627, 0.0
    %1638 = vadd.xlane.f32.xlu0 %v1637
    %v1639 = vpop.xlane.xlu0 %1638
    %v1640 = vrcp.pop %v1630
    %v1641 = vmul.f32 %v1621, %v1640
    %v1642 = vrcp.pop %v1633
    %v1643 = vmul.f32 %v1623, %v1642
    %v1644 = vrcp.pop %v1636
    %v1645 = vmul.f32 %v1625, %v1644
    %v1646 = vrcp.pop %v1639
    %v1647 = vmul.f32 %v1627, %v1646
    %v1648 = vpack.c.bf16 %v1643, %v1641
    %v1649 = vpack.c.bf16 %v1647, %v1645
    %1650 = vrot.lane.b32.xlu0 %v519, 32
    %v1651 = vpop.permute.xlu0 %1650
    %v1654 = vsel %vm642, %v1648, 0
    %1656 = vmatprep.subr.bf16.mxu0 0
    %1657 = vmatpush1.bf16.msra.mxu0 %v1651
    %1658 = vmatprep.subr.bf16.mxu0 0
    %1659 = vmatpush1.bf16.msra.mxu0 0
    %1660 = vmatprep.subr.bf16.mxu0 0
    %1661 = vmatpush1.bf16.msra.mxu0 0
    %1662 = vmatprep.subr.bf16.mxu0 0
    %1663 = vmatpush1.bf16.msra.mxu0 0
    %1664 = vmatprep.subr.bf16.mxu0 0
    %1665 = vmatpush1.bf16.msra.mxu0 0
    %1666 = vmatprep.subr.bf16.mxu0 0
    %1667 = vmatpush1.bf16.msra.mxu0 0
    %1668 = vmatprep.subr.bf16.mxu0 0
    %1669 = vmatpush1.bf16.msra.mxu0 0
    %1670 = vmatprep.subr.bf16.mxu0 0
    %1671 = vmatpush1.bf16.msra.mxu0 0
    %1672 = vmatprep.subr.bf16.mxu0 0
    %1673 = vmatpush1.bf16.msra.mxu0 0
    %1674 = vmatprep.subr.bf16.mxu0 0
    %1675 = vmatpush1.bf16.msra.mxu0 0
    %1676 = vmatprep.subr.bf16.mxu0 0
    %1677 = vmatpush1.bf16.msra.mxu0 0
    %1678 = vmatprep.subr.bf16.mxu0 0
    %1679 = vmatpush1.bf16.msra.mxu0 0
    %1680 = vmatprep.subr.bf16.mxu0 0
    %1681 = vmatpush1.bf16.msra.mxu0 0
    %1682 = vmatprep.subr.bf16.mxu0 0
    %1683 = vmatpush1.bf16.msra.mxu0 0
    %1684 = vmatprep.subr.bf16.mxu0 0
    %1685 = vmatpush1.bf16.msra.mxu0 0
    %1686 = vmatprep.subr.bf16.mxu0 0
    %1687 = vmatpush1.bf16.msra.mxu0 0
    %1688 = vmatprep.mubr.bf16.mxu0 0
    %1689 = vmatmul.mubr.bf16.gmra.mrb[0].mxu0 %v1654
    %v1690 = vpop.f32.mrb[0].mxu0
    %v1691 = vadd.f32 0.0, %v1690
    %v1692 = vpop.f32.mrb[0].mxu0
    %v1693 = vpop.f32.mrb[0].mxu0
    %v1694 = vadd.f32 0.0, %v1693
    %v1695 = vpop.f32.mrb[0].mxu0
    %1696 = vdwg.mxu0
    %1697 = vrot.lane.b32.xlu0 %v522, 32
    %v1698 = vpop.permute.xlu0 %1697
    %v1701 = vsel %vm642, %v1649, 0
    %1703 = vmatprep.subr.bf16.mxu0 0
    %1704 = vmatpush1.bf16.msra.mxu0 %v1698
    %1705 = vmatprep.subr.bf16.mxu0 0
    %1706 = vmatpush1.bf16.msra.mxu0 0
    %1707 = vmatprep.subr.bf16.mxu0 0
    %1708 = vmatpush1.bf16.msra.mxu0 0
    %1709 = vmatprep.subr.bf16.mxu0 0
    %1710 = vmatpush1.bf16.msra.mxu0 0
    %1711 = vmatprep.subr.bf16.mxu0 0
    %1712 = vmatpush1.bf16.msra.mxu0 0
    %1713 = vmatprep.subr.bf16.mxu0 0
    %1714 = vmatpush1.bf16.msra.mxu0 0
    %1715 = vmatprep.subr.bf16.mxu0 0
    %1716 = vmatpush1.bf16.msra.mxu0 0
    %1717 = vmatprep.subr.bf16.mxu0 0
    %1718 = vmatpush1.bf16.msra.mxu0 0
    %1719 = vmatprep.subr.bf16.mxu0 0
    %1720 = vmatpush1.bf16.msra.mxu0 0
    %1721 = vmatprep.subr.bf16.mxu0 0
    %1722 = vmatpush1.bf16.msra.mxu0 0
    %1723 = vmatprep.subr.bf16.mxu0 0
    %1724 = vmatpush1.bf16.msra.mxu0 0
    %1725 = vmatprep.subr.bf16.mxu0 0
    %1726 = vmatpush1.bf16.msra.mxu0 0
    %1727 = vmatprep.subr.bf16.mxu0 0
    %1728 = vmatpush1.bf16.msra.mxu0 0
    %1729 = vmatprep.subr.bf16.mxu0 0
    %1730 = vmatpush1.bf16.msra.mxu0 0
    %1731 = vmatprep.subr.bf16.mxu0 0
    %1732 = vmatpush1.bf16.msra.mxu0 0
    %1733 = vmatprep.subr.bf16.mxu0 0
    %1734 = vmatpush1.bf16.msra.mxu0 0
    %1735 = vmatprep.mubr.bf16.mxu0 0
    %1736 = vmatmul.mubr.bf16.gmra.mrb[0].mxu0 %v1701
    %v1737 = vpop.f32.mrb[0].mxu0
    %v1738 = vadd.f32 0.0, %v1737
    %v1739 = vpop.f32.mrb[0].mxu0
    %v1740 = vpop.f32.mrb[0].mxu0
    %v1741 = vadd.f32 0.0, %v1740
    %v1742 = vpop.f32.mrb[0].mxu0
    %1743 = vdwg.mxu0
    %v1744 = vpack.c.bf16 %v1694, %v1691
    %v1745 = vpack.c.bf16 %v1741, %v1738
    %v1750 = vunpack.c.l.b16 %v535
    %v1751 = vunpack.c.l.b16 %v536
    %v1752 = vunpack.c.l.b16 %v537
    %v1753 = vunpack.c.l.b16 %v538
    %v1754 = vpack.c.b16 %v1751, %v1750
    %v1755 = vpack.c.b16 %v1753, %v1752
    %v1759 = vsel %vm539, %v1744, 0
    %v1762 = vsel %vm539, %v1745, 0
    %1764 = vmatprep.subr.bf16.mxu0 0
    %1765 = vmatpush1.bf16.msra.mxu0 %v1754
    %1766 = vmatprep.subr.bf16.mxu0 0
    %1767 = vmatpush1.bf16.msra.mxu0 %v1755
    %1768 = vmatprep.subr.bf16.mxu0 0
    %1769 = vmatpush1.bf16.msra.mxu0 0
    %1770 = vmatprep.subr.bf16.mxu0 0
    %1771 = vmatpush1.bf16.msra.mxu0 0
    %1772 = vmatprep.subr.bf16.mxu0 0
    %1773 = vmatpush1.bf16.msra.mxu0 0
    %1774 = vmatprep.subr.bf16.mxu0 0
    %1775 = vmatpush1.bf16.msra.mxu0 0
    %1776 = vmatprep.subr.bf16.mxu0 0
    %1777 = vmatpush1.bf16.msra.mxu0 0
    %1778 = vmatprep.subr.bf16.mxu0 0
    %1779 = vmatpush1.bf16.msra.mxu0 0
    %1780 = vmatprep.subr.bf16.mxu0 0
    %1781 = vmatpush1.bf16.msra.mxu0 0
    %1782 = vmatprep.subr.bf16.mxu0 0
    %1783 = vmatpush1.bf16.msra.mxu0 0
    %1784 = vmatprep.subr.bf16.mxu0 0
    %1785 = vmatpush1.bf16.msra.mxu0 0
    %1786 = vmatprep.subr.bf16.mxu0 0
    %1787 = vmatpush1.bf16.msra.mxu0 0
    %1788 = vmatprep.subr.bf16.mxu0 0
    %1789 = vmatpush1.bf16.msra.mxu0 0
    %1790 = vmatprep.subr.bf16.mxu0 0
    %1791 = vmatpush1.bf16.msra.mxu0 0
    %1792 = vmatprep.subr.bf16.mxu0 0
    %1793 = vmatpush1.bf16.msra.mxu0 0
    %1794 = vmatprep.subr.bf16.mxu0 0
    %1795 = vmatpush1.bf16.msra.mxu0 0
    %1796 = vmatprep.mubr.bf16.mxu0 0
    %1797 = vmatmul.mubr.bf16.gmra.mrb[0].mxu0 %v1759
    %v1798 = vpop.f32.mrb[0].mxu0
    %v1799 = vadd.f32 0.0, %v1798
    %v1800 = vpop.f32.mrb[0].mxu0
    %v1801 = vpop.f32.mrb[0].mxu0
    %v1802 = vadd.f32 0.0, %v1801
    %v1803 = vpop.f32.mrb[0].mxu0
    %1804 = vmatprep.mubr.bf16.mxu0 0
    %1805 = vmatmul.mubr.bf16.gmra.mrb[0].mxu0 %v1762
    %v1806 = vpop.f32.mrb[0].mxu0
    %v1807 = vadd.f32 0.0, %v1806
    %v1808 = vpop.f32.mrb[0].mxu0
    %v1809 = vpop.f32.mrb[0].mxu0
    %v1810 = vadd.f32 0.0, %v1809
    %v1811 = vpop.f32.mrb[0].mxu0
    %1812 = vdwg.mxu0
    %v1813 = vadd.f32 %v1490, %v1799
    %v1814 = vadd.f32 %v1491, %v1802
    %v1815 = vadd.f32 %v1492, %v1807
    %v1816 = vadd.f32 %v1493, %v1810
    %v1817 = vadd.f32 %v173, %v1813
    %v1818 = vadd.f32 %v174, %v1814
    %v1819 = vadd.f32 %v175, %v1815
    %v1820 = vadd.f32 %v176, %v1816
    %v1821 = vld [vmem:[%s5] sm:$0x1]
    %v1823 = vlaneseq
    %v1824 = vshrl.u32 %v1823, 7
    %v1825 = vsub.s32 0, %v1824
    %v1826 = vrot.slane %v1821, %v1825
    %v1828 = vadd.f32 %v1817, %v1826
    %v1829 = vadd.f32 %v1818, %v1826
    %v1830 = vadd.f32 %v1819, %v1826
    %v1831 = vadd.f32 %v1820, %v1826
    %v1832 = vld [vmem:[#allocation5] sm:$0x1]
    %v1833 = vld [vmem:[#allocation7] sm:$0x1]
    %1834 = vadd.xlane.f32.xlu0 %v1828
    %v1835 = vpop.xlane.xlu0 %1834
    %1836 = vadd.xlane.f32.xlu0 %v1829
    %v1837 = vpop.xlane.xlu0 %1836
    %1838 = vadd.xlane.f32.xlu0 %v1830
    %v1839 = vpop.xlane.xlu0 %1838
    %1840 = vadd.xlane.f32.xlu0 %v1831
    %v1841 = vpop.xlane.xlu0 %1840
    %v1842 = vmul.f32 %v1835, %v196
    %v1843 = vmul.f32 %v1837, %v196
    %v1844 = vmul.f32 %v1839, %v196
    %v1845 = vmul.f32 %v1841, %v196
    %v1846 = vsub.f32 %v1828, %v1842
    %v1847 = vsub.f32 %v1829, %v1843
    %v1848 = vsub.f32 %v1830, %v1844
    %v1849 = vsub.f32 %v1831, %v1845
    %v1850 = vmul.f32 %v1846, %v1846
    %v1851 = vmul.f32 %v1847, %v1847
    %v1852 = vmul.f32 %v1848, %v1848
    %v1853 = vmul.f32 %v1849, %v1849
    %1854 = vadd.xlane.f32.xlu0 %v1850
    %v1855 = vpop.xlane.xlu0 %1854
    %1856 = vadd.xlane.f32.xlu0 %v1851
    %v1857 = vpop.xlane.xlu0 %1856
    %1858 = vadd.xlane.f32.xlu0 %v1852
    %v1859 = vpop.xlane.xlu0 %1858
    %1860 = vadd.xlane.f32.xlu0 %v1853
    %v1861 = vpop.xlane.xlu0 %1860
    %v1862 = vmul.f32 %v1855, %v196
    %v1863 = vmul.f32 %v1857, %v196
    %v1864 = vmul.f32 %v1859, %v196
    %v1865 = vmul.f32 %v1861, %v196
    %v1866 = vadd.f32 %v1862, 1e-05
    %v1867 = vadd.f32 %v1863, 1e-05
    %v1868 = vadd.f32 %v1864, 1e-05
    %v1869 = vadd.f32 %v1865, 1e-05
    %v1870 = vrsqrt.pop %v1866
    %v1871 = vrsqrt.pop %v1867
    %v1872 = vrsqrt.pop %v1868
    %v1873 = vrsqrt.pop %v1869
    %v1874 = vmul.f32 %v1846, %v1870
    %v1875 = vmul.f32 %v1847, %v1871
    %v1876 = vmul.f32 %v1848, %v1872
    %v1877 = vmul.f32 %v1849, %v1873
    %v1879 = vlaneseq
    %v1880 = vshrl.u32 %v1879, 7
    %v1881 = vsub.s32 0, %v1880
    %v1882 = vrot.slane %v1832, %v1881
    %v1884 = vmul.f32 %v1874, %v1882
    %v1885 = vmul.f32 %v1875, %v1882
    %v1886 = vmul.f32 %v1876, %v1882
    %v1887 = vmul.f32 %v1877, %v1882
    %v1889 = vlaneseq
    %v1890 = vshrl.u32 %v1889, 7
    %v1891 = vsub.s32 0, %v1890
    %v1892 = vrot.slane %v1833, %v1891
    %v1894 = vadd.f32 %v1884, %v1892
    %v1895 = vadd.f32 %v1885, %v1892
    %v1896 = vadd.f32 %v1886, %v1892
    %v1897 = vadd.f32 %v1887, %v1892
    %v1898 = vpack.c.bf16 %v1895, %v1894
    %v1899 = vpack.c.bf16 %v1897, %v1896
    %v1900 = vld [vmem:[#allocation8] sm:$0xff]
    %v1901 = vld [vmem:[#allocation8 + $0x8] sm:$0xff]
    %v1902 = vld [vmem:[#allocation8 + $0x10] sm:$0xff]
    %v1903 = vld [vmem:[#allocation8 + $0x18] sm:$0xff]
    %v1904 = vld [vmem:[#allocation8 + $0x20] sm:$0xff]
    %v1905 = vld [vmem:[#allocation8 + $0x28] sm:$0xff]
    %v1906 = vld [vmem:[#allocation8 + $0x30] sm:$0xff]
    %v1907 = vld [vmem:[#allocation8 + $0x38] sm:$0xff]
    %v1908 = vld [vmem:[#allocation8 + $0x40] sm:$0xff]
    %v1909 = vld [vmem:[#allocation8 + $0x48] sm:$0xff]
    %v1910 = vld [vmem:[#allocation8 + $0x50] sm:$0xff]
    %v1911 = vld [vmem:[#allocation8 + $0x58] sm:$0xff]
    %v1912 = vld [vmem:[#allocation8 + $0x60] sm:$0xff]
    %v1913 = vld [vmem:[#allocation8 + $0x68] sm:$0xff]
    %v1914 = vld [vmem:[#allocation8 + $0x70] sm:$0xff]
    %v1915 = vld [vmem:[#allocation8 + $0x78] sm:$0xff]
    %v1916 = vld [vmem:[#allocation8 + $0x80] sm:$0xff]
    %v1917 = vld [vmem:[#allocation8 + $0x88] sm:$0xff]
    %v1918 = vld [vmem:[#allocation8 + $0x90] sm:$0xff]
    %v1919 = vld [vmem:[#allocation8 + $0x98] sm:$0xff]
    %v1920 = vld [vmem:[#allocation8 + $0xa0] sm:$0xff]
    %v1921 = vld [vmem:[#allocation8 + $0xa8] sm:$0xff]
    %v1922 = vld [vmem:[#allocation8 + $0xb0] sm:$0xff]
    %v1923 = vld [vmem:[#allocation8 + $0xb8] sm:$0xff]
    %v1924 = vld [vmem:[#allocation8 + $0xc0] sm:$0xff]
    %v1925 = vld [vmem:[#allocation8 + $0xc8] sm:$0xff]
    %v1926 = vld [vmem:[#allocation8 + $0xd0] sm:$0xff]
    %v1927 = vld [vmem:[#allocation8 + $0xd8] sm:$0xff]
    %v1928 = vld [vmem:[#allocation8 + $0xe0] sm:$0xff]
    %v1929 = vld [vmem:[#allocation8 + $0xe8] sm:$0xff]
    %v1930 = vld [vmem:[#allocation8 + $0xf0] sm:$0xff]
    %v1931 = vld [vmem:[#allocation8 + $0xf8] sm:$0xff]
    %v1932 = vld [vmem:[#allocation10] sm:$0xf]
    %v1934 = vlaneseq
    %v1935 = vshrl.u32 %v1934, 7
    %v1936 = vsub.s32 0, %v1935
    %v1937 = vrot.slane %v1932, %v1936
    %v1938 = vlaneseq
    %v1939 = vshrl.u32 %v1938, 7
    %v1940 = vsub.s32 1, %v1939
    %v1941 = vrot.slane %v1932, %v1940
    %v1942 = vlaneseq
    %v1943 = vshrl.u32 %v1942, 7
    %v1944 = vsub.s32 2, %v1943
    %v1945 = vrot.slane %v1932, %v1944
    %v1946 = vlaneseq
    %v1947 = vshrl.u32 %v1946, 7
    %v1948 = vsub.s32 3, %v1947
    %v1949 = vrot.slane %v1932, %v1948
    %v1986 = vunpack.c.l.b16 %v1900
    %v1987 = vunpack.c.h.b16 %v1900
    %v1988 = vunpack.c.l.b16 %v1901
    %v1989 = vunpack.c.h.b16 %v1901
    %v1990 = vunpack.c.l.b16 %v1902
    %v1991 = vunpack.c.h.b16 %v1902
    %v1992 = vunpack.c.l.b16 %v1903
    %v1993 = vunpack.c.h.b16 %v1903
    %v1994 = vunpack.c.l.b16 %v1904
    %v1995 = vunpack.c.h.b16 %v1904
    %v1996 = vunpack.c.l.b16 %v1905
    %v1997 = vunpack.c.h.b16 %v1905
    %v1998 = vunpack.c.l.b16 %v1906
    %v1999 = vunpack.c.h.b16 %v1906
    %v2000 = vunpack.c.l.b16 %v1907
    %v2001 = vunpack.c.h.b16 %v1907
    %v2002 = vunpack.c.l.b16 %v1908
    %v2003 = vunpack.c.h.b16 %v1908
    %v2004 = vunpack.c.l.b16 %v1909
    %v2005 = vunpack.c.h.b16 %v1909
    %v2006 = vunpack.c.l.b16 %v1910
    %v2007 = vunpack.c.h.b16 %v1910
    %v2008 = vunpack.c.l.b16 %v1911
    %v2009 = vunpack.c.h.b16 %v1911
    %v2010 = vunpack.c.l.b16 %v1912
    %v2011 = vunpack.c.h.b16 %v1912
    %v2012 = vunpack.c.l.b16 %v1913
    %v2013 = vunpack.c.h.b16 %v1913
    %v2014 = vunpack.c.l.b16 %v1914
    %v2015 = vunpack.c.h.b16 %v1914
    %v2016 = vunpack.c.l.b16 %v1915
    %v2017 = vunpack.c.h.b16 %v1915
    %v2018 = vunpack.c.l.b16 %v1916
    %v2019 = vunpack.c.h.b16 %v1916
    %v2020 = vunpack.c.l.b16 %v1917
    %v2021 = vunpack.c.h.b16 %v1917
    %v2022 = vunpack.c.l.b16 %v1918
    %v2023 = vunpack.c.h.b16 %v1918
    %v2024 = vunpack.c.l.b16 %v1919
    %v2025 = vunpack.c.h.b16 %v1919
    %v2026 = vunpack.c.l.b16 %v1920
    %v2027 = vunpack.c.h.b16 %v1920
    %v2028 = vunpack.c.l.b16 %v1921
    %v2029 = vunpack.c.h.b16 %v1921
    %v2030 = vunpack.c.l.b16 %v1922
    %v2031 = vunpack.c.h.b16 %v1922
    %v2032 = vunpack.c.l.b16 %v1923
    %v2033 = vunpack.c.h.b16 %v1923
    %v2034 = vunpack.c.l.b16 %v1924
    %v2035 = vunpack.c.h.b16 %v1924
    %v2036 = vunpack.c.l.b16 %v1925
    %v2037 = vunpack.c.h.b16 %v1925
    %v2038 = vunpack.c.l.b16 %v1926
    %v2039 = vunpack.c.h.b16 %v1926
    %v2040 = vunpack.c.l.b16 %v1927
    %v2041 = vunpack.c.h.b16 %v1927
    %v2042 = vunpack.c.l.b16 %v1928
    %v2043 = vunpack.c.h.b16 %v1928
    %v2044 = vunpack.c.l.b16 %v1929
    %v2045 = vunpack.c.h.b16 %v1929
    %v2046 = vunpack.c.l.b16 %v1930
    %v2047 = vunpack.c.h.b16 %v1930
    %v2048 = vunpack.c.l.b16 %v1931
    %v2049 = vunpack.c.h.b16 %v1931
    %v2050 = vpack.c.b16 %v1990, %v1986
    %v2051 = vpack.c.b16 %v1991, %v1987
    %v2052 = vpack.c.b16 %v1992, %v1988
    %v2053 = vpack.c.b16 %v1993, %v1989
    %v2054 = vpack.c.b16 %v1998, %v1994
    %v2055 = vpack.c.b16 %v1999, %v1995
    %v2056 = vpack.c.b16 %v2000, %v1996
    %v2057 = vpack.c.b16 %v2001, %v1997
    %v2058 = vpack.c.b16 %v2006, %v2002
    %v2059 = vpack.c.b16 %v2007, %v2003
    %v2060 = vpack.c.b16 %v2008, %v2004
    %v2061 = vpack.c.b16 %v2009, %v2005
    %v2062 = vpack.c.b16 %v2014, %v2010
    %v2063 = vpack.c.b16 %v2015, %v2011
    %v2064 = vpack.c.b16 %v2016, %v2012
    %v2065 = vpack.c.b16 %v2017, %v2013
    %v2066 = vpack.c.b16 %v2022, %v2018
    %v2067 = vpack.c.b16 %v2023, %v2019
    %v2068 = vpack.c.b16 %v2024, %v2020
    %v2069 = vpack.c.b16 %v2025, %v2021
    %v2070 = vpack.c.b16 %v2030, %v2026
    %v2071 = vpack.c.b16 %v2031, %v2027
    %v2072 = vpack.c.b16 %v2032, %v2028
    %v2073 = vpack.c.b16 %v2033, %v2029
    %v2074 = vpack.c.b16 %v2038, %v2034
    %v2075 = vpack.c.b16 %v2039, %v2035
    %v2076 = vpack.c.b16 %v2040, %v2036
    %v2077 = vpack.c.b16 %v2041, %v2037
    %v2078 = vpack.c.b16 %v2046, %v2042
    %v2079 = vpack.c.b16 %v2047, %v2043
    %v2080 = vpack.c.b16 %v2048, %v2044
    %v2081 = vpack.c.b16 %v2049, %v2045
    %2114 = vmatprep.subr.bf16.mxu0 %v2051
    %2115 = vmatpush1.bf16.msra.mxu0 %v2050
    %2116 = vmatprep.subr.bf16.mxu0 %v2055
    %2117 = vmatpush1.bf16.msra.mxu0 %v2054
    %2118 = vmatprep.subr.bf16.mxu0 %v2059
    %2119 = vmatpush1.bf16.msra.mxu0 %v2058
    %2120 = vmatprep.subr.bf16.mxu0 %v2063
    %2121 = vmatpush1.bf16.msra.mxu0 %v2062
    %2122 = vmatprep.subr.bf16.mxu0 %v2067
    %2123 = vmatpush1.bf16.msra.mxu0 %v2066
    %2124 = vmatprep.subr.bf16.mxu0 %v2071
    %2125 = vmatpush1.bf16.msra.mxu0 %v2070
    %2126 = vmatprep.subr.bf16.mxu0 %v2075
    %2127 = vmatpush1.bf16.msra.mxu0 %v2074
    %2128 = vmatprep.subr.bf16.mxu0 %v2079
    %2129 = vmatpush1.bf16.msra.mxu0 %v2078
    %2130 = vmatprep.subr.bf16.mxu0 0
    %2131 = vmatpush1.bf16.msra.mxu0 0
    %2132 = vmatprep.subr.bf16.mxu0 0
    %2133 = vmatpush1.bf16.msra.mxu0 0
    %2134 = vmatprep.subr.bf16.mxu0 0
    %2135 = vmatpush1.bf16.msra.mxu0 0
    %2136 = vmatprep.subr.bf16.mxu0 0
    %2137 = vmatpush1.bf16.msra.mxu0 0
    %2138 = vmatprep.subr.bf16.mxu0 0
    %2139 = vmatpush1.bf16.msra.mxu0 0
    %2140 = vmatprep.subr.bf16.mxu0 0
    %2141 = vmatpush1.bf16.msra.mxu0 0
    %2142 = vmatprep.subr.bf16.mxu0 0
    %2143 = vmatpush1.bf16.msra.mxu0 0
    %2144 = vmatprep.subr.bf16.mxu0 0
    %2145 = vmatpush1.bf16.msra.mxu0 0
    %2146 = vmatprep.mubr.bf16.mxu0 0
    %2147 = vmatmul.mubr.bf16.gmra.mrb[0].mxu0 %v1898
    %v2148 = vpop.f32.mrb[0].mxu0
    %v2149 = vadd.f32 %v1937, %v2148
    %v2150 = vpop.f32.mrb[0].mxu0
    %v2151 = vadd.f32 %v1941, %v2150
    %v2152 = vpop.f32.mrb[0].mxu0
    %v2153 = vadd.f32 %v1937, %v2152
    %v2154 = vpop.f32.mrb[0].mxu0
    %v2155 = vadd.f32 %v1941, %v2154
    %2156 = vmatprep.mubr.bf16.mxu0 0
    %2157 = vmatmul.mubr.bf16.gmra.mrb[0].mxu0 %v1899
    %v2158 = vpop.f32.mrb[0].mxu0
    %v2159 = vadd.f32 %v1937, %v2158
    %v2160 = vpop.f32.mrb[0].mxu0
    %v2161 = vadd.f32 %v1941, %v2160
    %v2162 = vpop.f32.mrb[0].mxu0
    %v2163 = vadd.f32 %v1937, %v2162
    %v2164 = vpop.f32.mrb[0].mxu0
    %v2165 = vadd.f32 %v1941, %v2164
    %2166 = vdwg.mxu0
    %2167 = vmatprep.subr.bf16.mxu0 %v2053
    %2168 = vmatpush1.bf16.msra.mxu0 %v2052
    %2169 = vmatprep.subr.bf16.mxu0 %v2057
    %2170 = vmatpush1.bf16.msra.mxu0 %v2056
    %2171 = vmatprep.subr.bf16.mxu0 %v2061
    %2172 = vmatpush1.bf16.msra.mxu0 %v2060
    %2173 = vmatprep.subr.bf16.mxu0 %v2065
    %2174 = vmatpush1.bf16.msra.mxu0 %v2064
    %2175 = vmatprep.subr.bf16.mxu0 %v2069
    %2176 = vmatpush1.bf16.msra.mxu0 %v2068
    %2177 = vmatprep.subr.bf16.mxu0 %v2073
    %2178 = vmatpush1.bf16.msra.mxu0 %v2072
    %2179 = vmatprep.subr.bf16.mxu0 %v2077
    %2180 = vmatpush1.bf16.msra.mxu0 %v2076
    %2181 = vmatprep.subr.bf16.mxu0 %v2081
    %2182 = vmatpush1.bf16.msra.mxu0 %v2080
    %2183 = vmatprep.subr.bf16.mxu0 0
    %2184 = vmatpush1.bf16.msra.mxu0 0
    %2185 = vmatprep.subr.bf16.mxu0 0
    %2186 = vmatpush1.bf16.msra.mxu0 0
    %2187 = vmatprep.subr.bf16.mxu0 0
    %2188 = vmatpush1.bf16.msra.mxu0 0
    %2189 = vmatprep.subr.bf16.mxu0 0
    %2190 = vmatpush1.bf16.msra.mxu0 0
    %2191 = vmatprep.subr.bf16.mxu0 0
    %2192 = vmatpush1.bf16.msra.mxu0 0
    %2193 = vmatprep.subr.bf16.mxu0 0
    %2194 = vmatpush1.bf16.msra.mxu0 0
    %2195 = vmatprep.subr.bf16.mxu0 0
    %2196 = vmatpush1.bf16.msra.mxu0 0
    %2197 = vmatprep.subr.bf16.mxu0 0
    %2198 = vmatpush1.bf16.msra.mxu0 0
    %2199 = vmatprep.mubr.bf16.mxu0 0
    %2200 = vmatmul.mubr.bf16.gmra.mrb[0].mxu0 %v1898
    %v2201 = vpop.f32.mrb[0].mxu0
    %v2202 = vadd.f32 %v1945, %v2201
    %v2203 = vpop.f32.mrb[0].mxu0
    %v2204 = vadd.f32 %v1949, %v2203
    %v2205 = vpop.f32.mrb[0].mxu0
    %v2206 = vadd.f32 %v1945, %v2205
    %v2207 = vpop.f32.mrb[0].mxu0
    %v2208 = vadd.f32 %v1949, %v2207
    %2209 = vmatprep.mubr.bf16.mxu0 0
    %2210 = vmatmul.mubr.bf16.gmra.mrb[0].mxu0 %v1899
    %v2211 = vpop.f32.mrb[0].mxu0
    %v2212 = vadd.f32 %v1945, %v2211
    %v2213 = vpop.f32.mrb[0].mxu0
    %v2214 = vadd.f32 %v1949, %v2213
    %v2215 = vpop.f32.mrb[0].mxu0
    %v2216 = vadd.f32 %v1945, %v2215
    %v2217 = vpop.f32.mrb[0].mxu0
    %v2218 = vadd.f32 %v1949, %v2217
    %2219 = vdwg.mxu0
    %v2220 = vmax.f32 %v2149, 0.0
    %v2221 = vmax.f32 %v2151, 0.0
    %v2222 = vmax.f32 %v2202, 0.0
    %v2223 = vmax.f32 %v2204, 0.0
    %v2224 = vmax.f32 %v2153, 0.0
    %v2225 = vmax.f32 %v2155, 0.0
    %v2226 = vmax.f32 %v2206, 0.0
    %v2227 = vmax.f32 %v2208, 0.0
    %v2228 = vmax.f32 %v2159, 0.0
    %v2229 = vmax.f32 %v2161, 0.0
    %v2230 = vmax.f32 %v2212, 0.0
    %v2231 = vmax.f32 %v2214, 0.0
    %v2232 = vmax.f32 %v2163, 0.0
    %v2233 = vmax.f32 %v2165, 0.0
    %v2234 = vmax.f32 %v2216, 0.0
    %v2235 = vmax.f32 %v2218, 0.0
    %v2236 = vpack.c.bf16 %v2224, %v2220
    %v2237 = vpack.c.bf16 %v2225, %v2221
    %v2238 = vpack.c.bf16 %v2226, %v2222
    %v2239 = vpack.c.bf16 %v2227, %v2223
    %v2240 = vpack.c.bf16 %v2232, %v2228
    %v2241 = vpack.c.bf16 %v2233, %v2229
    %v2242 = vpack.c.bf16 %v2234, %v2230
    %v2243 = vpack.c.bf16 %v2235, %v2231
    %v2244 = vld [vmem:[#allocation11] sm:$0xf]
    %v2245 = vld [vmem:[#allocation11 + $0x4] sm:$0xf]
    %v2246 = vld [vmem:[#allocation11 + $0x8] sm:$0xf]
    %v2247 = vld [vmem:[#allocation11 + $0xc] sm:$0xf]
    %v2248 = vld [vmem:[#allocation11 + $0x10] sm:$0xf]
    %v2249 = vld [vmem:[#allocation11 + $0x14] sm:$0xf]
    %v2250 = vld [vmem:[#allocation11 + $0x18] sm:$0xf]
    %v2251 = vld [vmem:[#allocation11 + $0x1c] sm:$0xf]
    %v2252 = vld [vmem:[#allocation11 + $0x20] sm:$0xf]
    %v2253 = vld [vmem:[#allocation11 + $0x24] sm:$0xf]
    %v2254 = vld [vmem:[#allocation11 + $0x28] sm:$0xf]
    %v2255 = vld [vmem:[#allocation11 + $0x2c] sm:$0xf]
    %v2256 = vld [vmem:[#allocation11 + $0x30] sm:$0xf]
    %v2257 = vld [vmem:[#allocation11 + $0x34] sm:$0xf]
    %v2258 = vld [vmem:[#allocation11 + $0x38] sm:$0xf]
    %v2259 = vld [vmem:[#allocation11 + $0x3c] sm:$0xf]
    %v2260 = vld [vmem:[#allocation11 + $0x40] sm:$0xf]
    %v2261 = vld [vmem:[#allocation11 + $0x44] sm:$0xf]
    %v2262 = vld [vmem:[#allocation11 + $0x48] sm:$0xf]
    %v2263 = vld [vmem:[#allocation11 + $0x4c] sm:$0xf]
    %v2264 = vld [vmem:[#allocation11 + $0x50] sm:$0xf]
    %v2265 = vld [vmem:[#allocation11 + $0x54] sm:$0xf]
    %v2266 = vld [vmem:[#allocation11 + $0x58] sm:$0xf]
    %v2267 = vld [vmem:[#allocation11 + $0x5c] sm:$0xf]
    %v2268 = vld [vmem:[#allocation11 + $0x60] sm:$0xf]
    %v2269 = vld [vmem:[#allocation11 + $0x64] sm:$0xf]
    %v2270 = vld [vmem:[#allocation11 + $0x68] sm:$0xf]
    %v2271 = vld [vmem:[#allocation11 + $0x6c] sm:$0xf]
    %v2272 = vld [vmem:[#allocation11 + $0x70] sm:$0xf]
    %v2273 = vld [vmem:[#allocation11 + $0x74] sm:$0xf]
    %v2274 = vld [vmem:[#allocation11 + $0x78] sm:$0xf]
    %v2275 = vld [vmem:[#allocation11 + $0x7c] sm:$0xf]
    %v2276 = vld [vmem:[#allocation11 + $0x80] sm:$0xf]
    %v2277 = vld [vmem:[#allocation11 + $0x84] sm:$0xf]
    %v2278 = vld [vmem:[#allocation11 + $0x88] sm:$0xf]
    %v2279 = vld [vmem:[#allocation11 + $0x8c] sm:$0xf]
    %v2280 = vld [vmem:[#allocation11 + $0x90] sm:$0xf]
    %v2281 = vld [vmem:[#allocation11 + $0x94] sm:$0xf]
    %v2282 = vld [vmem:[#allocation11 + $0x98] sm:$0xf]
    %v2283 = vld [vmem:[#allocation11 + $0x9c] sm:$0xf]
    %v2284 = vld [vmem:[#allocation11 + $0xa0] sm:$0xf]
    %v2285 = vld [vmem:[#allocation11 + $0xa4] sm:$0xf]
    %v2286 = vld [vmem:[#allocation11 + $0xa8] sm:$0xf]
    %v2287 = vld [vmem:[#allocation11 + $0xac] sm:$0xf]
    %v2288 = vld [vmem:[#allocation11 + $0xb0] sm:$0xf]
    %v2289 = vld [vmem:[#allocation11 + $0xb4] sm:$0xf]
    %v2290 = vld [vmem:[#allocation11 + $0xb8] sm:$0xf]
    %v2291 = vld [vmem:[#allocation11 + $0xbc] sm:$0xf]
    %v2292 = vld [vmem:[#allocation11 + $0xc0] sm:$0xf]
    %v2293 = vld [vmem:[#allocation11 + $0xc4] sm:$0xf]
    %v2294 = vld [vmem:[#allocation11 + $0xc8] sm:$0xf]
    %v2295 = vld [vmem:[#allocation11 + $0xcc] sm:$0xf]
    %v2296 = vld [vmem:[#allocation11 + $0xd0] sm:$0xf]
    %v2297 = vld [vmem:[#allocation11 + $0xd4] sm:$0xf]
    %v2298 = vld [vmem:[#allocation11 + $0xd8] sm:$0xf]
    %v2299 = vld [vmem:[#allocation11 + $0xdc] sm:$0xf]
    %v2300 = vld [vmem:[#allocation11 + $0xe0] sm:$0xf]
    %v2301 = vld [vmem:[#allocation11 + $0xe4] sm:$0xf]
    %v2302 = vld [vmem:[#allocation11 + $0xe8] sm:$0xf]
    %v2303 = vld [vmem:[#allocation11 + $0xec] sm:$0xf]
    %v2304 = vld [vmem:[#allocation11 + $0xf0] sm:$0xf]
    %v2305 = vld [vmem:[#allocation11 + $0xf4] sm:$0xf]
    %v2306 = vld [vmem:[#allocation11 + $0xf8] sm:$0xf]
    %v2307 = vld [vmem:[#allocation11 + $0xfc] sm:$0xf]
    %v2308 = vld [vmem:[#allocation13] sm:$0x1]
    %v2310 = vlaneseq
    %v2311 = vshrl.u32 %v2310, 7
    %v2312 = vsub.s32 0, %v2311
    %v2313 = vrot.slane %v2308, %v2312
    %v2379 = vunpack.c.l.b16 %v2244
    %v2380 = vunpack.c.l.b16 %v2245
    %v2381 = vunpack.c.l.b16 %v2246
    %v2382 = vunpack.c.l.b16 %v2247
    %v2383 = vunpack.c.l.b16 %v2248
    %v2384 = vunpack.c.l.b16 %v2249
    %v2385 = vunpack.c.l.b16 %v2250
    %v2386 = vunpack.c.l.b16 %v2251
    %v2387 = vunpack.c.l.b16 %v2252
    %v2388 = vunpack.c.l.b16 %v2253
    %v2389 = vunpack.c.l.b16 %v2254
    %v2390 = vunpack.c.l.b16 %v2255
    %v2391 = vunpack.c.l.b16 %v2256
    %v2392 = vunpack.c.l.b16 %v2257
    %v2393 = vunpack.c.l.b16 %v2258
    %v2394 = vunpack.c.l.b16 %v2259
    %v2395 = vunpack.c.l.b16 %v2260
    %v2396 = vunpack.c.l.b16 %v2261
    %v2397 = vunpack.c.l.b16 %v2262
    %v2398 = vunpack.c.l.b16 %v2263
    %v2399 = vunpack.c.l.b16 %v2264
    %v2400 = vunpack.c.l.b16 %v2265
    %v2401 = vunpack.c.l.b16 %v2266
    %v2402 = vunpack.c.l.b16 %v2267
    %v2403 = vunpack.c.l.b16 %v2268
    %v2404 = vunpack.c.l.b16 %v2269
    %v2405 = vunpack.c.l.b16 %v2270
    %v2406 = vunpack.c.l.b16 %v2271
    %v2407 = vunpack.c.l.b16 %v2272
    %v2408 = vunpack.c.l.b16 %v2273
    %v2409 = vunpack.c.l.b16 %v2274
    %v2410 = vunpack.c.l.b16 %v2275
    %v2411 = vunpack.c.l.b16 %v2276
    %v2412 = vunpack.c.l.b16 %v2277
    %v2413 = vunpack.c.l.b16 %v2278
    %v2414 = vunpack.c.l.b16 %v2279
    %v2415 = vunpack.c.l.b16 %v2280
    %v2416 = vunpack.c.l.b16 %v2281
    %v2417 = vunpack.c.l.b16 %v2282
    %v2418 = vunpack.c.l.b16 %v2283
    %v2419 = vunpack.c.l.b16 %v2284
    %v2420 = vunpack.c.l.b16 %v2285
    %v2421 = vunpack.c.l.b16 %v2286
    %v2422 = vunpack.c.l.b16 %v2287
    %v2423 = vunpack.c.l.b16 %v2288
    %v2424 = vunpack.c.l.b16 %v2289
    %v2425 = vunpack.c.l.b16 %v2290
    %v2426 = vunpack.c.l.b16 %v2291
    %v2427 = vunpack.c.l.b16 %v2292
    %v2428 = vunpack.c.l.b16 %v2293
    %v2429 = vunpack.c.l.b16 %v2294
    %v2430 = vunpack.c.l.b16 %v2295
    %v2431 = vunpack.c.l.b16 %v2296
    %v2432 = vunpack.c.l.b16 %v2297
    %v2433 = vunpack.c.l.b16 %v2298
    %v2434 = vunpack.c.l.b16 %v2299
    %v2435 = vunpack.c.l.b16 %v2300
    %v2436 = vunpack.c.l.b16 %v2301
    %v2437 = vunpack.c.l.b16 %v2302
    %v2438 = vunpack.c.l.b16 %v2303
    %v2439 = vunpack.c.l.b16 %v2304
    %v2440 = vunpack.c.l.b16 %v2305
    %v2441 = vunpack.c.l.b16 %v2306
    %v2442 = vunpack.c.l.b16 %v2307
    %v2443 = vpack.c.b16 %v2380, %v2379
    %v2444 = vpack.c.b16 %v2382, %v2381
    %v2445 = vpack.c.b16 %v2384, %v2383
    %v2446 = vpack.c.b16 %v2386, %v2385
    %v2447 = vpack.c.b16 %v2388, %v2387
    %v2448 = vpack.c.b16 %v2390, %v2389
    %v2449 = vpack.c.b16 %v2392, %v2391
    %v2450 = vpack.c.b16 %v2394, %v2393
    %v2451 = vpack.c.b16 %v2396, %v2395
    %v2452 = vpack.c.b16 %v2398, %v2397
    %v2453 = vpack.c.b16 %v2400, %v2399
    %v2454 = vpack.c.b16 %v2402, %v2401
    %v2455 = vpack.c.b16 %v2404, %v2403
    %v2456 = vpack.c.b16 %v2406, %v2405
    %v2457 = vpack.c.b16 %v2408, %v2407
    %v2458 = vpack.c.b16 %v2410, %v2409
    %v2459 = vpack.c.b16 %v2412, %v2411
    %v2460 = vpack.c.b16 %v2414, %v2413
    %v2461 = vpack.c.b16 %v2416, %v2415
    %v2462 = vpack.c.b16 %v2418, %v2417
    %v2463 = vpack.c.b16 %v2420, %v2419
    %v2464 = vpack.c.b16 %v2422, %v2421
    %v2465 = vpack.c.b16 %v2424, %v2423
    %v2466 = vpack.c.b16 %v2426, %v2425
    %v2467 = vpack.c.b16 %v2428, %v2427
    %v2468 = vpack.c.b16 %v2430, %v2429
    %v2469 = vpack.c.b16 %v2432, %v2431
    %v2470 = vpack.c.b16 %v2434, %v2433
    %v2471 = vpack.c.b16 %v2436, %v2435
    %v2472 = vpack.c.b16 %v2438, %v2437
    %v2473 = vpack.c.b16 %v2440, %v2439
    %v2474 = vpack.c.b16 %v2442, %v2441
    %2507 = vmatprep.subr.bf16.mxu0 0
    %2508 = vmatpush1.bf16.msra.mxu0 %v2443
    %2509 = vmatprep.subr.bf16.mxu0 0
    %2510 = vmatpush1.bf16.msra.mxu0 %v2444
    %2511 = vmatprep.subr.bf16.mxu0 0
    %2512 = vmatpush1.bf16.msra.mxu0 %v2445
    %2513 = vmatprep.subr.bf16.mxu0 0
    %2514 = vmatpush1.bf16.msra.mxu0 %v2446
    %2515 = vmatprep.subr.bf16.mxu0 0
    %2516 = vmatpush1.bf16.msra.mxu0 %v2447
    %2517 = vmatprep.subr.bf16.mxu0 0
    %2518 = vmatpush1.bf16.msra.mxu0 %v2448
    %2519 = vmatprep.subr.bf16.mxu0 0
    %2520 = vmatpush1.bf16.msra.mxu0 %v2449
    %2521 = vmatprep.subr.bf16.mxu0 0
    %2522 = vmatpush1.bf16.msra.mxu0 %v2450
    %2523 = vmatprep.subr.bf16.mxu0 0
    %2524 = vmatpush1.bf16.msra.mxu0 %v2451
    %2525 = vmatprep.subr.bf16.mxu0 0
    %2526 = vmatpush1.bf16.msra.mxu0 %v2452
    %2527 = vmatprep.subr.bf16.mxu0 0
    %2528 = vmatpush1.bf16.msra.mxu0 %v2453
    %2529 = vmatprep.subr.bf16.mxu0 0
    %2530 = vmatpush1.bf16.msra.mxu0 %v2454
    %2531 = vmatprep.subr.bf16.mxu0 0
    %2532 = vmatpush1.bf16.msra.mxu0 %v2455
    %2533 = vmatprep.subr.bf16.mxu0 0
    %2534 = vmatpush1.bf16.msra.mxu0 %v2456
    %2535 = vmatprep.subr.bf16.mxu0 0
    %2536 = vmatpush1.bf16.msra.mxu0 %v2457
    %2537 = vmatprep.subr.bf16.mxu0 0
    %2538 = vmatpush1.bf16.msra.mxu0 %v2458
    %2539 = vmatprep.mubr.bf16.mxu0 %v2237
    %2540 = vmatmul.mubr.bf16.gmra.mrb[0].mxu0 %v2236
    %v2541 = vpop.f32.mrb[0].mxu0
    %v2542 = vadd.f32 %v2313, %v2541
    %v2543 = vpop.f32.mrb[0].mxu0
    %v2544 = vpop.f32.mrb[0].mxu0
    %v2545 = vadd.f32 %v2313, %v2544
    %v2546 = vpop.f32.mrb[0].mxu0
    %2547 = vmatprep.mubr.bf16.mxu0 %v2241
    %2548 = vmatmul.mubr.bf16.gmra.mrb[0].mxu0 %v2240
    %v2549 = vpop.f32.mrb[0].mxu0
    %v2550 = vadd.f32 %v2313, %v2549
    %v2551 = vpop.f32.mrb[0].mxu0
    %v2552 = vpop.f32.mrb[0].mxu0
    %v2553 = vadd.f32 %v2313, %v2552
    %v2554 = vpop.f32.mrb[0].mxu0
    %2555 = vdwg.mxu0
    %2556 = vmatprep.subr.bf16.mxu0 0
    %2557 = vmatpush1.bf16.msra.mxu0 %v2459
    %2558 = vmatprep.subr.bf16.mxu0 0
    %2559 = vmatpush1.bf16.msra.mxu0 %v2460
    %2560 = vmatprep.subr.bf16.mxu0 0
    %2561 = vmatpush1.bf16.msra.mxu0 %v2461
    %2562 = vmatprep.subr.bf16.mxu0 0
    %2563 = vmatpush1.bf16.msra.mxu0 %v2462
    %2564 = vmatprep.subr.bf16.mxu0 0
    %2565 = vmatpush1.bf16.msra.mxu0 %v2463
    %2566 = vmatprep.subr.bf16.mxu0 0
    %2567 = vmatpush1.bf16.msra.mxu0 %v2464
    %2568 = vmatprep.subr.bf16.mxu0 0
    %2569 = vmatpush1.bf16.msra.mxu0 %v2465
    %2570 = vmatprep.subr.bf16.mxu0 0
    %2571 = vmatpush1.bf16.msra.mxu0 %v2466
    %2572 = vmatprep.subr.bf16.mxu0 0
    %2573 = vmatpush1.bf16.msra.mxu0 %v2467
    %2574 = vmatprep.subr.bf16.mxu0 0
    %2575 = vmatpush1.bf16.msra.mxu0 %v2468
    %2576 = vmatprep.subr.bf16.mxu0 0
    %2577 = vmatpush1.bf16.msra.mxu0 %v2469
    %2578 = vmatprep.subr.bf16.mxu0 0
    %2579 = vmatpush1.bf16.msra.mxu0 %v2470
    %2580 = vmatprep.subr.bf16.mxu0 0
    %2581 = vmatpush1.bf16.msra.mxu0 %v2471
    %2582 = vmatprep.subr.bf16.mxu0 0
    %2583 = vmatpush1.bf16.msra.mxu0 %v2472
    %2584 = vmatprep.subr.bf16.mxu0 0
    %2585 = vmatpush1.bf16.msra.mxu0 %v2473
    %2586 = vmatprep.subr.bf16.mxu0 0
    %2587 = vmatpush1.bf16.msra.mxu0 %v2474
    %2588 = vmatprep.mubr.bf16.mxu0 %v2239
    %2589 = vmatmul.mubr.bf16.gmra.mrb[0].mxu0 %v2238
    %v2590 = vpop.f32.mrb[0].mxu0
    %v2591 = vadd.f32 %v2542, %v2590
    %v2592 = vpop.f32.mrb[0].mxu0
    %v2593 = vpop.f32.mrb[0].mxu0
    %v2594 = vadd.f32 %v2545, %v2593
    %v2595 = vpop.f32.mrb[0].mxu0
    %2596 = vmatprep.mubr.bf16.mxu0 %v2243
    %2597 = vmatmul.mubr.bf16.gmra.mrb[0].mxu0 %v2242
    %v2598 = vpop.f32.mrb[0].mxu0
    %v2599 = vadd.f32 %v2550, %v2598
    %v2600 = vpop.f32.mrb[0].mxu0
    %v2601 = vpop.f32.mrb[0].mxu0
    %v2602 = vadd.f32 %v2553, %v2601
    %v2603 = vpop.f32.mrb[0].mxu0
    %2604 = vdwg.mxu0
    %v2605 = vadd.f32 %v1828, %v2591
    %v2606 = vadd.f32 %v1829, %v2594
    %v2607 = vadd.f32 %v1830, %v2599
    %v2608 = vadd.f32 %v1831, %v2602
    %s2609 = scalar_lea.vmem %s1, 1
    %v2610 = vld [vmem:[%s2609] sm:$0x1]
    %s2611 = scalar_lea.vmem %s2, 1
    %v2612 = vld [vmem:[%s2611] sm:$0x1]
    %2613 = vadd.xlane.f32.xlu0 %v2605
    %v2614 = vpop.xlane.xlu0 %2613
    %2615 = vadd.xlane.f32.xlu0 %v2606
    %v2616 = vpop.xlane.xlu0 %2615
    %2617 = vadd.xlane.f32.xlu0 %v2607
    %v2618 = vpop.xlane.xlu0 %2617
    %2619 = vadd.xlane.f32.xlu0 %v2608
    %v2620 = vpop.xlane.xlu0 %2619
    %v2621 = vmul.f32 %v2614, %v196
    %v2622 = vmul.f32 %v2616, %v196
    %v2623 = vmul.f32 %v2618, %v196
    %v2624 = vmul.f32 %v2620, %v196
    %v2625 = vsub.f32 %v2605, %v2621
    %v2626 = vsub.f32 %v2606, %v2622
    %v2627 = vsub.f32 %v2607, %v2623
    %v2628 = vsub.f32 %v2608, %v2624
    %v2629 = vmul.f32 %v2625, %v2625
    %v2630 = vmul.f32 %v2626, %v2626
    %v2631 = vmul.f32 %v2627, %v2627
    %v2632 = vmul.f32 %v2628, %v2628
    %2633 = vadd.xlane.f32.xlu0 %v2629
    %v2634 = vpop.xlane.xlu0 %2633
    %2635 = vadd.xlane.f32.xlu0 %v2630
    %v2636 = vpop.xlane.xlu0 %2635
    %2637 = vadd.xlane.f32.xlu0 %v2631
    %v2638 = vpop.xlane.xlu0 %2637
    %2639 = vadd.xlane.f32.xlu0 %v2632
    %v2640 = vpop.xlane.xlu0 %2639
    %v2641 = vmul.f32 %v2634, %v196
    %v2642 = vmul.f32 %v2636, %v196
    %v2643 = vmul.f32 %v2638, %v196
    %v2644 = vmul.f32 %v2640, %v196
    %v2645 = vadd.f32 %v2641, 1e-05
    %v2646 = vadd.f32 %v2642, 1e-05
    %v2647 = vadd.f32 %v2643, 1e-05
    %v2648 = vadd.f32 %v2644, 1e-05
    %v2649 = vrsqrt.pop %v2645
    %v2650 = vrsqrt.pop %v2646
    %v2651 = vrsqrt.pop %v2647
    %v2652 = vrsqrt.pop %v2648
    %v2653 = vmul.f32 %v2625, %v2649
    %v2654 = vmul.f32 %v2626, %v2650
    %v2655 = vmul.f32 %v2627, %v2651
    %v2656 = vmul.f32 %v2628, %v2652
    %v2658 = vlaneseq
    %v2659 = vshrl.u32 %v2658, 7
    %v2660 = vsub.s32 0, %v2659
    %v2661 = vrot.slane %v2610, %v2660
    %v2663 = vmul.f32 %v2653, %v2661
    %v2664 = vmul.f32 %v2654, %v2661
    %v2665 = vmul.f32 %v2655, %v2661
    %v2666 = vmul.f32 %v2656, %v2661
    %v2668 = vlaneseq
    %v2669 = vshrl.u32 %v2668, 7
    %v2670 = vsub.s32 0, %v2669
    %v2671 = vrot.slane %v2612, %v2670
    %v2673 = vadd.f32 %v2663, %v2671
    %v2674 = vadd.f32 %v2664, %v2671
    %v2675 = vadd.f32 %v2665, %v2671
    %v2676 = vadd.f32 %v2666, %v2671
    %v2677 = vpack.c.bf16 %v2674, %v2673
    %v2678 = vpack.c.bf16 %v2676, %v2675
    %s2679 = scalar_lea.vmem %s3, 192
    %v2680 = vld [vmem:[%s2679] sm:$0xff]
    %v2681 = vld [vmem:[%s2679 + $0x8] sm:$0xf]
    %v2682 = vld [vmem:[%s2679 + $0xc] sm:$0xff]
    %v2683 = vld [vmem:[%s2679 + $0x14] sm:$0xf]
    %v2684 = vld [vmem:[%s2679 + $0x18] sm:$0xff]
    %v2685 = vld [vmem:[%s2679 + $0x20] sm:$0xf]
    %v2686 = vld [vmem:[%s2679 + $0x24] sm:$0xff]
    %v2687 = vld [vmem:[%s2679 + $0x2c] sm:$0xf]
    %v2688 = vld [vmem:[%s2679 + $0x30] sm:$0xff]
    %v2689 = vld [vmem:[%s2679 + $0x38] sm:$0xf]
    %v2690 = vld [vmem:[%s2679 + $0x3c] sm:$0xff]
    %v2691 = vld [vmem:[%s2679 + $0x44] sm:$0xf]
    %v2692 = vld [vmem:[%s2679 + $0x48] sm:$0xff]
    %v2693 = vld [vmem:[%s2679 + $0x50] sm:$0xf]
    %v2694 = vld [vmem:[%s2679 + $0x54] sm:$0xff]
    %v2695 = vld [vmem:[%s2679 + $0x5c] sm:$0xf]
    %v2696 = vld [vmem:[%s2679 + $0x60] sm:$0xff]
    %v2697 = vld [vmem:[%s2679 + $0x68] sm:$0xf]
    %v2698 = vld [vmem:[%s2679 + $0x6c] sm:$0xff]
    %v2699 = vld [vmem:[%s2679 + $0x74] sm:$0xf]
    %v2700 = vld [vmem:[%s2679 + $0x78] sm:$0xff]
    %v2701 = vld [vmem:[%s2679 + $0x80] sm:$0xf]
    %v2702 = vld [vmem:[%s2679 + $0x84] sm:$0xff]
    %v2703 = vld [vmem:[%s2679 + $0x8c] sm:$0xf]
    %v2704 = vld [vmem:[%s2679 + $0x90] sm:$0xff]
    %v2705 = vld [vmem:[%s2679 + $0x98] sm:$0xf]
    %v2706 = vld [vmem:[%s2679 + $0x9c] sm:$0xff]
    %v2707 = vld [vmem:[%s2679 + $0xa4] sm:$0xf]
    %v2708 = vld [vmem:[%s2679 + $0xa8] sm:$0xff]
    %v2709 = vld [vmem:[%s2679 + $0xb0] sm:$0xf]
    %v2710 = vld [vmem:[%s2679 + $0xb4] sm:$0xff]
    %v2711 = vld [vmem:[%s2679 + $0xbc] sm:$0xf]
    %v2744 = vunpack.c.l.b16 %v2680
    %v2745 = vunpack.c.h.b16 %v2680
    %v2746 = vunpack.c.l.b16 %v2681
    %v2747 = vunpack.c.l.b16 %v2682
    %v2748 = vunpack.c.h.b16 %v2682
    %v2749 = vunpack.c.l.b16 %v2683
    %v2750 = vunpack.c.l.b16 %v2684
    %v2751 = vunpack.c.h.b16 %v2684
    %v2752 = vunpack.c.l.b16 %v2685
    %v2753 = vunpack.c.l.b16 %v2686
    %v2754 = vunpack.c.h.b16 %v2686
    %v2755 = vunpack.c.l.b16 %v2687
    %v2756 = vunpack.c.l.b16 %v2688
    %v2757 = vunpack.c.h.b16 %v2688
    %v2758 = vunpack.c.l.b16 %v2689
    %v2759 = vunpack.c.l.b16 %v2690
    %v2760 = vunpack.c.h.b16 %v2690
    %v2761 = vunpack.c.l.b16 %v2691
    %v2762 = vunpack.c.l.b16 %v2692
    %v2763 = vunpack.c.h.b16 %v2692
    %v2764 = vunpack.c.l.b16 %v2693
    %v2765 = vunpack.c.l.b16 %v2694
    %v2766 = vunpack.c.h.b16 %v2694
    %v2767 = vunpack.c.l.b16 %v2695
    %v2768 = vunpack.c.l.b16 %v2696
    %v2769 = vunpack.c.h.b16 %v2696
    %v2770 = vunpack.c.l.b16 %v2697
    %v2771 = vunpack.c.l.b16 %v2698
    %v2772 = vunpack.c.h.b16 %v2698
    %v2773 = vunpack.c.l.b16 %v2699
    %v2774 = vunpack.c.l.b16 %v2700
    %v2775 = vunpack.c.h.b16 %v2700
    %v2776 = vunpack.c.l.b16 %v2701
    %v2777 = vunpack.c.l.b16 %v2702
    %v2778 = vunpack.c.h.b16 %v2702
    %v2779 = vunpack.c.l.b16 %v2703
    %v2780 = vunpack.c.l.b16 %v2704
    %v2781 = vunpack.c.h.b16 %v2704
    %v2782 = vunpack.c.l.b16 %v2705
    %v2783 = vunpack.c.l.b16 %v2706
    %v2784 = vunpack.c.h.b16 %v2706
    %v2785 = vunpack.c.l.b16 %v2707
    %v2786 = vunpack.c.l.b16 %v2708
    %v2787 = vunpack.c.h.b16 %v2708
    %v2788 = vunpack.c.l.b16 %v2709
    %v2789 = vunpack.c.l.b16 %v2710
    %v2790 = vunpack.c.h.b16 %v2710
    %v2791 = vunpack.c.l.b16 %v2711
    %v2792 = vpack.c.b16 %v2747, %v2744
    %v2793 = vpack.c.b16 %v2748, %v2745
    %v2794 = vpack.c.b16 %v2749, %v2746
    %v2795 = vpack.c.b16 %v2753, %v2750
    %v2796 = vpack.c.b16 %v2754, %v2751
    %v2797 = vpack.c.b16 %v2755, %v2752
    %v2798 = vpack.c.b16 %v2759, %v2756
    %v2799 = vpack.c.b16 %v2760, %v2757
    %v2800 = vpack.c.b16 %v2761, %v2758
    %v2801 = vpack.c.b16 %v2765, %v2762
    %v2802 = vpack.c.b16 %v2766, %v2763
    %v2803 = vpack.c.b16 %v2767, %v2764
    %v2804 = vpack.c.b16 %v2771, %v2768
    %v2805 = vpack.c.b16 %v2772, %v2769
    %v2806 = vpack.c.b16 %v2773, %v2770
    %v2807 = vpack.c.b16 %v2777, %v2774
    %v2808 = vpack.c.b16 %v2778, %v2775
    %v2809 = vpack.c.b16 %v2779, %v2776
    %v2810 = vpack.c.b16 %v2783, %v2780
    %v2811 = vpack.c.b16 %v2784, %v2781
    %v2812 = vpack.c.b16 %v2785, %v2782
    %v2813 = vpack.c.b16 %v2789, %v2786
    %v2814 = vpack.c.b16 %v2790, %v2787
    %v2815 = vpack.c.b16 %v2791, %v2788
    %2840 = vmatprep.subr.bf16.mxu0 %v2793
    %2841 = vmatpush1.bf16.msra.mxu0 %v2792
    %2842 = vmatprep.subr.bf16.mxu0 %v2796
    %2843 = vmatpush1.bf16.msra.mxu0 %v2795
    %2844 = vmatprep.subr.bf16.mxu0 %v2799
    %2845 = vmatpush1.bf16.msra.mxu0 %v2798
    %2846 = vmatprep.subr.bf16.mxu0 %v2802
    %2847 = vmatpush1.bf16.msra.mxu0 %v2801
    %2848 = vmatprep.subr.bf16.mxu0 %v2805
    %2849 = vmatpush1.bf16.msra.mxu0 %v2804
    %2850 = vmatprep.subr.bf16.mxu0 %v2808
    %2851 = vmatpush1.bf16.msra.mxu0 %v2807
    %2852 = vmatprep.subr.bf16.mxu0 %v2811
    %2853 = vmatpush1.bf16.msra.mxu0 %v2810
    %2854 = vmatprep.subr.bf16.mxu0 %v2814
    %2855 = vmatpush1.bf16.msra.mxu0 %v2813
    %2856 = vmatprep.subr.bf16.mxu0 0
    %2857 = vmatpush1.bf16.msra.mxu0 0
    %2858 = vmatprep.subr.bf16.mxu0 0
    %2859 = vmatpush1.bf16.msra.mxu0 0
    %2860 = vmatprep.subr.bf16.mxu0 0
    %2861 = vmatpush1.bf16.msra.mxu0 0
    %2862 = vmatprep.subr.bf16.mxu0 0
    %2863 = vmatpush1.bf16.msra.mxu0 0
    %2864 = vmatprep.subr.bf16.mxu0 0
    %2865 = vmatpush1.bf16.msra.mxu0 0
    %2866 = vmatprep.subr.bf16.mxu0 0
    %2867 = vmatpush1.bf16.msra.mxu0 0
    %2868 = vmatprep.subr.bf16.mxu0 0
    %2869 = vmatpush1.bf16.msra.mxu0 0
    %2870 = vmatprep.subr.bf16.mxu0 0
    %2871 = vmatpush1.bf16.msra.mxu0 0
    %2872 = vmatprep.mubr.bf16.mxu0 0
    %2873 = vmatmul.mubr.bf16.gmra.mrb[0].mxu0 %v2677
    %v2874 = vpop.f32.mrb[0].mxu0
    %v2875 = vadd.f32 0.0, %v2874
    %v2876 = vpop.f32.mrb[0].mxu0
    %v2877 = vadd.f32 0.0, %v2876
    %v2878 = vpop.f32.mrb[0].mxu0
    %v2879 = vadd.f32 0.0, %v2878
    %v2880 = vpop.f32.mrb[0].mxu0
    %v2881 = vadd.f32 0.0, %v2880
    %2882 = vmatprep.mubr.bf16.mxu0 0
    %2883 = vmatmul.mubr.bf16.gmra.mrb[0].mxu0 %v2678
    %v2884 = vpop.f32.mrb[0].mxu0
    %v2885 = vadd.f32 0.0, %v2884
    %v2886 = vpop.f32.mrb[0].mxu0
    %v2887 = vadd.f32 0.0, %v2886
    %v2888 = vpop.f32.mrb[0].mxu0
    %v2889 = vadd.f32 0.0, %v2888
    %v2890 = vpop.f32.mrb[0].mxu0
    %v2891 = vadd.f32 0.0, %v2890
    %2892 = vdwg.mxu0
    %2893 = vmatprep.subr.bf16.mxu0 0
    %2894 = vmatpush1.bf16.msra.mxu0 %v2794
    %2895 = vmatprep.subr.bf16.mxu0 0
    %2896 = vmatpush1.bf16.msra.mxu0 %v2797
    %2897 = vmatprep.subr.bf16.mxu0 0
    %2898 = vmatpush1.bf16.msra.mxu0 %v2800
    %2899 = vmatprep.subr.bf16.mxu0 0
    %2900 = vmatpush1.bf16.msra.mxu0 %v2803
    %2901 = vmatprep.subr.bf16.mxu0 0
    %2902 = vmatpush1.bf16.msra.mxu0 %v2806
    %2903 = vmatprep.subr.bf16.mxu0 0
    %2904 = vmatpush1.bf16.msra.mxu0 %v2809
    %2905 = vmatprep.subr.bf16.mxu0 0
    %2906 = vmatpush1.bf16.msra.mxu0 %v2812
    %2907 = vmatprep.subr.bf16.mxu0 0
    %2908 = vmatpush1.bf16.msra.mxu0 %v2815
    %2909 = vmatprep.subr.bf16.mxu0 0
    %2910 = vmatpush1.bf16.msra.mxu0 0
    %2911 = vmatprep.subr.bf16.mxu0 0
    %2912 = vmatpush1.bf16.msra.mxu0 0
    %2913 = vmatprep.subr.bf16.mxu0 0
    %2914 = vmatpush1.bf16.msra.mxu0 0
    %2915 = vmatprep.subr.bf16.mxu0 0
    %2916 = vmatpush1.bf16.msra.mxu0 0
    %2917 = vmatprep.subr.bf16.mxu0 0
    %2918 = vmatpush1.bf16.msra.mxu0 0
    %2919 = vmatprep.subr.bf16.mxu0 0
    %2920 = vmatpush1.bf16.msra.mxu0 0
    %2921 = vmatprep.subr.bf16.mxu0 0
    %2922 = vmatpush1.bf16.msra.mxu0 0
    %2923 = vmatprep.subr.bf16.mxu0 0
    %2924 = vmatpush1.bf16.msra.mxu0 0
    %2925 = vmatprep.mubr.bf16.mxu0 0
    %2926 = vmatmul.mubr.bf16.gmra.mrb[0].mxu0 %v2677
    %v2927 = vpop.f32.mrb[0].mxu0
    %v2928 = vadd.f32 0.0, %v2927
    %v2929 = vpop.f32.mrb[0].mxu0
    %v2930 = vpop.f32.mrb[0].mxu0
    %v2931 = vadd.f32 0.0, %v2930
    %v2932 = vpop.f32.mrb[0].mxu0
    %2933 = vmatprep.mubr.bf16.mxu0 0
    %2934 = vmatmul.mubr.bf16.gmra.mrb[0].mxu0 %v2678
    %v2935 = vpop.f32.mrb[0].mxu0
    %v2936 = vadd.f32 0.0, %v2935
    %v2937 = vpop.f32.mrb[0].mxu0
    %v2938 = vpop.f32.mrb[0].mxu0
    %v2939 = vadd.f32 0.0, %v2938
    %v2940 = vpop.f32.mrb[0].mxu0
    %2941 = vdwg.mxu0
    %v2942 = vpack.c.bf16 %v2879, %v2875
    %v2943 = vpack.c.bf16 %v2881, %v2877
    %v2944 = vpack.c.bf16 %v2931, %v2928
    %v2945 = vpack.c.bf16 %v2889, %v2885
    %v2946 = vpack.c.bf16 %v2891, %v2887
    %v2947 = vpack.c.bf16 %v2939, %v2936
    %s2948 = scalar_lea.vmem [#allocation2], 64
    %v2949 = vld [vmem:[%s2948] sm:$0xf]
    %v2950 = vld [vmem:[%s2948 + $0x4] sm:$0xf]
    %v2951 = vld [vmem:[%s2948 + $0x8] sm:$0xf]
    %v2952 = vld [vmem:[%s2948 + $0xc] sm:$0xf]
    %v2953 = vld [vmem:[%s2948 + $0x10] sm:$0xf]
    %v2954 = vld [vmem:[%s2948 + $0x14] sm:$0xf]
    %v2955 = vld [vmem:[%s2948 + $0x18] sm:$0xf]
    %v2956 = vld [vmem:[%s2948 + $0x1c] sm:$0xf]
    %v2957 = vld [vmem:[%s2948 + $0x20] sm:$0xf]
    %v2958 = vld [vmem:[%s2948 + $0x24] sm:$0xf]
    %v2959 = vld [vmem:[%s2948 + $0x28] sm:$0xf]
    %v2960 = vld [vmem:[%s2948 + $0x2c] sm:$0xf]
    %v2961 = vld [vmem:[%s2948 + $0x30] sm:$0xf]
    %v2962 = vld [vmem:[%s2948 + $0x34] sm:$0xf]
    %v2963 = vld [vmem:[%s2948 + $0x38] sm:$0xf]
    %v2964 = vld [vmem:[%s2948 + $0x3c] sm:$0xf]
    %v2966 = vsel %vm539, %v2942, 0
    %v2969 = vsel %vm539, %v2943, 0
    %2971 = vmatprep.subr.bf16.mxu0 0
    %2972 = vmatpush1.bf16.xpose.msra.mxu0 %v2969
    %2973 = vmatprep.subr.bf16.mxu0 0
    %2974 = vmatpush1.bf16.xpose.msra.mxu0 0
    %2975 = vmatprep.subr.bf16.mxu0 0
    %2976 = vmatpush1.bf16.xpose.msra.mxu0 0
    %2977 = vmatprep.subr.bf16.mxu0 0
    %2978 = vmatpush1.bf16.xpose.msra.mxu0 0
    %2979 = vmatprep.subr.bf16.mxu0 0
    %2980 = vmatpush1.bf16.xpose.msra.mxu0 0
    %2981 = vmatprep.subr.bf16.mxu0 0
    %2982 = vmatpush1.bf16.xpose.msra.mxu0 0
    %2983 = vmatprep.subr.bf16.mxu0 0
    %2984 = vmatpush1.bf16.xpose.msra.mxu0 0
    %2985 = vmatprep.subr.bf16.mxu0 0
    %2986 = vmatpush1.bf16.xpose.msra.mxu0 0
    %2987 = vmatprep.subr.bf16.mxu0 0
    %2988 = vmatpush1.bf16.xpose.msra.mxu0 0
    %2989 = vmatprep.subr.bf16.mxu0 0
    %2990 = vmatpush1.bf16.xpose.msra.mxu0 0
    %2991 = vmatprep.subr.bf16.mxu0 0
    %2992 = vmatpush1.bf16.xpose.msra.mxu0 0
    %2993 = vmatprep.subr.bf16.mxu0 0
    %2994 = vmatpush1.bf16.xpose.msra.mxu0 0
    %2995 = vmatprep.subr.bf16.mxu0 0
    %2996 = vmatpush1.bf16.xpose.msra.mxu0 0
    %2997 = vmatprep.subr.bf16.mxu0 0
    %2998 = vmatpush1.bf16.xpose.msra.mxu0 0
    %2999 = vmatprep.subr.bf16.mxu0 0
    %3000 = vmatpush1.bf16.xpose.msra.mxu0 0
    %3001 = vmatprep.subr.bf16.mxu0 0
    %3002 = vmatpush1.bf16.xpose.msra.mxu0 0
    %3003 = vmatprep.mubr.bf16.mxu0 0
    %3004 = vmatmul.mubr.bf16.gmra.mrb[0].mxu0 %v2966
    %v3005 = vpop.f32.mrb[0].mxu0
    %v3006 = vadd.f32 0.0, %v3005
    %v3007 = vpop.f32.mrb[0].mxu0
    %v3008 = vpop.f32.mrb[0].mxu0
    %v3009 = vadd.f32 0.0, %v3008
    %v3010 = vpop.f32.mrb[0].mxu0
    %3011 = vdwg.mxu0
    %v3013 = vsel %vm539, %v2945, 0
    %v3016 = vsel %vm539, %v2946, 0
    %3018 = vmatprep.subr.bf16.mxu0 0
    %3019 = vmatpush1.bf16.xpose.msra.mxu0 %v3016
    %3020 = vmatprep.subr.bf16.mxu0 0
    %3021 = vmatpush1.bf16.xpose.msra.mxu0 0
    %3022 = vmatprep.subr.bf16.mxu0 0
    %3023 = vmatpush1.bf16.xpose.msra.mxu0 0
    %3024 = vmatprep.subr.bf16.mxu0 0
    %3025 = vmatpush1.bf16.xpose.msra.mxu0 0
    %3026 = vmatprep.subr.bf16.mxu0 0
    %3027 = vmatpush1.bf16.xpose.msra.mxu0 0
    %3028 = vmatprep.subr.bf16.mxu0 0
    %3029 = vmatpush1.bf16.xpose.msra.mxu0 0
    %3030 = vmatprep.subr.bf16.mxu0 0
    %3031 = vmatpush1.bf16.xpose.msra.mxu0 0
    %3032 = vmatprep.subr.bf16.mxu0 0
    %3033 = vmatpush1.bf16.xpose.msra.mxu0 0
    %3034 = vmatprep.subr.bf16.mxu0 0
    %3035 = vmatpush1.bf16.xpose.msra.mxu0 0
    %3036 = vmatprep.subr.bf16.mxu0 0
    %3037 = vmatpush1.bf16.xpose.msra.mxu0 0
    %3038 = vmatprep.subr.bf16.mxu0 0
    %3039 = vmatpush1.bf16.xpose.msra.mxu0 0
    %3040 = vmatprep.subr.bf16.mxu0 0
    %3041 = vmatpush1.bf16.xpose.msra.mxu0 0
    %3042 = vmatprep.subr.bf16.mxu0 0
    %3043 = vmatpush1.bf16.xpose.msra.mxu0 0
    %3044 = vmatprep.subr.bf16.mxu0 0
    %3045 = vmatpush1.bf16.xpose.msra.mxu0 0
    %3046 = vmatprep.subr.bf16.mxu0 0
    %3047 = vmatpush1.bf16.xpose.msra.mxu0 0
    %3048 = vmatprep.subr.bf16.mxu0 0
    %3049 = vmatpush1.bf16.xpose.msra.mxu0 0
    %3050 = vmatprep.mubr.bf16.mxu0 0
    %3051 = vmatmul.mubr.bf16.gmra.mrb[0].mxu0 %v3013
    %v3052 = vpop.f32.mrb[0].mxu0
    %v3053 = vadd.f32 0.0, %v3052
    %v3054 = vpop.f32.mrb[0].mxu0
    %v3055 = vpop.f32.mrb[0].mxu0
    %v3056 = vadd.f32 0.0, %v3055
    %v3057 = vpop.f32.mrb[0].mxu0
    %3058 = vdwg.mxu0
    %v3059 = vmul.f32 %v3006, 0.17677669
    %v3060 = vmul.f32 %v3009, 0.17677669
    %v3061 = vmul.f32 %v3053, 0.17677669
    %v3062 = vmul.f32 %v3056, 0.17677669
    %v3063 = vadd.f32 %v3059, %v184
    %v3064 = vadd.f32 %v3060, %v185
    %v3065 = vadd.f32 %v3061, %v184
    %v3066 = vadd.f32 %v3062, %v185
    %v3067 = vsel %vm642, %v3063, -inf
    %3068 = vmax.xlane.f32.xlu0 %v3067
    %v3069 = vpop.xlane.xlu0 %3068
    %v3070 = vsel %vm642, %v3064, -inf
    %3071 = vmax.xlane.f32.xlu0 %v3070
    %v3072 = vpop.xlane.xlu0 %3071
    %v3073 = vsel %vm642, %v3065, -inf
    %3074 = vmax.xlane.f32.xlu0 %v3073
    %v3075 = vpop.xlane.xlu0 %3074
    %v3076 = vsel %vm642, %v3066, -inf
    %3077 = vmax.xlane.f32.xlu0 %v3076
    %v3078 = vpop.xlane.xlu0 %3077
    %v3079 = vsub.f32 %v3063, %v3069
    %v3080 = vsub.f32 %v3064, %v3072
    %v3081 = vsub.f32 %v3065, %v3075
    %v3082 = vsub.f32 %v3066, %v3078
    %v3083 = vmul.f32 %v3079, 1.442695
    %v3084 = vpow.pop %v3083
    %v3085 = vmul.f32 %v3080, 1.442695
    %v3086 = vpow.pop %v3085
    %v3087 = vmul.f32 %v3081, 1.442695
    %v3088 = vpow.pop %v3087
    %v3089 = vmul.f32 %v3082, 1.442695
    %v3090 = vpow.pop %v3089
    %v3091 = vsel %vm642, %v3084, 0.0
    %3092 = vadd.xlane.f32.xlu0 %v3091
    %v3093 = vpop.xlane.xlu0 %3092
    %v3094 = vsel %vm642, %v3086, 0.0
    %3095 = vadd.xlane.f32.xlu0 %v3094
    %v3096 = vpop.xlane.xlu0 %3095
    %v3097 = vsel %vm642, %v3088, 0.0
    %3098 = vadd.xlane.f32.xlu0 %v3097
    %v3099 = vpop.xlane.xlu0 %3098
    %v3100 = vsel %vm642, %v3090, 0.0
    %3101 = vadd.xlane.f32.xlu0 %v3100
    %v3102 = vpop.xlane.xlu0 %3101
    %v3103 = vrcp.pop %v3093
    %v3104 = vmul.f32 %v3084, %v3103
    %v3105 = vrcp.pop %v3096
    %v3106 = vmul.f32 %v3086, %v3105
    %v3107 = vrcp.pop %v3099
    %v3108 = vmul.f32 %v3088, %v3107
    %v3109 = vrcp.pop %v3102
    %v3110 = vmul.f32 %v3090, %v3109
    %v3111 = vpack.c.bf16 %v3106, %v3104
    %v3112 = vpack.c.bf16 %v3110, %v3108
    %v3114 = vsel %vm642, %v3111, 0
    %3116 = vmatprep.subr.bf16.mxu0 0
    %3117 = vmatpush1.bf16.msra.mxu0 %v2944
    %3118 = vmatprep.subr.bf16.mxu0 0
    %3119 = vmatpush1.bf16.msra.mxu0 0
    %3120 = vmatprep.subr.bf16.mxu0 0
    %3121 = vmatpush1.bf16.msra.mxu0 0
    %3122 = vmatprep.subr.bf16.mxu0 0
    %3123 = vmatpush1.bf16.msra.mxu0 0
    %3124 = vmatprep.subr.bf16.mxu0 0
    %3125 = vmatpush1.bf16.msra.mxu0 0
    %3126 = vmatprep.subr.bf16.mxu0 0
    %3127 = vmatpush1.bf16.msra.mxu0 0
    %3128 = vmatprep.subr.bf16.mxu0 0
    %3129 = vmatpush1.bf16.msra.mxu0 0
    %3130 = vmatprep.subr.bf16.mxu0 0
    %3131 = vmatpush1.bf16.msra.mxu0 0
    %3132 = vmatprep.subr.bf16.mxu0 0
    %3133 = vmatpush1.bf16.msra.mxu0 0
    %3134 = vmatprep.subr.bf16.mxu0 0
    %3135 = vmatpush1.bf16.msra.mxu0 0
    %3136 = vmatprep.subr.bf16.mxu0 0
    %3137 = vmatpush1.bf16.msra.mxu0 0
    %3138 = vmatprep.subr.bf16.mxu0 0
    %3139 = vmatpush1.bf16.msra.mxu0 0
    %3140 = vmatprep.subr.bf16.mxu0 0
    %3141 = vmatpush1.bf16.msra.mxu0 0
    %3142 = vmatprep.subr.bf16.mxu0 0
    %3143 = vmatpush1.bf16.msra.mxu0 0
    %3144 = vmatprep.subr.bf16.mxu0 0
    %3145 = vmatpush1.bf16.msra.mxu0 0
    %3146 = vmatprep.subr.bf16.mxu0 0
    %3147 = vmatpush1.bf16.msra.mxu0 0
    %3148 = vmatprep.mubr.bf16.mxu0 0
    %3149 = vmatmul.mubr.bf16.gmra.mrb[0].mxu0 %v3114
    %v3150 = vpop.f32.mrb[0].mxu0
    %v3151 = vadd.f32 0.0, %v3150
    %v3152 = vpop.f32.mrb[0].mxu0
    %v3153 = vpop.f32.mrb[0].mxu0
    %v3154 = vadd.f32 0.0, %v3153
    %v3155 = vpop.f32.mrb[0].mxu0
    %3156 = vdwg.mxu0
    %v3158 = vsel %vm642, %v3112, 0
    %3160 = vmatprep.subr.bf16.mxu0 0
    %3161 = vmatpush1.bf16.msra.mxu0 %v2947
    %3162 = vmatprep.subr.bf16.mxu0 0
    %3163 = vmatpush1.bf16.msra.mxu0 0
    %3164 = vmatprep.subr.bf16.mxu0 0
    %3165 = vmatpush1.bf16.msra.mxu0 0
    %3166 = vmatprep.subr.bf16.mxu0 0
    %3167 = vmatpush1.bf16.msra.mxu0 0
    %3168 = vmatprep.subr.bf16.mxu0 0
    %3169 = vmatpush1.bf16.msra.mxu0 0
    %3170 = vmatprep.subr.bf16.mxu0 0
    %3171 = vmatpush1.bf16.msra.mxu0 0
    %3172 = vmatprep.subr.bf16.mxu0 0
    %3173 = vmatpush1.bf16.msra.mxu0 0
    %3174 = vmatprep.subr.bf16.mxu0 0
    %3175 = vmatpush1.bf16.msra.mxu0 0
    %3176 = vmatprep.subr.bf16.mxu0 0
    %3177 = vmatpush1.bf16.msra.mxu0 0
    %3178 = vmatprep.subr.bf16.mxu0 0
    %3179 = vmatpush1.bf16.msra.mxu0 0
    %3180 = vmatprep.subr.bf16.mxu0 0
    %3181 = vmatpush1.bf16.msra.mxu0 0
    %3182 = vmatprep.subr.bf16.mxu0 0
    %3183 = vmatpush1.bf16.msra.mxu0 0
    %3184 = vmatprep.subr.bf16.mxu0 0
    %3185 = vmatpush1.bf16.msra.mxu0 0
    %3186 = vmatprep.subr.bf16.mxu0 0
    %3187 = vmatpush1.bf16.msra.mxu0 0
    %3188 = vmatprep.subr.bf16.mxu0 0
    %3189 = vmatpush1.bf16.msra.mxu0 0
    %3190 = vmatprep.subr.bf16.mxu0 0
    %3191 = vmatpush1.bf16.msra.mxu0 0
    %3192 = vmatprep.mubr.bf16.mxu0 0
    %3193 = vmatmul.mubr.bf16.gmra.mrb[0].mxu0 %v3158
    %v3194 = vpop.f32.mrb[0].mxu0
    %v3195 = vadd.f32 0.0, %v3194
    %v3196 = vpop.f32.mrb[0].mxu0
    %v3197 = vpop.f32.mrb[0].mxu0
    %v3198 = vadd.f32 0.0, %v3197
    %v3199 = vpop.f32.mrb[0].mxu0
    %3200 = vdwg.mxu0
    %v3201 = vpack.c.bf16 %v3154, %v3151
    %v3202 = vpack.c.bf16 %v3198, %v3195
    %3204 = vrot.lane.b32.xlu0 %v2942, 96
    %v3205 = vpop.permute.xlu0 %3204
    %3207 = vrot.lane.b32.xlu0 %v2943, 96
    %v3208 = vpop.permute.xlu0 %3207
    %v3210 = vsel %vm539, %v3205, 0
    %v3213 = vsel %vm539, %v3208, 0
    %3215 = vmatprep.subr.bf16.mxu0 0
    %3216 = vmatpush1.bf16.xpose.msra.mxu0 %v3213
    %3217 = vmatprep.subr.bf16.mxu0 0
    %3218 = vmatpush1.bf16.xpose.msra.mxu0 0
    %3219 = vmatprep.subr.bf16.mxu0 0
    %3220 = vmatpush1.bf16.xpose.msra.mxu0 0
    %3221 = vmatprep.subr.bf16.mxu0 0
    %3222 = vmatpush1.bf16.xpose.msra.mxu0 0
    %3223 = vmatprep.subr.bf16.mxu0 0
    %3224 = vmatpush1.bf16.xpose.msra.mxu0 0
    %3225 = vmatprep.subr.bf16.mxu0 0
    %3226 = vmatpush1.bf16.xpose.msra.mxu0 0
    %3227 = vmatprep.subr.bf16.mxu0 0
    %3228 = vmatpush1.bf16.xpose.msra.mxu0 0
    %3229 = vmatprep.subr.bf16.mxu0 0
    %3230 = vmatpush1.bf16.xpose.msra.mxu0 0
    %3231 = vmatprep.subr.bf16.mxu0 0
    %3232 = vmatpush1.bf16.xpose.msra.mxu0 0
    %3233 = vmatprep.subr.bf16.mxu0 0
    %3234 = vmatpush1.bf16.xpose.msra.mxu0 0
    %3235 = vmatprep.subr.bf16.mxu0 0
    %3236 = vmatpush1.bf16.xpose.msra.mxu0 0
    %3237 = vmatprep.subr.bf16.mxu0 0
    %3238 = vmatpush1.bf16.xpose.msra.mxu0 0
    %3239 = vmatprep.subr.bf16.mxu0 0
    %3240 = vmatpush1.bf16.xpose.msra.mxu0 0
    %3241 = vmatprep.subr.bf16.mxu0 0
    %3242 = vmatpush1.bf16.xpose.msra.mxu0 0
    %3243 = vmatprep.subr.bf16.mxu0 0
    %3244 = vmatpush1.bf16.xpose.msra.mxu0 0
    %3245 = vmatprep.subr.bf16.mxu0 0
    %3246 = vmatpush1.bf16.xpose.msra.mxu0 0
    %3247 = vmatprep.mubr.bf16.mxu0 0
    %3248 = vmatmul.mubr.bf16.gmra.mrb[0].mxu0 %v3210
    %v3249 = vpop.f32.mrb[0].mxu0
    %v3250 = vadd.f32 0.0, %v3249
    %v3251 = vpop.f32.mrb[0].mxu0
    %v3252 = vpop.f32.mrb[0].mxu0
    %v3253 = vadd.f32 0.0, %v3252
    %v3254 = vpop.f32.mrb[0].mxu0
    %3255 = vdwg.mxu0
    %3257 = vrot.lane.b32.xlu0 %v2945, 96
    %v3258 = vpop.permute.xlu0 %3257
    %3260 = vrot.lane.b32.xlu0 %v2946, 96
    %v3261 = vpop.permute.xlu0 %3260
    %v3263 = vsel %vm539, %v3258, 0
    %v3266 = vsel %vm539, %v3261, 0
    %3268 = vmatprep.subr.bf16.mxu0 0
    %3269 = vmatpush1.bf16.xpose.msra.mxu0 %v3266
    %3270 = vmatprep.subr.bf16.mxu0 0
    %3271 = vmatpush1.bf16.xpose.msra.mxu0 0
    %3272 = vmatprep.subr.bf16.mxu0 0
    %3273 = vmatpush1.bf16.xpose.msra.mxu0 0
    %3274 = vmatprep.subr.bf16.mxu0 0
    %3275 = vmatpush1.bf16.xpose.msra.mxu0 0
    %3276 = vmatprep.subr.bf16.mxu0 0
    %3277 = vmatpush1.bf16.xpose.msra.mxu0 0
    %3278 = vmatprep.subr.bf16.mxu0 0
    %3279 = vmatpush1.bf16.xpose.msra.mxu0 0
    %3280 = vmatprep.subr.bf16.mxu0 0
    %3281 = vmatpush1.bf16.xpose.msra.mxu0 0
    %3282 = vmatprep.subr.bf16.mxu0 0
    %3283 = vmatpush1.bf16.xpose.msra.mxu0 0
    %3284 = vmatprep.subr.bf16.mxu0 0
    %3285 = vmatpush1.bf16.xpose.msra.mxu0 0
    %3286 = vmatprep.subr.bf16.mxu0 0
    %3287 = vmatpush1.bf16.xpose.msra.mxu0 0
    %3288 = vmatprep.subr.bf16.mxu0 0
    %3289 = vmatpush1.bf16.xpose.msra.mxu0 0
    %3290 = vmatprep.subr.bf16.mxu0 0
    %3291 = vmatpush1.bf16.xpose.msra.mxu0 0
    %3292 = vmatprep.subr.bf16.mxu0 0
    %3293 = vmatpush1.bf16.xpose.msra.mxu0 0
    %3294 = vmatprep.subr.bf16.mxu0 0
    %3295 = vmatpush1.bf16.xpose.msra.mxu0 0
    %3296 = vmatprep.subr.bf16.mxu0 0
    %3297 = vmatpush1.bf16.xpose.msra.mxu0 0
    %3298 = vmatprep.subr.bf16.mxu0 0
    %3299 = vmatpush1.bf16.xpose.msra.mxu0 0
    %3300 = vmatprep.mubr.bf16.mxu0 0
    %3301 = vmatmul.mubr.bf16.gmra.mrb[0].mxu0 %v3263
    %v3302 = vpop.f32.mrb[0].mxu0
    %v3303 = vadd.f32 0.0, %v3302
    %v3304 = vpop.f32.mrb[0].mxu0
    %v3305 = vpop.f32.mrb[0].mxu0
    %v3306 = vadd.f32 0.0, %v3305
    %v3307 = vpop.f32.mrb[0].mxu0
    %3308 = vdwg.mxu0
    %v3309 = vmul.f32 %v3250, 0.17677669
    %v3310 = vmul.f32 %v3253, 0.17677669
    %v3311 = vmul.f32 %v3303, 0.17677669
    %v3312 = vmul.f32 %v3306, 0.17677669
    %v3313 = vadd.f32 %v3309, %v184
    %v3314 = vadd.f32 %v3310, %v185
    %v3315 = vadd.f32 %v3311, %v184
    %v3316 = vadd.f32 %v3312, %v185
    %v3317 = vsel %vm642, %v3313, -inf
    %3318 = vmax.xlane.f32.xlu0 %v3317
    %v3319 = vpop.xlane.xlu0 %3318
    %v3320 = vsel %vm642, %v3314, -inf
    %3321 = vmax.xlane.f32.xlu0 %v3320
    %v3322 = vpop.xlane.xlu0 %3321
    %v3323 = vsel %vm642, %v3315, -inf
    %3324 = vmax.xlane.f32.xlu0 %v3323
    %v3325 = vpop.xlane.xlu0 %3324
    %v3326 = vsel %vm642, %v3316, -inf
    %3327 = vmax.xlane.f32.xlu0 %v3326
    %v3328 = vpop.xlane.xlu0 %3327
    %v3329 = vsub.f32 %v3313, %v3319
    %v3330 = vsub.f32 %v3314, %v3322
    %v3331 = vsub.f32 %v3315, %v3325
    %v3332 = vsub.f32 %v3316, %v3328
    %v3333 = vmul.f32 %v3329, 1.442695
    %v3334 = vpow.pop %v3333
    %v3335 = vmul.f32 %v3330, 1.442695
    %v3336 = vpow.pop %v3335
    %v3337 = vmul.f32 %v3331, 1.442695
    %v3338 = vpow.pop %v3337
    %v3339 = vmul.f32 %v3332, 1.442695
    %v3340 = vpow.pop %v3339
    %v3341 = vsel %vm642, %v3334, 0.0
    %3342 = vadd.xlane.f32.xlu0 %v3341
    %v3343 = vpop.xlane.xlu0 %3342
    %v3344 = vsel %vm642, %v3336, 0.0
    %3345 = vadd.xlane.f32.xlu0 %v3344
    %v3346 = vpop.xlane.xlu0 %3345
    %v3347 = vsel %vm642, %v3338, 0.0
    %3348 = vadd.xlane.f32.xlu0 %v3347
    %v3349 = vpop.xlane.xlu0 %3348
    %v3350 = vsel %vm642, %v3340, 0.0
    %3351 = vadd.xlane.f32.xlu0 %v3350
    %v3352 = vpop.xlane.xlu0 %3351
    %v3353 = vrcp.pop %v3343
    %v3354 = vmul.f32 %v3334, %v3353
    %v3355 = vrcp.pop %v3346
    %v3356 = vmul.f32 %v3336, %v3355
    %v3357 = vrcp.pop %v3349
    %v3358 = vmul.f32 %v3338, %v3357
    %v3359 = vrcp.pop %v3352
    %v3360 = vmul.f32 %v3340, %v3359
    %v3361 = vpack.c.bf16 %v3356, %v3354
    %v3362 = vpack.c.bf16 %v3360, %v3358
    %3364 = vrot.lane.b32.xlu0 %v2944, 96
    %v3365 = vpop.permute.xlu0 %3364
    %v3368 = vsel %vm642, %v3361, 0
    %3370 = vmatprep.subr.bf16.mxu0 0
    %3371 = vmatpush1.bf16.msra.mxu0 %v3365
    %3372 = vmatprep.subr.bf16.mxu0 0
    %3373 = vmatpush1.bf16.msra.mxu0 0
    %3374 = vmatprep.subr.bf16.mxu0 0
    %3375 = vmatpush1.bf16.msra.mxu0 0
    %3376 = vmatprep.subr.bf16.mxu0 0
    %3377 = vmatpush1.bf16.msra.mxu0 0
    %3378 = vmatprep.subr.bf16.mxu0 0
    %3379 = vmatpush1.bf16.msra.mxu0 0
    %3380 = vmatprep.subr.bf16.mxu0 0
    %3381 = vmatpush1.bf16.msra.mxu0 0
    %3382 = vmatprep.subr.bf16.mxu0 0
    %3383 = vmatpush1.bf16.msra.mxu0 0
    %3384 = vmatprep.subr.bf16.mxu0 0
    %3385 = vmatpush1.bf16.msra.mxu0 0
    %3386 = vmatprep.subr.bf16.mxu0 0
    %3387 = vmatpush1.bf16.msra.mxu0 0
    %3388 = vmatprep.subr.bf16.mxu0 0
    %3389 = vmatpush1.bf16.msra.mxu0 0
    %3390 = vmatprep.subr.bf16.mxu0 0
    %3391 = vmatpush1.bf16.msra.mxu0 0
    %3392 = vmatprep.subr.bf16.mxu0 0
    %3393 = vmatpush1.bf16.msra.mxu0 0
    %3394 = vmatprep.subr.bf16.mxu0 0
    %3395 = vmatpush1.bf16.msra.mxu0 0
    %3396 = vmatprep.subr.bf16.mxu0 0
    %3397 = vmatpush1.bf16.msra.mxu0 0
    %3398 = vmatprep.subr.bf16.mxu0 0
    %3399 = vmatpush1.bf16.msra.mxu0 0
    %3400 = vmatprep.subr.bf16.mxu0 0
    %3401 = vmatpush1.bf16.msra.mxu0 0
    %3402 = vmatprep.mubr.bf16.mxu0 0
    %3403 = vmatmul.mubr.bf16.gmra.mrb[0].mxu0 %v3368
    %v3404 = vpop.f32.mrb[0].mxu0
    %v3405 = vadd.f32 0.0, %v3404
    %v3406 = vpop.f32.mrb[0].mxu0
    %v3407 = vpop.f32.mrb[0].mxu0
    %v3408 = vadd.f32 0.0, %v3407
    %v3409 = vpop.f32.mrb[0].mxu0
    %3410 = vdwg.mxu0
    %3412 = vrot.lane.b32.xlu0 %v2947, 96
    %v3413 = vpop.permute.xlu0 %3412
    %v3416 = vsel %vm642, %v3362, 0
    %3418 = vmatprep.subr.bf16.mxu0 0
    %3419 = vmatpush1.bf16.msra.mxu0 %v3413
    %3420 = vmatprep.subr.bf16.mxu0 0
    %3421 = vmatpush1.bf16.msra.mxu0 0
    %3422 = vmatprep.subr.bf16.mxu0 0
    %3423 = vmatpush1.bf16.msra.mxu0 0
    %3424 = vmatprep.subr.bf16.mxu0 0
    %3425 = vmatpush1.bf16.msra.mxu0 0
    %3426 = vmatprep.subr.bf16.mxu0 0
    %3427 = vmatpush1.bf16.msra.mxu0 0
    %3428 = vmatprep.subr.bf16.mxu0 0
    %3429 = vmatpush1.bf16.msra.mxu0 0
    %3430 = vmatprep.subr.bf16.mxu0 0
    %3431 = vmatpush1.bf16.msra.mxu0 0
    %3432 = vmatprep.subr.bf16.mxu0 0
    %3433 = vmatpush1.bf16.msra.mxu0 0
    %3434 = vmatprep.subr.bf16.mxu0 0
    %3435 = vmatpush1.bf16.msra.mxu0 0
    %3436 = vmatprep.subr.bf16.mxu0 0
    %3437 = vmatpush1.bf16.msra.mxu0 0
    %3438 = vmatprep.subr.bf16.mxu0 0
    %3439 = vmatpush1.bf16.msra.mxu0 0
    %3440 = vmatprep.subr.bf16.mxu0 0
    %3441 = vmatpush1.bf16.msra.mxu0 0
    %3442 = vmatprep.subr.bf16.mxu0 0
    %3443 = vmatpush1.bf16.msra.mxu0 0
    %3444 = vmatprep.subr.bf16.mxu0 0
    %3445 = vmatpush1.bf16.msra.mxu0 0
    %3446 = vmatprep.subr.bf16.mxu0 0
    %3447 = vmatpush1.bf16.msra.mxu0 0
    %3448 = vmatprep.subr.bf16.mxu0 0
    %3449 = vmatpush1.bf16.msra.mxu0 0
    %3450 = vmatprep.mubr.bf16.mxu0 0
    %3451 = vmatmul.mubr.bf16.gmra.mrb[0].mxu0 %v3416
    %v3452 = vpop.f32.mrb[0].mxu0
    %v3453 = vadd.f32 0.0, %v3452
    %v3454 = vpop.f32.mrb[0].mxu0
    %v3455 = vpop.f32.mrb[0].mxu0
    %v3456 = vadd.f32 0.0, %v3455
    %v3457 = vpop.f32.mrb[0].mxu0
    %3458 = vdwg.mxu0
    %v3459 = vpack.c.bf16 %v3408, %v3405
    %v3460 = vpack.c.bf16 %v3456, %v3453
    %v3465 = vunpack.c.l.b16 %v2953
    %v3466 = vunpack.c.l.b16 %v2954
    %v3467 = vunpack.c.l.b16 %v2955
    %v3468 = vunpack.c.l.b16 %v2956
    %v3469 = vpack.c.b16 %v3466, %v3465
    %v3470 = vpack.c.b16 %v3468, %v3467
    %v3474 = vsel %vm539, %v3459, 0
    %v3477 = vsel %vm539, %v3460, 0
    %3479 = vmatprep.subr.bf16.mxu0 0
    %3480 = vmatpush1.bf16.msra.mxu0 %v3469
    %3481 = vmatprep.subr.bf16.mxu0 0
    %3482 = vmatpush1.bf16.msra.mxu0 %v3470
    %3483 = vmatprep.subr.bf16.mxu0 0
    %3484 = vmatpush1.bf16.msra.mxu0 0
    %3485 = vmatprep.subr.bf16.mxu0 0
    %3486 = vmatpush1.bf16.msra.mxu0 0
    %3487 = vmatprep.subr.bf16.mxu0 0
    %3488 = vmatpush1.bf16.msra.mxu0 0
    %3489 = vmatprep.subr.bf16.mxu0 0
    %3490 = vmatpush1.bf16.msra.mxu0 0
    %3491 = vmatprep.subr.bf16.mxu0 0
    %3492 = vmatpush1.bf16.msra.mxu0 0
    %3493 = vmatprep.subr.bf16.mxu0 0
    %3494 = vmatpush1.bf16.msra.mxu0 0
    %3495 = vmatprep.subr.bf16.mxu0 0
    %3496 = vmatpush1.bf16.msra.mxu0 0
    %3497 = vmatprep.subr.bf16.mxu0 0
    %3498 = vmatpush1.bf16.msra.mxu0 0
    %3499 = vmatprep.subr.bf16.mxu0 0
    %3500 = vmatpush1.bf16.msra.mxu0 0
    %3501 = vmatprep.subr.bf16.mxu0 0
    %3502 = vmatpush1.bf16.msra.mxu0 0
    %3503 = vmatprep.subr.bf16.mxu0 0
    %3504 = vmatpush1.bf16.msra.mxu0 0
    %3505 = vmatprep.subr.bf16.mxu0 0
    %3506 = vmatpush1.bf16.msra.mxu0 0
    %3507 = vmatprep.subr.bf16.mxu0 0
    %3508 = vmatpush1.bf16.msra.mxu0 0
    %3509 = vmatprep.subr.bf16.mxu0 0
    %3510 = vmatpush1.bf16.msra.mxu0 0
    %3511 = vmatprep.mubr.bf16.mxu0 0
    %3512 = vmatmul.mubr.bf16.gmra.mrb[0].mxu0 %v3474
    %v3513 = vpop.f32.mrb[0].mxu0
    %v3514 = vadd.f32 0.0, %v3513
    %v3515 = vpop.f32.mrb[0].mxu0
    %v3516 = vpop.f32.mrb[0].mxu0
    %v3517 = vadd.f32 0.0, %v3516
    %v3518 = vpop.f32.mrb[0].mxu0
    %3519 = vmatprep.mubr.bf16.mxu0 0
    %3520 = vmatmul.mubr.bf16.gmra.mrb[0].mxu0 %v3477
    %v3521 = vpop.f32.mrb[0].mxu0
    %v3522 = vadd.f32 0.0, %v3521
    %v3523 = vpop.f32.mrb[0].mxu0
    %v3524 = vpop.f32.mrb[0].mxu0
    %v3525 = vadd.f32 0.0, %v3524
    %v3526 = vpop.f32.mrb[0].mxu0
    %3527 = vdwg.mxu0
    %v3532 = vunpack.c.l.b16 %v2949
    %v3533 = vunpack.c.l.b16 %v2950
    %v3534 = vunpack.c.l.b16 %v2951
    %v3535 = vunpack.c.l.b16 %v2952
    %v3536 = vpack.c.b16 %v3533, %v3532
    %v3537 = vpack.c.b16 %v3535, %v3534
    %v3541 = vsel %vm539, %v3201, 0
    %v3544 = vsel %vm539, %v3202, 0
    %3546 = vmatprep.subr.bf16.mxu0 0
    %3547 = vmatpush1.bf16.msra.mxu0 %v3536
    %3548 = vmatprep.subr.bf16.mxu0 0
    %3549 = vmatpush1.bf16.msra.mxu0 %v3537
    %3550 = vmatprep.subr.bf16.mxu0 0
    %3551 = vmatpush1.bf16.msra.mxu0 0
    %3552 = vmatprep.subr.bf16.mxu0 0
    %3553 = vmatpush1.bf16.msra.mxu0 0
    %3554 = vmatprep.subr.bf16.mxu0 0
    %3555 = vmatpush1.bf16.msra.mxu0 0
    %3556 = vmatprep.subr.bf16.mxu0 0
    %3557 = vmatpush1.bf16.msra.mxu0 0
    %3558 = vmatprep.subr.bf16.mxu0 0
    %3559 = vmatpush1.bf16.msra.mxu0 0
    %3560 = vmatprep.subr.bf16.mxu0 0
    %3561 = vmatpush1.bf16.msra.mxu0 0
    %3562 = vmatprep.subr.bf16.mxu0 0
    %3563 = vmatpush1.bf16.msra.mxu0 0
    %3564 = vmatprep.subr.bf16.mxu0 0
    %3565 = vmatpush1.bf16.msra.mxu0 0
    %3566 = vmatprep.subr.bf16.mxu0 0
    %3567 = vmatpush1.bf16.msra.mxu0 0
    %3568 = vmatprep.subr.bf16.mxu0 0
    %3569 = vmatpush1.bf16.msra.mxu0 0
    %3570 = vmatprep.subr.bf16.mxu0 0
    %3571 = vmatpush1.bf16.msra.mxu0 0
    %3572 = vmatprep.subr.bf16.mxu0 0
    %3573 = vmatpush1.bf16.msra.mxu0 0
    %3574 = vmatprep.subr.bf16.mxu0 0
    %3575 = vmatpush1.bf16.msra.mxu0 0
    %3576 = vmatprep.subr.bf16.mxu0 0
    %3577 = vmatpush1.bf16.msra.mxu0 0
    %3578 = vmatprep.mubr.bf16.mxu0 0
    %3579 = vmatmul.mubr.bf16.gmra.mrb[0].mxu0 %v3541
    %v3580 = vpop.f32.mrb[0].mxu0
    %v3581 = vadd.f32 %v3514, %v3580
    %v3582 = vpop.f32.mrb[0].mxu0
    %v3583 = vpop.f32.mrb[0].mxu0
    %v3584 = vadd.f32 %v3517, %v3583
    %v3585 = vpop.f32.mrb[0].mxu0
    %3586 = vmatprep.mubr.bf16.mxu0 0
    %3587 = vmatmul.mubr.bf16.gmra.mrb[0].mxu0 %v3544
    %v3588 = vpop.f32.mrb[0].mxu0
    %v3589 = vadd.f32 %v3522, %v3588
    %v3590 = vpop.f32.mrb[0].mxu0
    %v3591 = vpop.f32.mrb[0].mxu0
    %v3592 = vadd.f32 %v3525, %v3591
    %v3593 = vpop.f32.mrb[0].mxu0
    %3594 = vdwg.mxu0
    %3595 = vrot.lane.b32.xlu0 %v2942, 64
    %v3596 = vpop.permute.xlu0 %3595
    %3597 = vrot.lane.b32.xlu0 %v2943, 64
    %v3598 = vpop.permute.xlu0 %3597
    %v3600 = vsel %vm539, %v3596, 0
    %v3603 = vsel %vm539, %v3598, 0
    %3605 = vmatprep.subr.bf16.mxu0 0
    %3606 = vmatpush1.bf16.xpose.msra.mxu0 %v3603
    %3607 = vmatprep.subr.bf16.mxu0 0
    %3608 = vmatpush1.bf16.xpose.msra.mxu0 0
    %3609 = vmatprep.subr.bf16.mxu0 0
    %3610 = vmatpush1.bf16.xpose.msra.mxu0 0
    %3611 = vmatprep.subr.bf16.mxu0 0
    %3612 = vmatpush1.bf16.xpose.msra.mxu0 0
    %3613 = vmatprep.subr.bf16.mxu0 0
    %3614 = vmatpush1.bf16.xpose.msra.mxu0 0
    %3615 = vmatprep.subr.bf16.mxu0 0
    %3616 = vmatpush1.bf16.xpose.msra.mxu0 0
    %3617 = vmatprep.subr.bf16.mxu0 0
    %3618 = vmatpush1.bf16.xpose.msra.mxu0 0
    %3619 = vmatprep.subr.bf16.mxu0 0
    %3620 = vmatpush1.bf16.xpose.msra.mxu0 0
    %3621 = vmatprep.subr.bf16.mxu0 0
    %3622 = vmatpush1.bf16.xpose.msra.mxu0 0
    %3623 = vmatprep.subr.bf16.mxu0 0
    %3624 = vmatpush1.bf16.xpose.msra.mxu0 0
    %3625 = vmatprep.subr.bf16.mxu0 0
    %3626 = vmatpush1.bf16.xpose.msra.mxu0 0
    %3627 = vmatprep.subr.bf16.mxu0 0
    %3628 = vmatpush1.bf16.xpose.msra.mxu0 0
    %3629 = vmatprep.subr.bf16.mxu0 0
    %3630 = vmatpush1.bf16.xpose.msra.mxu0 0
    %3631 = vmatprep.subr.bf16.mxu0 0
    %3632 = vmatpush1.bf16.xpose.msra.mxu0 0
    %3633 = vmatprep.subr.bf16.mxu0 0
    %3634 = vmatpush1.bf16.xpose.msra.mxu0 0
    %3635 = vmatprep.subr.bf16.mxu0 0
    %3636 = vmatpush1.bf16.xpose.msra.mxu0 0
    %3637 = vmatprep.mubr.bf16.mxu0 0
    %3638 = vmatmul.mubr.bf16.gmra.mrb[0].mxu0 %v3600
    %v3639 = vpop.f32.mrb[0].mxu0
    %v3640 = vadd.f32 0.0, %v3639
    %v3641 = vpop.f32.mrb[0].mxu0
    %v3642 = vpop.f32.mrb[0].mxu0
    %v3643 = vadd.f32 0.0, %v3642
    %v3644 = vpop.f32.mrb[0].mxu0
    %3645 = vdwg.mxu0
    %3646 = vrot.lane.b32.xlu0 %v2945, 64
    %v3647 = vpop.permute.xlu0 %3646
    %3648 = vrot.lane.b32.xlu0 %v2946, 64
    %v3649 = vpop.permute.xlu0 %3648
    %v3651 = vsel %vm539, %v3647, 0
    %v3654 = vsel %vm539, %v3649, 0
    %3656 = vmatprep.subr.bf16.mxu0 0
    %3657 = vmatpush1.bf16.xpose.msra.mxu0 %v3654
    %3658 = vmatprep.subr.bf16.mxu0 0
    %3659 = vmatpush1.bf16.xpose.msra.mxu0 0
    %3660 = vmatprep.subr.bf16.mxu0 0
    %3661 = vmatpush1.bf16.xpose.msra.mxu0 0
    %3662 = vmatprep.subr.bf16.mxu0 0
    %3663 = vmatpush1.bf16.xpose.msra.mxu0 0
    %3664 = vmatprep.subr.bf16.mxu0 0
    %3665 = vmatpush1.bf16.xpose.msra.mxu0 0
    %3666 = vmatprep.subr.bf16.mxu0 0
    %3667 = vmatpush1.bf16.xpose.msra.mxu0 0
    %3668 = vmatprep.subr.bf16.mxu0 0
    %3669 = vmatpush1.bf16.xpose.msra.mxu0 0
    %3670 = vmatprep.subr.bf16.mxu0 0
    %3671 = vmatpush1.bf16.xpose.msra.mxu0 0
    %3672 = vmatprep.subr.bf16.mxu0 0
    %3673 = vmatpush1.bf16.xpose.msra.mxu0 0
    %3674 = vmatprep.subr.bf16.mxu0 0
    %3675 = vmatpush1.bf16.xpose.msra.mxu0 0
    %3676 = vmatprep.subr.bf16.mxu0 0
    %3677 = vmatpush1.bf16.xpose.msra.mxu0 0
    %3678 = vmatprep.subr.bf16.mxu0 0
    %3679 = vmatpush1.bf16.xpose.msra.mxu0 0
    %3680 = vmatprep.subr.bf16.mxu0 0
    %3681 = vmatpush1.bf16.xpose.msra.mxu0 0
    %3682 = vmatprep.subr.bf16.mxu0 0
    %3683 = vmatpush1.bf16.xpose.msra.mxu0 0
    %3684 = vmatprep.subr.bf16.mxu0 0
    %3685 = vmatpush1.bf16.xpose.msra.mxu0 0
    %3686 = vmatprep.subr.bf16.mxu0 0
    %3687 = vmatpush1.bf16.xpose.msra.mxu0 0
    %3688 = vmatprep.mubr.bf16.mxu0 0
    %3689 = vmatmul.mubr.bf16.gmra.mrb[0].mxu0 %v3651
    %v3690 = vpop.f32.mrb[0].mxu0
    %v3691 = vadd.f32 0.0, %v3690
    %v3692 = vpop.f32.mrb[0].mxu0
    %v3693 = vpop.f32.mrb[0].mxu0
    %v3694 = vadd.f32 0.0, %v3693
    %v3695 = vpop.f32.mrb[0].mxu0
    %3696 = vdwg.mxu0
    %v3697 = vmul.f32 %v3640, 0.17677669
    %v3698 = vmul.f32 %v3643, 0.17677669
    %v3699 = vmul.f32 %v3691, 0.17677669
    %v3700 = vmul.f32 %v3694, 0.17677669
    %v3701 = vadd.f32 %v3697, %v184
    %v3702 = vadd.f32 %v3698, %v185
    %v3703 = vadd.f32 %v3699, %v184
    %v3704 = vadd.f32 %v3700, %v185
    %v3705 = vsel %vm642, %v3701, -inf
    %3706 = vmax.xlane.f32.xlu0 %v3705
    %v3707 = vpop.xlane.xlu0 %3706
    %v3708 = vsel %vm642, %v3702, -inf
    %3709 = vmax.xlane.f32.xlu0 %v3708
    %v3710 = vpop.xlane.xlu0 %3709
    %v3711 = vsel %vm642, %v3703, -inf
    %3712 = vmax.xlane.f32.xlu0 %v3711
    %v3713 = vpop.xlane.xlu0 %3712
    %v3714 = vsel %vm642, %v3704, -inf
    %3715 = vmax.xlane.f32.xlu0 %v3714
    %v3716 = vpop.xlane.xlu0 %3715
    %v3717 = vsub.f32 %v3701, %v3707
    %v3718 = vsub.f32 %v3702, %v3710
    %v3719 = vsub.f32 %v3703, %v3713
    %v3720 = vsub.f32 %v3704, %v3716
    %v3721 = vmul.f32 %v3717, 1.442695
    %v3722 = vpow.pop %v3721
    %v3723 = vmul.f32 %v3718, 1.442695
    %v3724 = vpow.pop %v3723
    %v3725 = vmul.f32 %v3719, 1.442695
    %v3726 = vpow.pop %v3725
    %v3727 = vmul.f32 %v3720, 1.442695
    %v3728 = vpow.pop %v3727
    %v3729 = vsel %vm642, %v3722, 0.0
    %3730 = vadd.xlane.f32.xlu0 %v3729
    %v3731 = vpop.xlane.xlu0 %3730
    %v3732 = vsel %vm642, %v3724, 0.0
    %3733 = vadd.xlane.f32.xlu0 %v3732
    %v3734 = vpop.xlane.xlu0 %3733
    %v3735 = vsel %vm642, %v3726, 0.0
    %3736 = vadd.xlane.f32.xlu0 %v3735
    %v3737 = vpop.xlane.xlu0 %3736
    %v3738 = vsel %vm642, %v3728, 0.0
    %3739 = vadd.xlane.f32.xlu0 %v3738
    %v3740 = vpop.xlane.xlu0 %3739
    %v3741 = vrcp.pop %v3731
    %v3742 = vmul.f32 %v3722, %v3741
    %v3743 = vrcp.pop %v3734
    %v3744 = vmul.f32 %v3724, %v3743
    %v3745 = vrcp.pop %v3737
    %v3746 = vmul.f32 %v3726, %v3745
    %v3747 = vrcp.pop %v3740
    %v3748 = vmul.f32 %v3728, %v3747
    %v3749 = vpack.c.bf16 %v3744, %v3742
    %v3750 = vpack.c.bf16 %v3748, %v3746
    %3751 = vrot.lane.b32.xlu0 %v2944, 64
    %v3752 = vpop.permute.xlu0 %3751
    %v3755 = vsel %vm642, %v3749, 0
    %3757 = vmatprep.subr.bf16.mxu0 0
    %3758 = vmatpush1.bf16.msra.mxu0 %v3752
    %3759 = vmatprep.subr.bf16.mxu0 0
    %3760 = vmatpush1.bf16.msra.mxu0 0
    %3761 = vmatprep.subr.bf16.mxu0 0
    %3762 = vmatpush1.bf16.msra.mxu0 0
    %3763 = vmatprep.subr.bf16.mxu0 0
    %3764 = vmatpush1.bf16.msra.mxu0 0
    %3765 = vmatprep.subr.bf16.mxu0 0
    %3766 = vmatpush1.bf16.msra.mxu0 0
    %3767 = vmatprep.subr.bf16.mxu0 0
    %3768 = vmatpush1.bf16.msra.mxu0 0
    %3769 = vmatprep.subr.bf16.mxu0 0
    %3770 = vmatpush1.bf16.msra.mxu0 0
    %3771 = vmatprep.subr.bf16.mxu0 0
    %3772 = vmatpush1.bf16.msra.mxu0 0
    %3773 = vmatprep.subr.bf16.mxu0 0
    %3774 = vmatpush1.bf16.msra.mxu0 0
    %3775 = vmatprep.subr.bf16.mxu0 0
    %3776 = vmatpush1.bf16.msra.mxu0 0
    %3777 = vmatprep.subr.bf16.mxu0 0
    %3778 = vmatpush1.bf16.msra.mxu0 0
    %3779 = vmatprep.subr.bf16.mxu0 0
    %3780 = vmatpush1.bf16.msra.mxu0 0
    %3781 = vmatprep.subr.bf16.mxu0 0
    %3782 = vmatpush1.bf16.msra.mxu0 0
    %3783 = vmatprep.subr.bf16.mxu0 0
    %3784 = vmatpush1.bf16.msra.mxu0 0
    %3785 = vmatprep.subr.bf16.mxu0 0
    %3786 = vmatpush1.bf16.msra.mxu0 0
    %3787 = vmatprep.subr.bf16.mxu0 0
    %3788 = vmatpush1.bf16.msra.mxu0 0
    %3789 = vmatprep.mubr.bf16.mxu0 0
    %3790 = vmatmul.mubr.bf16.gmra.mrb[0].mxu0 %v3755
    %v3791 = vpop.f32.mrb[0].mxu0
    %v3792 = vadd.f32 0.0, %v3791
    %v3793 = vpop.f32.mrb[0].mxu0
    %v3794 = vpop.f32.mrb[0].mxu0
    %v3795 = vadd.f32 0.0, %v3794
    %v3796 = vpop.f32.mrb[0].mxu0
    %3797 = vdwg.mxu0
    %3798 = vrot.lane.b32.xlu0 %v2947, 64
    %v3799 = vpop.permute.xlu0 %3798
    %v3802 = vsel %vm642, %v3750, 0
    %3804 = vmatprep.subr.bf16.mxu0 0
    %3805 = vmatpush1.bf16.msra.mxu0 %v3799
    %3806 = vmatprep.subr.bf16.mxu0 0
    %3807 = vmatpush1.bf16.msra.mxu0 0
    %3808 = vmatprep.subr.bf16.mxu0 0
    %3809 = vmatpush1.bf16.msra.mxu0 0
    %3810 = vmatprep.subr.bf16.mxu0 0
    %3811 = vmatpush1.bf16.msra.mxu0 0
    %3812 = vmatprep.subr.bf16.mxu0 0
    %3813 = vmatpush1.bf16.msra.mxu0 0
    %3814 = vmatprep.subr.bf16.mxu0 0
    %3815 = vmatpush1.bf16.msra.mxu0 0
    %3816 = vmatprep.subr.bf16.mxu0 0
    %3817 = vmatpush1.bf16.msra.mxu0 0
    %3818 = vmatprep.subr.bf16.mxu0 0
    %3819 = vmatpush1.bf16.msra.mxu0 0
    %3820 = vmatprep.subr.bf16.mxu0 0
    %3821 = vmatpush1.bf16.msra.mxu0 0
    %3822 = vmatprep.subr.bf16.mxu0 0
    %3823 = vmatpush1.bf16.msra.mxu0 0
    %3824 = vmatprep.subr.bf16.mxu0 0
    %3825 = vmatpush1.bf16.msra.mxu0 0
    %3826 = vmatprep.subr.bf16.mxu0 0
    %3827 = vmatpush1.bf16.msra.mxu0 0
    %3828 = vmatprep.subr.bf16.mxu0 0
    %3829 = vmatpush1.bf16.msra.mxu0 0
    %3830 = vmatprep.subr.bf16.mxu0 0
    %3831 = vmatpush1.bf16.msra.mxu0 0
    %3832 = vmatprep.subr.bf16.mxu0 0
    %3833 = vmatpush1.bf16.msra.mxu0 0
    %3834 = vmatprep.subr.bf16.mxu0 0
    %3835 = vmatpush1.bf16.msra.mxu0 0
    %3836 = vmatprep.mubr.bf16.mxu0 0
    %3837 = vmatmul.mubr.bf16.gmra.mrb[0].mxu0 %v3802
    %v3838 = vpop.f32.mrb[0].mxu0
    %v3839 = vadd.f32 0.0, %v3838
    %v3840 = vpop.f32.mrb[0].mxu0
    %v3841 = vpop.f32.mrb[0].mxu0
    %v3842 = vadd.f32 0.0, %v3841
    %v3843 = vpop.f32.mrb[0].mxu0
    %3844 = vdwg.mxu0
    %v3845 = vpack.c.bf16 %v3795, %v3792
    %v3846 = vpack.c.bf16 %v3842, %v3839
    %v3851 = vunpack.c.l.b16 %v2957
    %v3852 = vunpack.c.l.b16 %v2958
    %v3853 = vunpack.c.l.b16 %v2959
    %v3854 = vunpack.c.l.b16 %v2960
    %v3855 = vpack.c.b16 %v3852, %v3851
    %v3856 = vpack.c.b16 %v3854, %v3853
    %v3860 = vsel %vm539, %v3845, 0
    %v3863 = vsel %vm539, %v3846, 0
    %3865 = vmatprep.subr.bf16.mxu0 0
    %3866 = vmatpush1.bf16.msra.mxu0 %v3855
    %3867 = vmatprep.subr.bf16.mxu0 0
    %3868 = vmatpush1.bf16.msra.mxu0 %v3856
    %3869 = vmatprep.subr.bf16.mxu0 0
    %3870 = vmatpush1.bf16.msra.mxu0 0
    %3871 = vmatprep.subr.bf16.mxu0 0
    %3872 = vmatpush1.bf16.msra.mxu0 0
    %3873 = vmatprep.subr.bf16.mxu0 0
    %3874 = vmatpush1.bf16.msra.mxu0 0
    %3875 = vmatprep.subr.bf16.mxu0 0
    %3876 = vmatpush1.bf16.msra.mxu0 0
    %3877 = vmatprep.subr.bf16.mxu0 0
    %3878 = vmatpush1.bf16.msra.mxu0 0
    %3879 = vmatprep.subr.bf16.mxu0 0
    %3880 = vmatpush1.bf16.msra.mxu0 0
    %3881 = vmatprep.subr.bf16.mxu0 0
    %3882 = vmatpush1.bf16.msra.mxu0 0
    %3883 = vmatprep.subr.bf16.mxu0 0
    %3884 = vmatpush1.bf16.msra.mxu0 0
    %3885 = vmatprep.subr.bf16.mxu0 0
    %3886 = vmatpush1.bf16.msra.mxu0 0
    %3887 = vmatprep.subr.bf16.mxu0 0
    %3888 = vmatpush1.bf16.msra.mxu0 0
    %3889 = vmatprep.subr.bf16.mxu0 0
    %3890 = vmatpush1.bf16.msra.mxu0 0
    %3891 = vmatprep.subr.bf16.mxu0 0
    %3892 = vmatpush1.bf16.msra.mxu0 0
    %3893 = vmatprep.subr.bf16.mxu0 0
    %3894 = vmatpush1.bf16.msra.mxu0 0
    %3895 = vmatprep.subr.bf16.mxu0 0
    %3896 = vmatpush1.bf16.msra.mxu0 0
    %3897 = vmatprep.mubr.bf16.mxu0 0
    %3898 = vmatmul.mubr.bf16.gmra.mrb[0].mxu0 %v3860
    %v3899 = vpop.f32.mrb[0].mxu0
    %v3900 = vadd.f32 0.0, %v3899
    %v3901 = vpop.f32.mrb[0].mxu0
    %v3902 = vpop.f32.mrb[0].mxu0
    %v3903 = vadd.f32 0.0, %v3902
    %v3904 = vpop.f32.mrb[0].mxu0
    %3905 = vmatprep.mubr.bf16.mxu0 0
    %3906 = vmatmul.mubr.bf16.gmra.mrb[0].mxu0 %v3863
    %v3907 = vpop.f32.mrb[0].mxu0
    %v3908 = vadd.f32 0.0, %v3907
    %v3909 = vpop.f32.mrb[0].mxu0
    %v3910 = vpop.f32.mrb[0].mxu0
    %v3911 = vadd.f32 0.0, %v3910
    %v3912 = vpop.f32.mrb[0].mxu0
    %3913 = vdwg.mxu0
    %v3914 = vadd.f32 %v3581, %v3900
    %v3915 = vadd.f32 %v3584, %v3903
    %v3916 = vadd.f32 %v3589, %v3908
    %v3917 = vadd.f32 %v3592, %v3911
    %3918 = vrot.lane.b32.xlu0 %v2942, 32
    %v3919 = vpop.permute.xlu0 %3918
    %3920 = vrot.lane.b32.xlu0 %v2943, 32
    %v3921 = vpop.permute.xlu0 %3920
    %v3923 = vsel %vm539, %v3919, 0
    %v3926 = vsel %vm539, %v3921, 0
    %3928 = vmatprep.subr.bf16.mxu0 0
    %3929 = vmatpush1.bf16.xpose.msra.mxu0 %v3926
    %3930 = vmatprep.subr.bf16.mxu0 0
    %3931 = vmatpush1.bf16.xpose.msra.mxu0 0
    %3932 = vmatprep.subr.bf16.mxu0 0
    %3933 = vmatpush1.bf16.xpose.msra.mxu0 0
    %3934 = vmatprep.subr.bf16.mxu0 0
    %3935 = vmatpush1.bf16.xpose.msra.mxu0 0
    %3936 = vmatprep.subr.bf16.mxu0 0
    %3937 = vmatpush1.bf16.xpose.msra.mxu0 0
    %3938 = vmatprep.subr.bf16.mxu0 0
    %3939 = vmatpush1.bf16.xpose.msra.mxu0 0
    %3940 = vmatprep.subr.bf16.mxu0 0
    %3941 = vmatpush1.bf16.xpose.msra.mxu0 0
    %3942 = vmatprep.subr.bf16.mxu0 0
    %3943 = vmatpush1.bf16.xpose.msra.mxu0 0
    %3944 = vmatprep.subr.bf16.mxu0 0
    %3945 = vmatpush1.bf16.xpose.msra.mxu0 0
    %3946 = vmatprep.subr.bf16.mxu0 0
    %3947 = vmatpush1.bf16.xpose.msra.mxu0 0
    %3948 = vmatprep.subr.bf16.mxu0 0
    %3949 = vmatpush1.bf16.xpose.msra.mxu0 0
    %3950 = vmatprep.subr.bf16.mxu0 0
    %3951 = vmatpush1.bf16.xpose.msra.mxu0 0
    %3952 = vmatprep.subr.bf16.mxu0 0
    %3953 = vmatpush1.bf16.xpose.msra.mxu0 0
    %3954 = vmatprep.subr.bf16.mxu0 0
    %3955 = vmatpush1.bf16.xpose.msra.mxu0 0
    %3956 = vmatprep.subr.bf16.mxu0 0
    %3957 = vmatpush1.bf16.xpose.msra.mxu0 0
    %3958 = vmatprep.subr.bf16.mxu0 0
    %3959 = vmatpush1.bf16.xpose.msra.mxu0 0
    %3960 = vmatprep.mubr.bf16.mxu0 0
    %3961 = vmatmul.mubr.bf16.gmra.mrb[0].mxu0 %v3923
    %v3962 = vpop.f32.mrb[0].mxu0
    %v3963 = vadd.f32 0.0, %v3962
    %v3964 = vpop.f32.mrb[0].mxu0
    %v3965 = vpop.f32.mrb[0].mxu0
    %v3966 = vadd.f32 0.0, %v3965
    %v3967 = vpop.f32.mrb[0].mxu0
    %3968 = vdwg.mxu0
    %3969 = vrot.lane.b32.xlu0 %v2945, 32
    %v3970 = vpop.permute.xlu0 %3969
    %3971 = vrot.lane.b32.xlu0 %v2946, 32
    %v3972 = vpop.permute.xlu0 %3971
    %v3974 = vsel %vm539, %v3970, 0
    %v3977 = vsel %vm539, %v3972, 0
    %3979 = vmatprep.subr.bf16.mxu0 0
    %3980 = vmatpush1.bf16.xpose.msra.mxu0 %v3977
    %3981 = vmatprep.subr.bf16.mxu0 0
    %3982 = vmatpush1.bf16.xpose.msra.mxu0 0
    %3983 = vmatprep.subr.bf16.mxu0 0
    %3984 = vmatpush1.bf16.xpose.msra.mxu0 0
    %3985 = vmatprep.subr.bf16.mxu0 0
    %3986 = vmatpush1.bf16.xpose.msra.mxu0 0
    %3987 = vmatprep.subr.bf16.mxu0 0
    %3988 = vmatpush1.bf16.xpose.msra.mxu0 0
    %3989 = vmatprep.subr.bf16.mxu0 0
    %3990 = vmatpush1.bf16.xpose.msra.mxu0 0
    %3991 = vmatprep.subr.bf16.mxu0 0
    %3992 = vmatpush1.bf16.xpose.msra.mxu0 0
    %3993 = vmatprep.subr.bf16.mxu0 0
    %3994 = vmatpush1.bf16.xpose.msra.mxu0 0
    %3995 = vmatprep.subr.bf16.mxu0 0
    %3996 = vmatpush1.bf16.xpose.msra.mxu0 0
    %3997 = vmatprep.subr.bf16.mxu0 0
    %3998 = vmatpush1.bf16.xpose.msra.mxu0 0
    %3999 = vmatprep.subr.bf16.mxu0 0
    %4000 = vmatpush1.bf16.xpose.msra.mxu0 0
    %4001 = vmatprep.subr.bf16.mxu0 0
    %4002 = vmatpush1.bf16.xpose.msra.mxu0 0
    %4003 = vmatprep.subr.bf16.mxu0 0
    %4004 = vmatpush1.bf16.xpose.msra.mxu0 0
    %4005 = vmatprep.subr.bf16.mxu0 0
    %4006 = vmatpush1.bf16.xpose.msra.mxu0 0
    %4007 = vmatprep.subr.bf16.mxu0 0
    %4008 = vmatpush1.bf16.xpose.msra.mxu0 0
    %4009 = vmatprep.subr.bf16.mxu0 0
    %4010 = vmatpush1.bf16.xpose.msra.mxu0 0
    %4011 = vmatprep.mubr.bf16.mxu0 0
    %4012 = vmatmul.mubr.bf16.gmra.mrb[0].mxu0 %v3974
    %v4013 = vpop.f32.mrb[0].mxu0
    %v4014 = vadd.f32 0.0, %v4013
    %v4015 = vpop.f32.mrb[0].mxu0
    %v4016 = vpop.f32.mrb[0].mxu0
    %v4017 = vadd.f32 0.0, %v4016
    %v4018 = vpop.f32.mrb[0].mxu0
    %4019 = vdwg.mxu0
    %v4020 = vmul.f32 %v3963, 0.17677669
    %v4021 = vmul.f32 %v3966, 0.17677669
    %v4022 = vmul.f32 %v4014, 0.17677669
    %v4023 = vmul.f32 %v4017, 0.17677669
    %v4024 = vadd.f32 %v4020, %v184
    %v4025 = vadd.f32 %v4021, %v185
    %v4026 = vadd.f32 %v4022, %v184
    %v4027 = vadd.f32 %v4023, %v185
    %v4028 = vsel %vm642, %v4024, -inf
    %4029 = vmax.xlane.f32.xlu0 %v4028
    %v4030 = vpop.xlane.xlu0 %4029
    %v4031 = vsel %vm642, %v4025, -inf
    %4032 = vmax.xlane.f32.xlu0 %v4031
    %v4033 = vpop.xlane.xlu0 %4032
    %v4034 = vsel %vm642, %v4026, -inf
    %4035 = vmax.xlane.f32.xlu0 %v4034
    %v4036 = vpop.xlane.xlu0 %4035
    %v4037 = vsel %vm642, %v4027, -inf
    %4038 = vmax.xlane.f32.xlu0 %v4037
    %v4039 = vpop.xlane.xlu0 %4038
    %v4040 = vsub.f32 %v4024, %v4030
    %v4041 = vsub.f32 %v4025, %v4033
    %v4042 = vsub.f32 %v4026, %v4036
    %v4043 = vsub.f32 %v4027, %v4039
    %v4044 = vmul.f32 %v4040, 1.442695
    %v4045 = vpow.pop %v4044
    %v4046 = vmul.f32 %v4041, 1.442695
    %v4047 = vpow.pop %v4046
    %v4048 = vmul.f32 %v4042, 1.442695
    %v4049 = vpow.pop %v4048
    %v4050 = vmul.f32 %v4043, 1.442695
    %v4051 = vpow.pop %v4050
    %v4052 = vsel %vm642, %v4045, 0.0
    %4053 = vadd.xlane.f32.xlu0 %v4052
    %v4054 = vpop.xlane.xlu0 %4053
    %v4055 = vsel %vm642, %v4047, 0.0
    %4056 = vadd.xlane.f32.xlu0 %v4055
    %v4057 = vpop.xlane.xlu0 %4056
    %v4058 = vsel %vm642, %v4049, 0.0
    %4059 = vadd.xlane.f32.xlu0 %v4058
    %v4060 = vpop.xlane.xlu0 %4059
    %v4061 = vsel %vm642, %v4051, 0.0
    %4062 = vadd.xlane.f32.xlu0 %v4061
    %v4063 = vpop.xlane.xlu0 %4062
    %v4064 = vrcp.pop %v4054
    %v4065 = vmul.f32 %v4045, %v4064
    %v4066 = vrcp.pop %v4057
    %v4067 = vmul.f32 %v4047, %v4066
    %v4068 = vrcp.pop %v4060
    %v4069 = vmul.f32 %v4049, %v4068
    %v4070 = vrcp.pop %v4063
    %v4071 = vmul.f32 %v4051, %v4070
    %v4072 = vpack.c.bf16 %v4067, %v4065
    %v4073 = vpack.c.bf16 %v4071, %v4069
    %4074 = vrot.lane.b32.xlu0 %v2944, 32
    %v4075 = vpop.permute.xlu0 %4074
    %v4078 = vsel %vm642, %v4072, 0
    %4080 = vmatprep.subr.bf16.mxu0 0
    %4081 = vmatpush1.bf16.msra.mxu0 %v4075
    %4082 = vmatprep.subr.bf16.mxu0 0
    %4083 = vmatpush1.bf16.msra.mxu0 0
    %4084 = vmatprep.subr.bf16.mxu0 0
    %4085 = vmatpush1.bf16.msra.mxu0 0
    %4086 = vmatprep.subr.bf16.mxu0 0
    %4087 = vmatpush1.bf16.msra.mxu0 0
    %4088 = vmatprep.subr.bf16.mxu0 0
    %4089 = vmatpush1.bf16.msra.mxu0 0
    %4090 = vmatprep.subr.bf16.mxu0 0
    %4091 = vmatpush1.bf16.msra.mxu0 0
    %4092 = vmatprep.subr.bf16.mxu0 0
    %4093 = vmatpush1.bf16.msra.mxu0 0
    %4094 = vmatprep.subr.bf16.mxu0 0
    %4095 = vmatpush1.bf16.msra.mxu0 0
    %4096 = vmatprep.subr.bf16.mxu0 0
    %4097 = vmatpush1.bf16.msra.mxu0 0
    %4098 = vmatprep.subr.bf16.mxu0 0
    %4099 = vmatpush1.bf16.msra.mxu0 0
    %4100 = vmatprep.subr.bf16.mxu0 0
    %4101 = vmatpush1.bf16.msra.mxu0 0
    %4102 = vmatprep.subr.bf16.mxu0 0
    %4103 = vmatpush1.bf16.msra.mxu0 0
    %4104 = vmatprep.subr.bf16.mxu0 0
    %4105 = vmatpush1.bf16.msra.mxu0 0
    %4106 = vmatprep.subr.bf16.mxu0 0
    %4107 = vmatpush1.bf16.msra.mxu0 0
    %4108 = vmatprep.subr.bf16.mxu0 0
    %4109 = vmatpush1.bf16.msra.mxu0 0
    %4110 = vmatprep.subr.bf16.mxu0 0
    %4111 = vmatpush1.bf16.msra.mxu0 0
    %4112 = vmatprep.mubr.bf16.mxu0 0
    %4113 = vmatmul.mubr.bf16.gmra.mrb[0].mxu0 %v4078
    %v4114 = vpop.f32.mrb[0].mxu0
    %v4115 = vadd.f32 0.0, %v4114
    %v4116 = vpop.f32.mrb[0].mxu0
    %v4117 = vpop.f32.mrb[0].mxu0
    %v4118 = vadd.f32 0.0, %v4117
    %v4119 = vpop.f32.mrb[0].mxu0
    %4120 = vdwg.mxu0
    %4121 = vrot.lane.b32.xlu0 %v2947, 32
    %v4122 = vpop.permute.xlu0 %4121
    %v4125 = vsel %vm642, %v4073, 0
    %4127 = vmatprep.subr.bf16.mxu0 0
    %4128 = vmatpush1.bf16.msra.mxu0 %v4122
    %4129 = vmatprep.subr.bf16.mxu0 0
    %4130 = vmatpush1.bf16.msra.mxu0 0
    %4131 = vmatprep.subr.bf16.mxu0 0
    %4132 = vmatpush1.bf16.msra.mxu0 0
    %4133 = vmatprep.subr.bf16.mxu0 0
    %4134 = vmatpush1.bf16.msra.mxu0 0
    %4135 = vmatprep.subr.bf16.mxu0 0
    %4136 = vmatpush1.bf16.msra.mxu0 0
    %4137 = vmatprep.subr.bf16.mxu0 0
    %4138 = vmatpush1.bf16.msra.mxu0 0
    %4139 = vmatprep.subr.bf16.mxu0 0
    %4140 = vmatpush1.bf16.msra.mxu0 0
    %4141 = vmatprep.subr.bf16.mxu0 0
    %4142 = vmatpush1.bf16.msra.mxu0 0
    %4143 = vmatprep.subr.bf16.mxu0 0
    %4144 = vmatpush1.bf16.msra.mxu0 0
    %4145 = vmatprep.subr.bf16.mxu0 0
    %4146 = vmatpush1.bf16.msra.mxu0 0
    %4147 = vmatprep.subr.bf16.mxu0 0
    %4148 = vmatpush1.bf16.msra.mxu0 0
    %4149 = vmatprep.subr.bf16.mxu0 0
    %4150 = vmatpush1.bf16.msra.mxu0 0
    %4151 = vmatprep.subr.bf16.mxu0 0
    %4152 = vmatpush1.bf16.msra.mxu0 0
    %4153 = vmatprep.subr.bf16.mxu0 0
    %4154 = vmatpush1.bf16.msra.mxu0 0
    %4155 = vmatprep.subr.bf16.mxu0 0
    %4156 = vmatpush1.bf16.msra.mxu0 0
    %4157 = vmatprep.subr.bf16.mxu0 0
    %4158 = vmatpush1.bf16.msra.mxu0 0
    %4159 = vmatprep.mubr.bf16.mxu0 0
    %4160 = vmatmul.mubr.bf16.gmra.mrb[0].mxu0 %v4125
    %v4161 = vpop.f32.mrb[0].mxu0
    %v4162 = vadd.f32 0.0, %v4161
    %v4163 = vpop.f32.mrb[0].mxu0
    %v4164 = vpop.f32.mrb[0].mxu0
    %v4165 = vadd.f32 0.0, %v4164
    %v4166 = vpop.f32.mrb[0].mxu0
    %4167 = vdwg.mxu0
    %v4168 = vpack.c.bf16 %v4118, %v4115
    %v4169 = vpack.c.bf16 %v4165, %v4162
    %v4174 = vunpack.c.l.b16 %v2961
    %v4175 = vunpack.c.l.b16 %v2962
    %v4176 = vunpack.c.l.b16 %v2963
    %v4177 = vunpack.c.l.b16 %v2964
    %v4178 = vpack.c.b16 %v4175, %v4174
    %v4179 = vpack.c.b16 %v4177, %v4176
    %v4183 = vsel %vm539, %v4168, 0
    %v4186 = vsel %vm539, %v4169, 0
    %4188 = vmatprep.subr.bf16.mxu0 0
    %4189 = vmatpush1.bf16.msra.mxu0 %v4178
    %4190 = vmatprep.subr.bf16.mxu0 0
    %4191 = vmatpush1.bf16.msra.mxu0 %v4179
    %4192 = vmatprep.subr.bf16.mxu0 0
    %4193 = vmatpush1.bf16.msra.mxu0 0
    %4194 = vmatprep.subr.bf16.mxu0 0
    %4195 = vmatpush1.bf16.msra.mxu0 0
    %4196 = vmatprep.subr.bf16.mxu0 0
    %4197 = vmatpush1.bf16.msra.mxu0 0
    %4198 = vmatprep.subr.bf16.mxu0 0
    %4199 = vmatpush1.bf16.msra.mxu0 0
    %4200 = vmatprep.subr.bf16.mxu0 0
    %4201 = vmatpush1.bf16.msra.mxu0 0
    %4202 = vmatprep.subr.bf16.mxu0 0
    %4203 = vmatpush1.bf16.msra.mxu0 0
    %4204 = vmatprep.subr.bf16.mxu0 0
    %4205 = vmatpush1.bf16.msra.mxu0 0
    %4206 = vmatprep.subr.bf16.mxu0 0
    %4207 = vmatpush1.bf16.msra.mxu0 0
    %4208 = vmatprep.subr.bf16.mxu0 0
    %4209 = vmatpush1.bf16.msra.mxu0 0
    %4210 = vmatprep.subr.bf16.mxu0 0
    %4211 = vmatpush1.bf16.msra.mxu0 0
    %4212 = vmatprep.subr.bf16.mxu0 0
    %4213 = vmatpush1.bf16.msra.mxu0 0
    %4214 = vmatprep.subr.bf16.mxu0 0
    %4215 = vmatpush1.bf16.msra.mxu0 0
    %4216 = vmatprep.subr.bf16.mxu0 0
    %4217 = vmatpush1.bf16.msra.mxu0 0
    %4218 = vmatprep.subr.bf16.mxu0 0
    %4219 = vmatpush1.bf16.msra.mxu0 0
    %4220 = vmatprep.mubr.bf16.mxu0 0
    %4221 = vmatmul.mubr.bf16.gmra.mrb[0].mxu0 %v4183
    %v4222 = vpop.f32.mrb[0].mxu0
    %v4223 = vadd.f32 0.0, %v4222
    %v4224 = vpop.f32.mrb[0].mxu0
    %v4225 = vpop.f32.mrb[0].mxu0
    %v4226 = vadd.f32 0.0, %v4225
    %v4227 = vpop.f32.mrb[0].mxu0
    %4228 = vmatprep.mubr.bf16.mxu0 0
    %4229 = vmatmul.mubr.bf16.gmra.mrb[0].mxu0 %v4186
    %v4230 = vpop.f32.mrb[0].mxu0
    %v4231 = vadd.f32 0.0, %v4230
    %v4232 = vpop.f32.mrb[0].mxu0
    %v4233 = vpop.f32.mrb[0].mxu0
    %v4234 = vadd.f32 0.0, %v4233
    %v4235 = vpop.f32.mrb[0].mxu0
    %4236 = vdwg.mxu0
    %v4237 = vadd.f32 %v3914, %v4223
    %v4238 = vadd.f32 %v3915, %v4226
    %v4239 = vadd.f32 %v3916, %v4231
    %v4240 = vadd.f32 %v3917, %v4234
    %v4241 = vadd.f32 %v2605, %v4237
    %v4242 = vadd.f32 %v2606, %v4238
    %v4243 = vadd.f32 %v2607, %v4239
    %v4244 = vadd.f32 %v2608, %v4240
    %s4245 = scalar_lea.vmem %s5, 1
    %v4246 = vld [vmem:[%s4245] sm:$0x1]
    %v4248 = vlaneseq
    %v4249 = vshrl.u32 %v4248, 7
    %v4250 = vsub.s32 0, %v4249
    %v4251 = vrot.slane %v4246, %v4250
    %v4253 = vadd.f32 %v4241, %v4251
    %v4254 = vadd.f32 %v4242, %v4251
    %v4255 = vadd.f32 %v4243, %v4251
    %v4256 = vadd.f32 %v4244, %v4251
    %s4257 = scalar_lea.vmem [#allocation5], 1
    %v4258 = vld [vmem:[%s4257] sm:$0x1]
    %s4259 = scalar_lea.vmem [#allocation7], 1
    %v4260 = vld [vmem:[%s4259] sm:$0x1]
    %4261 = vadd.xlane.f32.xlu0 %v4253
    %v4262 = vpop.xlane.xlu0 %4261
    %4263 = vadd.xlane.f32.xlu0 %v4254
    %v4264 = vpop.xlane.xlu0 %4263
    %4265 = vadd.xlane.f32.xlu0 %v4255
    %v4266 = vpop.xlane.xlu0 %4265
    %4267 = vadd.xlane.f32.xlu0 %v4256
    %v4268 = vpop.xlane.xlu0 %4267
    %v4269 = vmul.f32 %v4262, %v196
    %v4270 = vmul.f32 %v4264, %v196
    %v4271 = vmul.f32 %v4266, %v196
    %v4272 = vmul.f32 %v4268, %v196
    %v4273 = vsub.f32 %v4253, %v4269
    %v4274 = vsub.f32 %v4254, %v4270
    %v4275 = vsub.f32 %v4255, %v4271
    %v4276 = vsub.f32 %v4256, %v4272
    %v4277 = vmul.f32 %v4273, %v4273
    %v4278 = vmul.f32 %v4274, %v4274
    %v4279 = vmul.f32 %v4275, %v4275
    %v4280 = vmul.f32 %v4276, %v4276
    %4281 = vadd.xlane.f32.xlu0 %v4277
    %v4282 = vpop.xlane.xlu0 %4281
    %4283 = vadd.xlane.f32.xlu0 %v4278
    %v4284 = vpop.xlane.xlu0 %4283
    %4285 = vadd.xlane.f32.xlu0 %v4279
    %v4286 = vpop.xlane.xlu0 %4285
    %4287 = vadd.xlane.f32.xlu0 %v4280
    %v4288 = vpop.xlane.xlu0 %4287
    %v4289 = vmul.f32 %v4282, %v196
    %v4290 = vmul.f32 %v4284, %v196
    %v4291 = vmul.f32 %v4286, %v196
    %v4292 = vmul.f32 %v4288, %v196
    %v4293 = vadd.f32 %v4289, 1e-05
    %v4294 = vadd.f32 %v4290, 1e-05
    %v4295 = vadd.f32 %v4291, 1e-05
    %v4296 = vadd.f32 %v4292, 1e-05
    %v4297 = vrsqrt.pop %v4293
    %v4298 = vrsqrt.pop %v4294
    %v4299 = vrsqrt.pop %v4295
    %v4300 = vrsqrt.pop %v4296
    %v4301 = vmul.f32 %v4273, %v4297
    %v4302 = vmul.f32 %v4274, %v4298
    %v4303 = vmul.f32 %v4275, %v4299
    %v4304 = vmul.f32 %v4276, %v4300
    %v4306 = vlaneseq
    %v4307 = vshrl.u32 %v4306, 7
    %v4308 = vsub.s32 0, %v4307
    %v4309 = vrot.slane %v4258, %v4308
    %v4311 = vmul.f32 %v4301, %v4309
    %v4312 = vmul.f32 %v4302, %v4309
    %v4313 = vmul.f32 %v4303, %v4309
    %v4314 = vmul.f32 %v4304, %v4309
    %v4316 = vlaneseq
    %v4317 = vshrl.u32 %v4316, 7
    %v4318 = vsub.s32 0, %v4317
    %v4319 = vrot.slane %v4260, %v4318
    %v4321 = vadd.f32 %v4311, %v4319
    %v4322 = vadd.f32 %v4312, %v4319
    %v4323 = vadd.f32 %v4313, %v4319
    %v4324 = vadd.f32 %v4314, %v4319
    %v4325 = vpack.c.bf16 %v4322, %v4321
    %v4326 = vpack.c.bf16 %v4324, %v4323
    %s4327 = scalar_lea.vmem [#allocation8], 256
    %v4328 = vld [vmem:[%s4327] sm:$0xff]
    %v4329 = vld [vmem:[%s4327 + $0x8] sm:$0xff]
    %v4330 = vld [vmem:[%s4327 + $0x10] sm:$0xff]
    %v4331 = vld [vmem:[%s4327 + $0x18] sm:$0xff]
    %v4332 = vld [vmem:[%s4327 + $0x20] sm:$0xff]
    %v4333 = vld [vmem:[%s4327 + $0x28] sm:$0xff]
    %v4334 = vld [vmem:[%s4327 + $0x30] sm:$0xff]
    %v4335 = vld [vmem:[%s4327 + $0x38] sm:$0xff]
    %v4336 = vld [vmem:[%s4327 + $0x40] sm:$0xff]
    %v4337 = vld [vmem:[%s4327 + $0x48] sm:$0xff]
    %v4338 = vld [vmem:[%s4327 + $0x50] sm:$0xff]
    %v4339 = vld [vmem:[%s4327 + $0x58] sm:$0xff]
    %v4340 = vld [vmem:[%s4327 + $0x60] sm:$0xff]
    %v4341 = vld [vmem:[%s4327 + $0x68] sm:$0xff]
    %v4342 = vld [vmem:[%s4327 + $0x70] sm:$0xff]
    %v4343 = vld [vmem:[%s4327 + $0x78] sm:$0xff]
    %v4344 = vld [vmem:[%s4327 + $0x80] sm:$0xff]
    %v4345 = vld [vmem:[%s4327 + $0x88] sm:$0xff]
    %v4346 = vld [vmem:[%s4327 + $0x90] sm:$0xff]
    %v4347 = vld [vmem:[%s4327 + $0x98] sm:$0xff]
    %v4348 = vld [vmem:[%s4327 + $0xa0] sm:$0xff]
    %v4349 = vld [vmem:[%s4327 + $0xa8] sm:$0xff]
    %v4350 = vld [vmem:[%s4327 + $0xb0] sm:$0xff]
    %v4351 = vld [vmem:[%s4327 + $0xb8] sm:$0xff]
    %v4352 = vld [vmem:[%s4327 + $0xc0] sm:$0xff]
    %v4353 = vld [vmem:[%s4327 + $0xc8] sm:$0xff]
    %v4354 = vld [vmem:[%s4327 + $0xd0] sm:$0xff]
    %v4355 = vld [vmem:[%s4327 + $0xd8] sm:$0xff]
    %v4356 = vld [vmem:[%s4327 + $0xe0] sm:$0xff]
    %v4357 = vld [vmem:[%s4327 + $0xe8] sm:$0xff]
    %v4358 = vld [vmem:[%s4327 + $0xf0] sm:$0xff]
    %v4359 = vld [vmem:[%s4327 + $0xf8] sm:$0xff]
    %s4360 = scalar_lea.vmem [#allocation10], 4
    %v4361 = vld [vmem:[%s4360] sm:$0xf]
    %v4363 = vlaneseq
    %v4364 = vshrl.u32 %v4363, 7
    %v4365 = vsub.s32 0, %v4364
    %v4366 = vrot.slane %v4361, %v4365
    %v4367 = vlaneseq
    %v4368 = vshrl.u32 %v4367, 7
    %v4369 = vsub.s32 1, %v4368
    %v4370 = vrot.slane %v4361, %v4369
    %v4371 = vlaneseq
    %v4372 = vshrl.u32 %v4371, 7
    %v4373 = vsub.s32 2, %v4372
    %v4374 = vrot.slane %v4361, %v4373
    %v4375 = vlaneseq
    %v4376 = vshrl.u32 %v4375, 7
    %v4377 = vsub.s32 3, %v4376
    %v4378 = vrot.slane %v4361, %v4377
    %v4415 = vunpack.c.l.b16 %v4328
    %v4416 = vunpack.c.h.b16 %v4328
    %v4417 = vunpack.c.l.b16 %v4329
    %v4418 = vunpack.c.h.b16 %v4329
    %v4419 = vunpack.c.l.b16 %v4330
    %v4420 = vunpack.c.h.b16 %v4330
    %v4421 = vunpack.c.l.b16 %v4331
    %v4422 = vunpack.c.h.b16 %v4331
    %v4423 = vunpack.c.l.b16 %v4332
    %v4424 = vunpack.c.h.b16 %v4332
    %v4425 = vunpack.c.l.b16 %v4333
    %v4426 = vunpack.c.h.b16 %v4333
    %v4427 = vunpack.c.l.b16 %v4334
    %v4428 = vunpack.c.h.b16 %v4334
    %v4429 = vunpack.c.l.b16 %v4335
    %v4430 = vunpack.c.h.b16 %v4335
    %v4431 = vunpack.c.l.b16 %v4336
    %v4432 = vunpack.c.h.b16 %v4336
    %v4433 = vunpack.c.l.b16 %v4337
    %v4434 = vunpack.c.h.b16 %v4337
    %v4435 = vunpack.c.l.b16 %v4338
    %v4436 = vunpack.c.h.b16 %v4338
    %v4437 = vunpack.c.l.b16 %v4339
    %v4438 = vunpack.c.h.b16 %v4339
    %v4439 = vunpack.c.l.b16 %v4340
    %v4440 = vunpack.c.h.b16 %v4340
    %v4441 = vunpack.c.l.b16 %v4341
    %v4442 = vunpack.c.h.b16 %v4341
    %v4443 = vunpack.c.l.b16 %v4342
    %v4444 = vunpack.c.h.b16 %v4342
    %v4445 = vunpack.c.l.b16 %v4343
    %v4446 = vunpack.c.h.b16 %v4343
    %v4447 = vunpack.c.l.b16 %v4344
    %v4448 = vunpack.c.h.b16 %v4344
    %v4449 = vunpack.c.l.b16 %v4345
    %v4450 = vunpack.c.h.b16 %v4345
    %v4451 = vunpack.c.l.b16 %v4346
    %v4452 = vunpack.c.h.b16 %v4346
    %v4453 = vunpack.c.l.b16 %v4347
    %v4454 = vunpack.c.h.b16 %v4347
    %v4455 = vunpack.c.l.b16 %v4348
    %v4456 = vunpack.c.h.b16 %v4348
    %v4457 = vunpack.c.l.b16 %v4349
    %v4458 = vunpack.c.h.b16 %v4349
    %v4459 = vunpack.c.l.b16 %v4350
    %v4460 = vunpack.c.h.b16 %v4350
    %v4461 = vunpack.c.l.b16 %v4351
    %v4462 = vunpack.c.h.b16 %v4351
    %v4463 = vunpack.c.l.b16 %v4352
    %v4464 = vunpack.c.h.b16 %v4352
    %v4465 = vunpack.c.l.b16 %v4353
    %v4466 = vunpack.c.h.b16 %v4353
    %v4467 = vunpack.c.l.b16 %v4354
    %v4468 = vunpack.c.h.b16 %v4354
    %v4469 = vunpack.c.l.b16 %v4355
    %v4470 = vunpack.c.h.b16 %v4355
    %v4471 = vunpack.c.l.b16 %v4356
    %v4472 = vunpack.c.h.b16 %v4356
    %v4473 = vunpack.c.l.b16 %v4357
    %v4474 = vunpack.c.h.b16 %v4357
    %v4475 = vunpack.c.l.b16 %v4358
    %v4476 = vunpack.c.h.b16 %v4358
    %v4477 = vunpack.c.l.b16 %v4359
    %v4478 = vunpack.c.h.b16 %v4359
    %v4479 = vpack.c.b16 %v4419, %v4415
    %v4480 = vpack.c.b16 %v4420, %v4416
    %v4481 = vpack.c.b16 %v4421, %v4417
    %v4482 = vpack.c.b16 %v4422, %v4418
    %v4483 = vpack.c.b16 %v4427, %v4423
    %v4484 = vpack.c.b16 %v4428, %v4424
    %v4485 = vpack.c.b16 %v4429, %v4425
    %v4486 = vpack.c.b16 %v4430, %v4426
    %v4487 = vpack.c.b16 %v4435, %v4431
    %v4488 = vpack.c.b16 %v4436, %v4432
    %v4489 = vpack.c.b16 %v4437, %v4433
    %v4490 = vpack.c.b16 %v4438, %v4434
    %v4491 = vpack.c.b16 %v4443, %v4439
    %v4492 = vpack.c.b16 %v4444, %v4440
    %v4493 = vpack.c.b16 %v4445, %v4441
    %v4494 = vpack.c.b16 %v4446, %v4442
    %v4495 = vpack.c.b16 %v4451, %v4447
    %v4496 = vpack.c.b16 %v4452, %v4448
    %v4497 = vpack.c.b16 %v4453, %v4449
    %v4498 = vpack.c.b16 %v4454, %v4450
    %v4499 = vpack.c.b16 %v4459, %v4455
    %v4500 = vpack.c.b16 %v4460, %v4456
    %v4501 = vpack.c.b16 %v4461, %v4457
    %v4502 = vpack.c.b16 %v4462, %v4458
    %v4503 = vpack.c.b16 %v4467, %v4463
    %v4504 = vpack.c.b16 %v4468, %v4464
    %v4505 = vpack.c.b16 %v4469, %v4465
    %v4506 = vpack.c.b16 %v4470, %v4466
    %v4507 = vpack.c.b16 %v4475, %v4471
    %v4508 = vpack.c.b16 %v4476, %v4472
    %v4509 = vpack.c.b16 %v4477, %v4473
    %v4510 = vpack.c.b16 %v4478, %v4474
    %4543 = vmatprep.subr.bf16.mxu0 %v4480
    %4544 = vmatpush1.bf16.msra.mxu0 %v4479
    %4545 = vmatprep.subr.bf16.mxu0 %v4484
    %4546 = vmatpush1.bf16.msra.mxu0 %v4483
    %4547 = vmatprep.subr.bf16.mxu0 %v4488
    %4548 = vmatpush1.bf16.msra.mxu0 %v4487
    %4549 = vmatprep.subr.bf16.mxu0 %v4492
    %4550 = vmatpush1.bf16.msra.mxu0 %v4491
    %4551 = vmatprep.subr.bf16.mxu0 %v4496
    %4552 = vmatpush1.bf16.msra.mxu0 %v4495
    %4553 = vmatprep.subr.bf16.mxu0 %v4500
    %4554 = vmatpush1.bf16.msra.mxu0 %v4499
    %4555 = vmatprep.subr.bf16.mxu0 %v4504
    %4556 = vmatpush1.bf16.msra.mxu0 %v4503
    %4557 = vmatprep.subr.bf16.mxu0 %v4508
    %4558 = vmatpush1.bf16.msra.mxu0 %v4507
    %4559 = vmatprep.subr.bf16.mxu0 0
    %4560 = vmatpush1.bf16.msra.mxu0 0
    %4561 = vmatprep.subr.bf16.mxu0 0
    %4562 = vmatpush1.bf16.msra.mxu0 0
    %4563 = vmatprep.subr.bf16.mxu0 0
    %4564 = vmatpush1.bf16.msra.mxu0 0
    %4565 = vmatprep.subr.bf16.mxu0 0
    %4566 = vmatpush1.bf16.msra.mxu0 0
    %4567 = vmatprep.subr.bf16.mxu0 0
    %4568 = vmatpush1.bf16.msra.mxu0 0
    %4569 = vmatprep.subr.bf16.mxu0 0
    %4570 = vmatpush1.bf16.msra.mxu0 0
    %4571 = vmatprep.subr.bf16.mxu0 0
    %4572 = vmatpush1.bf16.msra.mxu0 0
    %4573 = vmatprep.subr.bf16.mxu0 0
    %4574 = vmatpush1.bf16.msra.mxu0 0
    %4575 = vmatprep.mubr.bf16.mxu0 0
    %4576 = vmatmul.mubr.bf16.gmra.mrb[0].mxu0 %v4325
    %v4577 = vpop.f32.mrb[0].mxu0
    %v4578 = vadd.f32 %v4366, %v4577
    %v4579 = vpop.f32.mrb[0].mxu0
    %v4580 = vadd.f32 %v4370, %v4579
    %v4581 = vpop.f32.mrb[0].mxu0
    %v4582 = vadd.f32 %v4366, %v4581
    %v4583 = vpop.f32.mrb[0].mxu0
    %v4584 = vadd.f32 %v4370, %v4583
    %4585 = vmatprep.mubr.bf16.mxu0 0
    %4586 = vmatmul.mubr.bf16.gmra.mrb[0].mxu0 %v4326
    %v4587 = vpop.f32.mrb[0].mxu0
    %v4588 = vadd.f32 %v4366, %v4587
    %v4589 = vpop.f32.mrb[0].mxu0
    %v4590 = vadd.f32 %v4370, %v4589
    %v4591 = vpop.f32.mrb[0].mxu0
    %v4592 = vadd.f32 %v4366, %v4591
    %v4593 = vpop.f32.mrb[0].mxu0
    %v4594 = vadd.f32 %v4370, %v4593
    %4595 = vdwg.mxu0
    %4596 = vmatprep.subr.bf16.mxu0 %v4482
    %4597 = vmatpush1.bf16.msra.mxu0 %v4481
    %4598 = vmatprep.subr.bf16.mxu0 %v4486
    %4599 = vmatpush1.bf16.msra.mxu0 %v4485
    %4600 = vmatprep.subr.bf16.mxu0 %v4490
    %4601 = vmatpush1.bf16.msra.mxu0 %v4489
    %4602 = vmatprep.subr.bf16.mxu0 %v4494
    %4603 = vmatpush1.bf16.msra.mxu0 %v4493
    %4604 = vmatprep.subr.bf16.mxu0 %v4498
    %4605 = vmatpush1.bf16.msra.mxu0 %v4497
    %4606 = vmatprep.subr.bf16.mxu0 %v4502
    %4607 = vmatpush1.bf16.msra.mxu0 %v4501
    %4608 = vmatprep.subr.bf16.mxu0 %v4506
    %4609 = vmatpush1.bf16.msra.mxu0 %v4505
    %4610 = vmatprep.subr.bf16.mxu0 %v4510
    %4611 = vmatpush1.bf16.msra.mxu0 %v4509
    %4612 = vmatprep.subr.bf16.mxu0 0
    %4613 = vmatpush1.bf16.msra.mxu0 0
    %4614 = vmatprep.subr.bf16.mxu0 0
    %4615 = vmatpush1.bf16.msra.mxu0 0
    %4616 = vmatprep.subr.bf16.mxu0 0
    %4617 = vmatpush1.bf16.msra.mxu0 0
    %4618 = vmatprep.subr.bf16.mxu0 0
    %4619 = vmatpush1.bf16.msra.mxu0 0
    %4620 = vmatprep.subr.bf16.mxu0 0
    %4621 = vmatpush1.bf16.msra.mxu0 0
    %4622 = vmatprep.subr.bf16.mxu0 0
    %4623 = vmatpush1.bf16.msra.mxu0 0
    %4624 = vmatprep.subr.bf16.mxu0 0
    %4625 = vmatpush1.bf16.msra.mxu0 0
    %4626 = vmatprep.subr.bf16.mxu0 0
    %4627 = vmatpush1.bf16.msra.mxu0 0
    %4628 = vmatprep.mubr.bf16.mxu0 0
    %4629 = vmatmul.mubr.bf16.gmra.mrb[0].mxu0 %v4325
    %v4630 = vpop.f32.mrb[0].mxu0
    %v4631 = vadd.f32 %v4374, %v4630
    %v4632 = vpop.f32.mrb[0].mxu0
    %v4633 = vadd.f32 %v4378, %v4632
    %v4634 = vpop.f32.mrb[0].mxu0
    %v4635 = vadd.f32 %v4374, %v4634
    %v4636 = vpop.f32.mrb[0].mxu0
    %v4637 = vadd.f32 %v4378, %v4636
    %4638 = vmatprep.mubr.bf16.mxu0 0
    %4639 = vmatmul.mubr.bf16.gmra.mrb[0].mxu0 %v4326
    %v4640 = vpop.f32.mrb[0].mxu0
    %v4641 = vadd.f32 %v4374, %v4640
    %v4642 = vpop.f32.mrb[0].mxu0
    %v4643 = vadd.f32 %v4378, %v4642
    %v4644 = vpop.f32.mrb[0].mxu0
    %v4645 = vadd.f32 %v4374, %v4644
    %v4646 = vpop.f32.mrb[0].mxu0
    %v4647 = vadd.f32 %v4378, %v4646
    %4648 = vdwg.mxu0
    %v4649 = vmax.f32 %v4578, 0.0
    %v4650 = vmax.f32 %v4580, 0.0
    %v4651 = vmax.f32 %v4631, 0.0
    %v4652 = vmax.f32 %v4633, 0.0
    %v4653 = vmax.f32 %v4582, 0.0
    %v4654 = vmax.f32 %v4584, 0.0
    %v4655 = vmax.f32 %v4635, 0.0
    %v4656 = vmax.f32 %v4637, 0.0
    %v4657 = vmax.f32 %v4588, 0.0
    %v4658 = vmax.f32 %v4590, 0.0
    %v4659 = vmax.f32 %v4641, 0.0
    %v4660 = vmax.f32 %v4643, 0.0
    %v4661 = vmax.f32 %v4592, 0.0
    %v4662 = vmax.f32 %v4594, 0.0
    %v4663 = vmax.f32 %v4645, 0.0
    %v4664 = vmax.f32 %v4647, 0.0
    %v4665 = vpack.c.bf16 %v4653, %v4649
    %v4666 = vpack.c.bf16 %v4654, %v4650
    %v4667 = vpack.c.bf16 %v4655, %v4651
    %v4668 = vpack.c.bf16 %v4656, %v4652
    %v4669 = vpack.c.bf16 %v4661, %v4657
    %v4670 = vpack.c.bf16 %v4662, %v4658
    %v4671 = vpack.c.bf16 %v4663, %v4659
    %v4672 = vpack.c.bf16 %v4664, %v4660
    %s4673 = scalar_lea.vmem [#allocation11], 256
    %v4674 = vld [vmem:[%s4673] sm:$0xf]
    %v4675 = vld [vmem:[%s4673 + $0x4] sm:$0xf]
    %v4676 = vld [vmem:[%s4673 + $0x8] sm:$0xf]
    %v4677 = vld [vmem:[%s4673 + $0xc] sm:$0xf]
    %v4678 = vld [vmem:[%s4673 + $0x10] sm:$0xf]
    %v4679 = vld [vmem:[%s4673 + $0x14] sm:$0xf]
    %v4680 = vld [vmem:[%s4673 + $0x18] sm:$0xf]
    %v4681 = vld [vmem:[%s4673 + $0x1c] sm:$0xf]
    %v4682 = vld [vmem:[%s4673 + $0x20] sm:$0xf]
    %v4683 = vld [vmem:[%s4673 + $0x24] sm:$0xf]
    %v4684 = vld [vmem:[%s4673 + $0x28] sm:$0xf]
    %v4685 = vld [vmem:[%s4673 + $0x2c] sm:$0xf]
    %v4686 = vld [vmem:[%s4673 + $0x30] sm:$0xf]
    %v4687 = vld [vmem:[%s4673 + $0x34] sm:$0xf]
    %v4688 = vld [vmem:[%s4673 + $0x38] sm:$0xf]
    %v4689 = vld [vmem:[%s4673 + $0x3c] sm:$0xf]
    %v4690 = vld [vmem:[%s4673 + $0x40] sm:$0xf]
    %v4691 = vld [vmem:[%s4673 + $0x44] sm:$0xf]
    %v4692 = vld [vmem:[%s4673 + $0x48] sm:$0xf]
    %v4693 = vld [vmem:[%s4673 + $0x4c] sm:$0xf]
    %v4694 = vld [vmem:[%s4673 + $0x50] sm:$0xf]
    %v4695 = vld [vmem:[%s4673 + $0x54] sm:$0xf]
    %v4696 = vld [vmem:[%s4673 + $0x58] sm:$0xf]
    %v4697 = vld [vmem:[%s4673 + $0x5c] sm:$0xf]
    %v4698 = vld [vmem:[%s4673 + $0x60] sm:$0xf]
    %v4699 = vld [vmem:[%s4673 + $0x64] sm:$0xf]
    %v4700 = vld [vmem:[%s4673 + $0x68] sm:$0xf]
    %v4701 = vld [vmem:[%s4673 + $0x6c] sm:$0xf]
    %v4702 = vld [vmem:[%s4673 + $0x70] sm:$0xf]
    %v4703 = vld [vmem:[%s4673 + $0x74] sm:$0xf]
    %v4704 = vld [vmem:[%s4673 + $0x78] sm:$0xf]
    %v4705 = vld [vmem:[%s4673 + $0x7c] sm:$0xf]
    %v4706 = vld [vmem:[%s4673 + $0x80] sm:$0xf]
    %v4707 = vld [vmem:[%s4673 + $0x84] sm:$0xf]
    %v4708 = vld [vmem:[%s4673 + $0x88] sm:$0xf]
    %v4709 = vld [vmem:[%s4673 + $0x8c] sm:$0xf]
    %v4710 = vld [vmem:[%s4673 + $0x90] sm:$0xf]
    %v4711 = vld [vmem:[%s4673 + $0x94] sm:$0xf]
    %v4712 = vld [vmem:[%s4673 + $0x98] sm:$0xf]
    %v4713 = vld [vmem:[%s4673 + $0x9c] sm:$0xf]
    %v4714 = vld [vmem:[%s4673 + $0xa0] sm:$0xf]
    %v4715 = vld [vmem:[%s4673 + $0xa4] sm:$0xf]
    %v4716 = vld [vmem:[%s4673 + $0xa8] sm:$0xf]
    %v4717 = vld [vmem:[%s4673 + $0xac] sm:$0xf]
    %v4718 = vld [vmem:[%s4673 + $0xb0] sm:$0xf]
    %v4719 = vld [vmem:[%s4673 + $0xb4] sm:$0xf]
    %v4720 = vld [vmem:[%s4673 + $0xb8] sm:$0xf]
    %v4721 = vld [vmem:[%s4673 + $0xbc] sm:$0xf]
    %v4722 = vld [vmem:[%s4673 + $0xc0] sm:$0xf]
    %v4723 = vld [vmem:[%s4673 + $0xc4] sm:$0xf]
    %v4724 = vld [vmem:[%s4673 + $0xc8] sm:$0xf]
    %v4725 = vld [vmem:[%s4673 + $0xcc] sm:$0xf]
    %v4726 = vld [vmem:[%s4673 + $0xd0] sm:$0xf]
    %v4727 = vld [vmem:[%s4673 + $0xd4] sm:$0xf]
    %v4728 = vld [vmem:[%s4673 + $0xd8] sm:$0xf]
    %v4729 = vld [vmem:[%s4673 + $0xdc] sm:$0xf]
    %v4730 = vld [vmem:[%s4673 + $0xe0] sm:$0xf]
    %v4731 = vld [vmem:[%s4673 + $0xe4] sm:$0xf]
    %v4732 = vld [vmem:[%s4673 + $0xe8] sm:$0xf]
    %v4733 = vld [vmem:[%s4673 + $0xec] sm:$0xf]
    %v4734 = vld [vmem:[%s4673 + $0xf0] sm:$0xf]
    %v4735 = vld [vmem:[%s4673 + $0xf4] sm:$0xf]
    %v4736 = vld [vmem:[%s4673 + $0xf8] sm:$0xf]
    %v4737 = vld [vmem:[%s4673 + $0xfc] sm:$0xf]
    %s4738 = scalar_lea.vmem [#allocation13], 1
    %v4739 = vld [vmem:[%s4738] sm:$0x1]
    %v4741 = vlaneseq
    %v4742 = vshrl.u32 %v4741, 7
    %v4743 = vsub.s32 0, %v4742
    %v4744 = vrot.slane %v4739, %v4743
    %v4810 = vunpack.c.l.b16 %v4674
    %v4811 = vunpack.c.l.b16 %v4675
    %v4812 = vunpack.c.l.b16 %v4676
    %v4813 = vunpack.c.l.b16 %v4677
    %v4814 = vunpack.c.l.b16 %v4678
    %v4815 = vunpack.c.l.b16 %v4679
    %v4816 = vunpack.c.l.b16 %v4680
    %v4817 = vunpack.c.l.b16 %v4681
    %v4818 = vunpack.c.l.b16 %v4682
    %v4819 = vunpack.c.l.b16 %v4683
    %v4820 = vunpack.c.l.b16 %v4684
    %v4821 = vunpack.c.l.b16 %v4685
    %v4822 = vunpack.c.l.b16 %v4686
    %v4823 = vunpack.c.l.b16 %v4687
    %v4824 = vunpack.c.l.b16 %v4688
    %v4825 = vunpack.c.l.b16 %v4689
    %v4826 = vunpack.c.l.b16 %v4690
    %v4827 = vunpack.c.l.b16 %v4691
    %v4828 = vunpack.c.l.b16 %v4692
    %v4829 = vunpack.c.l.b16 %v4693
    %v4830 = vunpack.c.l.b16 %v4694
    %v4831 = vunpack.c.l.b16 %v4695
    %v4832 = vunpack.c.l.b16 %v4696
    %v4833 = vunpack.c.l.b16 %v4697
    %v4834 = vunpack.c.l.b16 %v4698
    %v4835 = vunpack.c.l.b16 %v4699
    %v4836 = vunpack.c.l.b16 %v4700
    %v4837 = vunpack.c.l.b16 %v4701
    %v4838 = vunpack.c.l.b16 %v4702
    %v4839 = vunpack.c.l.b16 %v4703
    %v4840 = vunpack.c.l.b16 %v4704
    %v4841 = vunpack.c.l.b16 %v4705
    %v4842 = vunpack.c.l.b16 %v4706
    %v4843 = vunpack.c.l.b16 %v4707
    %v4844 = vunpack.c.l.b16 %v4708
    %v4845 = vunpack.c.l.b16 %v4709
    %v4846 = vunpack.c.l.b16 %v4710
    %v4847 = vunpack.c.l.b16 %v4711
    %v4848 = vunpack.c.l.b16 %v4712
    %v4849 = vunpack.c.l.b16 %v4713
    %v4850 = vunpack.c.l.b16 %v4714
    %v4851 = vunpack.c.l.b16 %v4715
    %v4852 = vunpack.c.l.b16 %v4716
    %v4853 = vunpack.c.l.b16 %v4717
    %v4854 = vunpack.c.l.b16 %v4718
    %v4855 = vunpack.c.l.b16 %v4719
    %v4856 = vunpack.c.l.b16 %v4720
    %v4857 = vunpack.c.l.b16 %v4721
    %v4858 = vunpack.c.l.b16 %v4722
    %v4859 = vunpack.c.l.b16 %v4723
    %v4860 = vunpack.c.l.b16 %v4724
    %v4861 = vunpack.c.l.b16 %v4725
    %v4862 = vunpack.c.l.b16 %v4726
    %v4863 = vunpack.c.l.b16 %v4727
    %v4864 = vunpack.c.l.b16 %v4728
    %v4865 = vunpack.c.l.b16 %v4729
    %v4866 = vunpack.c.l.b16 %v4730
    %v4867 = vunpack.c.l.b16 %v4731
    %v4868 = vunpack.c.l.b16 %v4732
    %v4869 = vunpack.c.l.b16 %v4733
    %v4870 = vunpack.c.l.b16 %v4734
    %v4871 = vunpack.c.l.b16 %v4735
    %v4872 = vunpack.c.l.b16 %v4736
    %v4873 = vunpack.c.l.b16 %v4737
    %v4874 = vpack.c.b16 %v4811, %v4810
    %v4875 = vpack.c.b16 %v4813, %v4812
    %v4876 = vpack.c.b16 %v4815, %v4814
    %v4877 = vpack.c.b16 %v4817, %v4816
    %v4878 = vpack.c.b16 %v4819, %v4818
    %v4879 = vpack.c.b16 %v4821, %v4820
    %v4880 = vpack.c.b16 %v4823, %v4822
    %v4881 = vpack.c.b16 %v4825, %v4824
    %v4882 = vpack.c.b16 %v4827, %v4826
    %v4883 = vpack.c.b16 %v4829, %v4828
    %v4884 = vpack.c.b16 %v4831, %v4830
    %v4885 = vpack.c.b16 %v4833, %v4832
    %v4886 = vpack.c.b16 %v4835, %v4834
    %v4887 = vpack.c.b16 %v4837, %v4836
    %v4888 = vpack.c.b16 %v4839, %v4838
    %v4889 = vpack.c.b16 %v4841, %v4840
    %v4890 = vpack.c.b16 %v4843, %v4842
    %v4891 = vpack.c.b16 %v4845, %v4844
    %v4892 = vpack.c.b16 %v4847, %v4846
    %v4893 = vpack.c.b16 %v4849, %v4848
    %v4894 = vpack.c.b16 %v4851, %v4850
    %v4895 = vpack.c.b16 %v4853, %v4852
    %v4896 = vpack.c.b16 %v4855, %v4854
    %v4897 = vpack.c.b16 %v4857, %v4856
    %v4898 = vpack.c.b16 %v4859, %v4858
    %v4899 = vpack.c.b16 %v4861, %v4860
    %v4900 = vpack.c.b16 %v4863, %v4862
    %v4901 = vpack.c.b16 %v4865, %v4864
    %v4902 = vpack.c.b16 %v4867, %v4866
    %v4903 = vpack.c.b16 %v4869, %v4868
    %v4904 = vpack.c.b16 %v4871, %v4870
    %v4905 = vpack.c.b16 %v4873, %v4872
    %4938 = vmatprep.subr.bf16.mxu0 0
    %4939 = vmatpush1.bf16.msra.mxu0 %v4874
    %4940 = vmatprep.subr.bf16.mxu0 0
    %4941 = vmatpush1.bf16.msra.mxu0 %v4875
    %4942 = vmatprep.subr.bf16.mxu0 0
    %4943 = vmatpush1.bf16.msra.mxu0 %v4876
    %4944 = vmatprep.subr.bf16.mxu0 0
    %4945 = vmatpush1.bf16.msra.mxu0 %v4877
    %4946 = vmatprep.subr.bf16.mxu0 0
    %4947 = vmatpush1.bf16.msra.mxu0 %v4878
    %4948 = vmatprep.subr.bf16.mxu0 0
    %4949 = vmatpush1.bf16.msra.mxu0 %v4879
    %4950 = vmatprep.subr.bf16.mxu0 0
    %4951 = vmatpush1.bf16.msra.mxu0 %v4880
    %4952 = vmatprep.subr.bf16.mxu0 0
    %4953 = vmatpush1.bf16.msra.mxu0 %v4881
    %4954 = vmatprep.subr.bf16.mxu0 0
    %4955 = vmatpush1.bf16.msra.mxu0 %v4882
    %4956 = vmatprep.subr.bf16.mxu0 0
    %4957 = vmatpush1.bf16.msra.mxu0 %v4883
    %4958 = vmatprep.subr.bf16.mxu0 0
    %4959 = vmatpush1.bf16.msra.mxu0 %v4884
    %4960 = vmatprep.subr.bf16.mxu0 0
    %4961 = vmatpush1.bf16.msra.mxu0 %v4885
    %4962 = vmatprep.subr.bf16.mxu0 0
    %4963 = vmatpush1.bf16.msra.mxu0 %v4886
    %4964 = vmatprep.subr.bf16.mxu0 0
    %4965 = vmatpush1.bf16.msra.mxu0 %v4887
    %4966 = vmatprep.subr.bf16.mxu0 0
    %4967 = vmatpush1.bf16.msra.mxu0 %v4888
    %4968 = vmatprep.subr.bf16.mxu0 0
    %4969 = vmatpush1.bf16.msra.mxu0 %v4889
    %4970 = vmatprep.mubr.bf16.mxu0 %v4666
    %4971 = vmatmul.mubr.bf16.gmra.mrb[0].mxu0 %v4665
    %v4972 = vpop.f32.mrb[0].mxu0
    %v4973 = vadd.f32 %v4744, %v4972
    %v4974 = vpop.f32.mrb[0].mxu0
    %v4975 = vpop.f32.mrb[0].mxu0
    %v4976 = vadd.f32 %v4744, %v4975
    %v4977 = vpop.f32.mrb[0].mxu0
    %4978 = vmatprep.mubr.bf16.mxu0 %v4670
    %4979 = vmatmul.mubr.bf16.gmra.mrb[0].mxu0 %v4669
    %v4980 = vpop.f32.mrb[0].mxu0
    %v4981 = vadd.f32 %v4744, %v4980
    %v4982 = vpop.f32.mrb[0].mxu0
    %v4983 = vpop.f32.mrb[0].mxu0
    %v4984 = vadd.f32 %v4744, %v4983
    %v4985 = vpop.f32.mrb[0].mxu0
    %4986 = vdwg.mxu0
    %4987 = vmatprep.subr.bf16.mxu0 0
    %4988 = vmatpush1.bf16.msra.mxu0 %v4890
    %4989 = vmatprep.subr.bf16.mxu0 0
    %4990 = vmatpush1.bf16.msra.mxu0 %v4891
    %4991 = vmatprep.subr.bf16.mxu0 0
    %4992 = vmatpush1.bf16.msra.mxu0 %v4892
    %4993 = vmatprep.subr.bf16.mxu0 0
    %4994 = vmatpush1.bf16.msra.mxu0 %v4893
    %4995 = vmatprep.subr.bf16.mxu0 0
    %4996 = vmatpush1.bf16.msra.mxu0 %v4894
    %4997 = vmatprep.subr.bf16.mxu0 0
    %4998 = vmatpush1.bf16.msra.mxu0 %v4895
    %4999 = vmatprep.subr.bf16.mxu0 0
    %5000 = vmatpush1.bf16.msra.mxu0 %v4896
    %5001 = vmatprep.subr.bf16.mxu0 0
    %5002 = vmatpush1.bf16.msra.mxu0 %v4897
    %5003 = vmatprep.subr.bf16.mxu0 0
    %5004 = vmatpush1.bf16.msra.mxu0 %v4898
    %5005 = vmatprep.subr.bf16.mxu0 0
    %5006 = vmatpush1.bf16.msra.mxu0 %v4899
    %5007 = vmatprep.subr.bf16.mxu0 0
    %5008 = vmatpush1.bf16.msra.mxu0 %v4900
    %5009 = vmatprep.subr.bf16.mxu0 0
    %5010 = vmatpush1.bf16.msra.mxu0 %v4901
    %5011 = vmatprep.subr.bf16.mxu0 0
    %5012 = vmatpush1.bf16.msra.mxu0 %v4902
    %5013 = vmatprep.subr.bf16.mxu0 0
    %5014 = vmatpush1.bf16.msra.mxu0 %v4903
    %5015 = vmatprep.subr.bf16.mxu0 0
    %5016 = vmatpush1.bf16.msra.mxu0 %v4904
    %5017 = vmatprep.subr.bf16.mxu0 0
    %5018 = vmatpush1.bf16.msra.mxu0 %v4905
    %5019 = vmatprep.mubr.bf16.mxu0 %v4668
    %5020 = vmatmul.mubr.bf16.gmra.mrb[0].mxu0 %v4667
    %v5021 = vpop.f32.mrb[0].mxu0
    %v5022 = vadd.f32 %v4973, %v5021
    %v5023 = vpop.f32.mrb[0].mxu0
    %v5024 = vpop.f32.mrb[0].mxu0
    %v5025 = vadd.f32 %v4976, %v5024
    %v5026 = vpop.f32.mrb[0].mxu0
    %5027 = vmatprep.mubr.bf16.mxu0 %v4672
    %5028 = vmatmul.mubr.bf16.gmra.mrb[0].mxu0 %v4671
    %v5029 = vpop.f32.mrb[0].mxu0
    %v5030 = vadd.f32 %v4981, %v5029
    %v5031 = vpop.f32.mrb[0].mxu0
    %v5032 = vpop.f32.mrb[0].mxu0
    %v5033 = vadd.f32 %v4984, %v5032
    %v5034 = vpop.f32.mrb[0].mxu0
    %5035 = vdwg.mxu0
    %v5036 = vadd.f32 %v4253, %v5022
    %v5037 = vadd.f32 %v4254, %v5025
    %v5038 = vadd.f32 %v4255, %v5030
    %v5039 = vadd.f32 %v4256, %v5033
    %v5040 = vld [vmem:[%s12] sm:$0x1]
    %v5041 = vld [vmem:[#allocation14] sm:$0x1]
    %5042 = vadd.xlane.f32.xlu0 %v5036
    %v5043 = vpop.xlane.xlu0 %5042
    %5044 = vadd.xlane.f32.xlu0 %v5037
    %v5045 = vpop.xlane.xlu0 %5044
    %5046 = vadd.xlane.f32.xlu0 %v5038
    %v5047 = vpop.xlane.xlu0 %5046
    %5048 = vadd.xlane.f32.xlu0 %v5039
    %v5049 = vpop.xlane.xlu0 %5048
    %v5050 = vmul.f32 %v5043, %v196
    %v5051 = vmul.f32 %v5045, %v196
    %v5052 = vmul.f32 %v5047, %v196
    %v5053 = vmul.f32 %v5049, %v196
    %v5054 = vsub.f32 %v5036, %v5050
    %v5055 = vsub.f32 %v5037, %v5051
    %v5056 = vsub.f32 %v5038, %v5052
    %v5057 = vsub.f32 %v5039, %v5053
    %v5058 = vmul.f32 %v5054, %v5054
    %v5059 = vmul.f32 %v5055, %v5055
    %v5060 = vmul.f32 %v5056, %v5056
    %v5061 = vmul.f32 %v5057, %v5057
    %5062 = vadd.xlane.f32.xlu0 %v5058
    %v5063 = vpop.xlane.xlu0 %5062
    %5064 = vadd.xlane.f32.xlu0 %v5059
    %v5065 = vpop.xlane.xlu0 %5064
    %5066 = vadd.xlane.f32.xlu0 %v5060
    %v5067 = vpop.xlane.xlu0 %5066
    %5068 = vadd.xlane.f32.xlu0 %v5061
    %v5069 = vpop.xlane.xlu0 %5068
    %v5070 = vmul.f32 %v5063, %v196
    %v5071 = vmul.f32 %v5065, %v196
    %v5072 = vmul.f32 %v5067, %v196
    %v5073 = vmul.f32 %v5069, %v196
    %v5074 = vadd.f32 %v5070, 1e-05
    %v5075 = vadd.f32 %v5071, 1e-05
    %v5076 = vadd.f32 %v5072, 1e-05
    %v5077 = vadd.f32 %v5073, 1e-05
    %v5078 = vrsqrt.pop %v5074
    %v5079 = vrsqrt.pop %v5075
    %v5080 = vrsqrt.pop %v5076
    %v5081 = vrsqrt.pop %v5077
    %v5082 = vmul.f32 %v5054, %v5078
    %v5083 = vmul.f32 %v5055, %v5079
    %v5084 = vmul.f32 %v5056, %v5080
    %v5085 = vmul.f32 %v5057, %v5081
    %v5087 = vlaneseq
    %v5088 = vshrl.u32 %v5087, 7
    %v5089 = vsub.s32 0, %v5088
    %v5090 = vrot.slane %v5040, %v5089
    %v5092 = vmul.f32 %v5082, %v5090
    %v5093 = vmul.f32 %v5083, %v5090
    %v5094 = vmul.f32 %v5084, %v5090
    %v5095 = vmul.f32 %v5085, %v5090
    %v5097 = vlaneseq
    %v5098 = vshrl.u32 %v5097, 7
    %v5099 = vsub.s32 0, %v5098
    %v5100 = vrot.slane %v5041, %v5099
    %v5102 = vadd.f32 %v5092, %v5100
    %v5103 = vadd.f32 %v5093, %v5100
    %v5104 = vadd.f32 %v5094, %v5100
    %v5105 = vadd.f32 %v5095, %v5100
    %v5106 = vpack.c.bf16 %v5103, %v5102
    %v5107 = vpack.c.bf16 %v5105, %v5104
    %v5108 = vld [vmem:[%s14] sm:$0xf]
    %v5109 = vld [vmem:[%s14 + $0x4] sm:$0xf]
    %v5110 = vld [vmem:[%s14 + $0x8] sm:$0xf]
    %v5111 = vld [vmem:[%s14 + $0xc] sm:$0xf]
    %v5112 = vld [vmem:[%s14 + $0x10] sm:$0xf]
    %v5113 = vld [vmem:[%s14 + $0x14] sm:$0xf]
    %v5114 = vld [vmem:[%s14 + $0x18] sm:$0xf]
    %v5115 = vld [vmem:[%s14 + $0x1c] sm:$0xf]
    %v5116 = vld [vmem:[%s14 + $0x20] sm:$0xf]
    %v5117 = vld [vmem:[%s14 + $0x24] sm:$0xf]
    %v5118 = vld [vmem:[%s14 + $0x28] sm:$0xf]
    %v5119 = vld [vmem:[%s14 + $0x2c] sm:$0xf]
    %v5120 = vld [vmem:[%s14 + $0x30] sm:$0xf]
    %v5121 = vld [vmem:[%s14 + $0x34] sm:$0xf]
    %v5122 = vld [vmem:[%s14 + $0x38] sm:$0xf]
    %v5123 = vld [vmem:[%s14 + $0x3c] sm:$0xf]
    %v5124 = vld [vmem:[#allocation16] sm:$0x1]
    %v5126 = vlaneseq
    %v5127 = vshrl.u32 %v5126, 7
    %v5128 = vsub.s32 0, %v5127
    %v5129 = vrot.slane %v5124, %v5128
    %v5147 = vunpack.c.l.b16 %v5108
    %v5148 = vunpack.c.l.b16 %v5109
    %v5149 = vunpack.c.l.b16 %v5110
    %v5150 = vunpack.c.l.b16 %v5111
    %v5151 = vunpack.c.l.b16 %v5112
    %v5152 = vunpack.c.l.b16 %v5113
    %v5153 = vunpack.c.l.b16 %v5114
    %v5154 = vunpack.c.l.b16 %v5115
    %v5155 = vunpack.c.l.b16 %v5116
    %v5156 = vunpack.c.l.b16 %v5117
    %v5157 = vunpack.c.l.b16 %v5118
    %v5158 = vunpack.c.l.b16 %v5119
    %v5159 = vunpack.c.l.b16 %v5120
    %v5160 = vunpack.c.l.b16 %v5121
    %v5161 = vunpack.c.l.b16 %v5122
    %v5162 = vunpack.c.l.b16 %v5123
    %v5163 = vpack.c.b16 %v5148, %v5147
    %v5164 = vpack.c.b16 %v5150, %v5149
    %v5165 = vpack.c.b16 %v5152, %v5151
    %v5166 = vpack.c.b16 %v5154, %v5153
    %v5167 = vpack.c.b16 %v5156, %v5155
    %v5168 = vpack.c.b16 %v5158, %v5157
    %v5169 = vpack.c.b16 %v5160, %v5159
    %v5170 = vpack.c.b16 %v5162, %v5161
    %5179 = vmatprep.subr.bf16.mxu0 0
    %5180 = vmatpush1.bf16.msra.mxu0 %v5163
    %5181 = vmatprep.subr.bf16.mxu0 0
    %5182 = vmatpush1.bf16.msra.mxu0 %v5164
    %5183 = vmatprep.subr.bf16.mxu0 0
    %5184 = vmatpush1.bf16.msra.mxu0 %v5165
    %5185 = vmatprep.subr.bf16.mxu0 0
    %5186 = vmatpush1.bf16.msra.mxu0 %v5166
    %5187 = vmatprep.subr.bf16.mxu0 0
    %5188 = vmatpush1.bf16.msra.mxu0 %v5167
    %5189 = vmatprep.subr.bf16.mxu0 0
    %5190 = vmatpush1.bf16.msra.mxu0 %v5168
    %5191 = vmatprep.subr.bf16.mxu0 0
    %5192 = vmatpush1.bf16.msra.mxu0 %v5169
    %5193 = vmatprep.subr.bf16.mxu0 0
    %5194 = vmatpush1.bf16.msra.mxu0 %v5170
    %5195 = vmatprep.subr.bf16.mxu0 0
    %5196 = vmatpush1.bf16.msra.mxu0 0
    %5197 = vmatprep.subr.bf16.mxu0 0
    %5198 = vmatpush1.bf16.msra.mxu0 0
    %5199 = vmatprep.subr.bf16.mxu0 0
    %5200 = vmatpush1.bf16.msra.mxu0 0
    %5201 = vmatprep.subr.bf16.mxu0 0
    %5202 = vmatpush1.bf16.msra.mxu0 0
    %5203 = vmatprep.subr.bf16.mxu0 0
    %5204 = vmatpush1.bf16.msra.mxu0 0
    %5205 = vmatprep.subr.bf16.mxu0 0
    %5206 = vmatpush1.bf16.msra.mxu0 0
    %5207 = vmatprep.subr.bf16.mxu0 0
    %5208 = vmatpush1.bf16.msra.mxu0 0
    %5209 = vmatprep.subr.bf16.mxu0 0
    %5210 = vmatpush1.bf16.msra.mxu0 0
    %5211 = vmatprep.mubr.bf16.mxu0 0
    %5212 = vmatmul.mubr.bf16.gmra.mrb[0].mxu0 %v5106
    %v5213 = vpop.f32.mrb[0].mxu0
    %v5214 = vadd.f32 %v5129, %v5213
    %v5215 = vpop.f32.mrb[0].mxu0
    %v5216 = vpop.f32.mrb[0].mxu0
    %v5217 = vadd.f32 %v5129, %v5216
    %v5218 = vpop.f32.mrb[0].mxu0
    %5219 = vmatprep.mubr.bf16.mxu0 0
    %5220 = vmatmul.mubr.bf16.gmra.mrb[0].mxu0 %v5107
    %v5221 = vpop.f32.mrb[0].mxu0
    %v5222 = vadd.f32 %v5129, %v5221
    %v5223 = vpop.f32.mrb[0].mxu0
    %v5224 = vpop.f32.mrb[0].mxu0
    %v5225 = vadd.f32 %v5129, %v5224
    %v5226 = vpop.f32.mrb[0].mxu0
    %5227 = vdwg.mxu0
    %5228 = vst [vmem:[#allocation17] sm:$0xff] %v5214
    %5229 = vst [vmem:[#allocation17 + $0x8] sm:$0xff] %v5217
    %5230 = vst [vmem:[#allocation17 + $0x10] sm:$0xff] %v5222
    %5231 = vst [vmem:[#allocation17 + $0x18] sm:$0xff] %v5225
    // Predicated region
    $region102: #{gpt_forward.1} parent=1 // pred_check
      _
    $region103: #{gpt_forward.1} parent=1 // pred_check_branch
      %5233 = sbr.rel (0) target = $region105
    $region104: #{gpt_forward.1} parent=1 // pred_region
      %s5235 = ssub.s32 512, 512
      %5236 = vsyncadd [#allocation4], %s5235
      %s5237 = sshll.u32 [#allocation17], 4
      %s5238 = int_to_ptr.vmem [resolvable:$true] %s5237
      %5243 = dma.vmem_to_hbm [thread:$0]  %s5238, 512, %s16, [#allocation4], 128, 128, 8
    $region105: #{gpt_forward.1} parent=1 // pred_fallthru
      _
    // Predicated region
    $region106: #{gpt_forward.1} parent=1 // pred_check
      _
    $region107: #{gpt_forward.1} parent=1 // pred_check_branch
      %5245 = sbr.rel (0) target = $region109
    $region108: #{gpt_forward.1} parent=1 // pred_region
      %5246 = dma.done [#allocation4], 512
    $region109: #{gpt_forward.1} parent=1 // pred_fallthru
      _
    %5247 = vsyncpa [#allocation3], 1
    %5248 = vsyncpa [#allocation6], 1
    %5249 = vsyncpa [#allocation9], 1
    %5250 = vsyncpa [#allocation12], 1
    %5251 = vsyncpa [#allocation15], 1
    %5252 = vsyncpa [#allocation4], 1

</llo_original>
